<compile_context>
chip_gen: v7x
topology: tpu7x:2x2x1
jax: 0.10.0
libtpu: 0.0.40
codegen_flags: <defaults>
</compile_context>

<pallas_src>
import numpy as np
import jax
import jax.numpy as jnp
from jax.experimental import pallas as pl
from jax.experimental.pallas import tpu as pltpu

BN_EPS = 1e-5


def _elu(v):
    # ELU(alpha=1): v if v > 0 else exp(v) - 1   (exp arg clamped for safety)
    return jnp.where(v > 0, v, jnp.exp(jnp.minimum(v, 0.0)) - 1.0)


# ---------------------------------------------------------------------------
# Fused kernel: conv(1,51)+BN+ELU+pool4 + grouped conv(C,1)+BN+ELU+pool8
#               + flatten + Linear  ->  logits       (eval-mode semantics)
# ---------------------------------------------------------------------------
def _eegnet_fused_kernel(x_ref, wt_ref, sh1_ref, p4_ref, m2_ref, sh2_ref,
                         wfc_ref, mz_ref, srow_ref, scol_ref, bfc_ref, o_ref):
    Bt, C, T = x_ref.shape

    # Stage 1: temporal conv as one Toeplitz matmul (BN1 scale folded into wt,
    # conv bias + BN1 shift folded into sh1).
    x2d = x_ref[...].reshape(Bt * C, T)                          # rows (b, c)
    h1 = jnp.dot(x2d, wt_ref[...], preferred_element_type=jnp.float32)
    a1 = _elu(h1 + sh1_ref[...])                                 # (Bt*C, F1*T)

    # Stage 2: AvgPool(1,4) as a block-diagonal pooling matmul (layout kept).
    p1 = jnp.dot(a1, p4_ref[...], preferred_element_type=jnp.float32)

    # Stage 3: grouped conv over EEG channels, both output slots per group in
    # one matmul (BN2 scale folded into m2, bias + BN2 shift in sh2).  Columns
    # whose filter block does not belong to a row's group are dead values; the
    # folded FC weights below are zero there, so they never contribute.
    h2 = jnp.dot(m2_ref[...], p1, preferred_element_type=jnp.float32)
    a2 = _elu(h2 + sh2_ref[...])                                 # (Bt*2F1, F1*T4)

    # Stage 4: AvgPool(1,8) + torch-order flatten + Linear folded into wfc;
    # the mask keeps each row's own output-channel block, then tiny row/column
    # selection matmuls reduce to (Bt, num_classes) logits.
    z = jnp.dot(a2, wfc_ref[...], preferred_element_type=jnp.float32)
    zm = z * mz_ref[...]
    logits = jnp.dot(jnp.dot(srow_ref[...], zm,
                             preferred_element_type=jnp.float32),
                     scol_ref[...], preferred_element_type=jnp.float32)
    o_ref[...] = logits + bfc_ref[...]
    # TODO(synk): Dropout(0.5) layers are train-mode only; identity at inference.


# ---------------------------------------------------------------------------
# Host-side constant builders (run once per call, plain XLA)
# ---------------------------------------------------------------------------
def _avg_pool_matrix(n_in, k):
    """(n_in, n_in//k) matrix M with  a @ M == AvgPool1d(k, stride=k)(a)."""
    n_out = n_in // k
    rows = np.arange(n_in)[:, None]
    cols = np.arange(n_out)[None, :]
    m = ((rows // k) == cols) & (rows < n_out * k)
    return jnp.asarray(m.astype(np.float32) / k)


def _toeplitz_conv_matrix(w1s, T, pad):
    """(T, F1*T) matrix Wt with  x(C,T) @ Wt == same-padded conv1d(x, w1s),
    columns laid out as (filter, time).  Zero padding is baked in."""
    F1, K = w1s.shape
    tp = jnp.arange(T)[:, None]
    t = jnp.arange(T)[None, :]
    k = tp - t + pad
    valid = (k >= 0) & (k < K)
    blocks = jnp.where(valid[None], w1s[:, jnp.clip(k, 0, K - 1)], 0.0)  # (F1,T,T)
    return blocks.transpose(1, 0, 2).reshape(T, F1 * T)


def init_params(key, num_classes, channels, timepoints):
    K, F1 = 51, 16
    T4 = timepoints // 4
    flat = 2 * F1 * (T4 // 8)
    ks = jax.random.split(key, 16)
    n = lambda i, shape, scale=1.0: scale * jax.random.normal(ks[i], shape, jnp.float32)
    return dict(
        w1=n(0, (F1, K), 1.0 / np.sqrt(K)),
        b1=n(1, (F1,), 0.1),
        bn1_gamma=1.0 + n(2, (F1,), 0.1),
        bn1_beta=n(3, (F1,), 0.1),
        bn1_mean=n(4, (F1,), 0.05),
        bn1_var=0.9 + 0.2 * jax.random.uniform(ks[5], (F1,), jnp.float32),
        w2=n(6, (2 * F1, 1, channels, 1), 1.0 / np.sqrt(channels)),
        b2=n(7, (2 * F1,), 0.1),
        bn2_gamma=1.0 + n(8, (2 * F1,), 0.1),
        bn2_beta=n(9, (2 * F1,), 0.1),
        bn2_mean=n(10, (2 * F1,), 0.05),
        bn2_var=0.9 + 0.2 * jax.random.uniform(ks[11], (2 * F1,), jnp.float32),
        wfc=n(12, (num_classes, flat), 1.0 / np.sqrt(flat)),
        bfc=n(13, (num_classes,), 0.1),
    )


def simple_eegnet_forward(x, params):
    B, C, T = x.shape
    F1, K = params["w1"].shape
    pad = (K - 1) // 2
    O = 2 * F1
    T4 = T // 4
    T32 = T4 // 8
    nc = params["wfc"].shape[0]

    # Batch tile per grid step (feeds the MXU M dimension, amortizes per-step
    # pipeline overhead); the remaining batch axis is a "parallel" grid.
    Bt = 8 if B % 8 == 0 else B
    nb = B // Bt

    # ---- eval-mode BatchNorm folded into weights / additive shifts ----
    s1 = params["bn1_gamma"] / jnp.sqrt(params["bn1_var"] + BN_EPS)
    s2 = params["bn2_gamma"] / jnp.sqrt(params["bn2_var"] + BN_EPS)
    shift1 = params["b1"] * s1 + params["bn1_beta"] - params["bn1_mean"] * s1
    shift2 = params["b2"] * s2 + params["bn2_beta"] - params["bn2_mean"] * s2
    w1s = params["w1"] * s1[:, None]                        # (F1, K)
    w2s = params["w2"].reshape(O, C) * s2[:, None]          # (O, C)

    # ---- host-built constant matmul operands ----
    # TODO(synk): Wt / P4blk are O(F1*T^2); for long recordings (T in the
    # thousands) switch to an in-kernel im2col via pltpu.roll or block the
    # conv/pool matmuls over T to respect v7x's 64 MiB VMEM.
    wt = _toeplitz_conv_matrix(w1s, T, pad)                 # (T, F1*T)
    sh1_row = jnp.repeat(shift1, T)[None, :]                # (1, F1*T)
    p4blk = jnp.kron(jnp.eye(F1, dtype=jnp.float32),
                     _avg_pool_matrix(T, 4))                # (F1*T, F1*T4)
    m2c = jnp.kron(jnp.eye(Bt, dtype=jnp.float32), w2s)     # (Bt*O, Bt*C)
    sh2_col = jnp.tile(shift2, Bt)[:, None]                 # (Bt*O, 1)

    # AvgPool(1,8) + torch flatten order (flat idx = o*T32 + t32) folded into
    # the FC weights; the [f == o//2] factor selects each row's filter block.
    wfc_eff = jnp.repeat(params["wfc"].reshape(nc, O, T32), 8, axis=-1) / 8.0
    if 8 * T32 < T4:                                        # floor-pool truncation
        wfc_eff = jnp.pad(wfc_eff, ((0, 0), (0, 0), (0, T4 - 8 * T32)))
    sel = (jnp.arange(F1)[:, None] == (jnp.arange(O)[None, :] // 2))
    wfc2 = jnp.einsum('fo,jot->ftoj', sel.astype(jnp.float32),
                      wfc_eff).reshape(F1 * T4, O * nc)     # (F1*T4, O*nc)

    # Bookkeeping matrices for the fused FC reduction.
    mz = (jnp.tile(jnp.arange(O), Bt)[:, None]
          == jnp.repeat(jnp.arange(O), nc)[None, :]).astype(jnp.float32)
    srow = jnp.kron(jnp.eye(Bt, dtype=jnp.float32),
                    jnp.ones((1, O), jnp.float32))          # (Bt, Bt*O)
    scol = jnp.tile(jnp.eye(nc, dtype=jnp.float32), (O, 1))  # (O*nc, nc)
    bfc = params["bfc"][None, :]                            # (1, nc)

    return pl.pallas_call(
        _eegnet_fused_kernel,
        out_shape=jax.ShapeDtypeStruct((B, nc), jnp.float32),
        grid=(nb,),
        in_specs=[
            pl.BlockSpec((Bt, C, T), lambda i: (i, 0, 0)),
            pl.BlockSpec((T, F1 * T), lambda i: (0, 0)),
            pl.BlockSpec((1, F1 * T), lambda i: (0, 0)),
            pl.BlockSpec((F1 * T, F1 * T4), lambda i: (0, 0)),
            pl.BlockSpec((Bt * O, Bt * C), lambda i: (0, 0)),
            pl.BlockSpec((Bt * O, 1), lambda i: (0, 0)),
            pl.BlockSpec((F1 * T4, O * nc), lambda i: (0, 0)),
            pl.BlockSpec((Bt * O, O * nc), lambda i: (0, 0)),
            pl.BlockSpec((Bt, Bt * O), lambda i: (0, 0)),
            pl.BlockSpec((O * nc, nc), lambda i: (0, 0)),
            pl.BlockSpec((1, nc), lambda i: (0, 0)),
        ],
        out_specs=pl.BlockSpec((Bt, nc), lambda i: (i, 0)),
        compiler_params=pltpu.CompilerParams(
            dimension_semantics=("parallel",),
            vmem_limit_bytes=32 * 1024 * 1024),
    )(x, wt, sh1_row, p4blk, m2c, sh2_col, wfc2, mz, srow, scol, bfc)


def ref_forward(x, params):
    """Pure-JAX reference (eval-mode), same math, for a self-check."""
    B, C, T = x.shape
    F1, K = params["w1"].shape
    pad = (K - 1) // 2
    hp = jax.lax.Precision.HIGHEST
    s1 = params["bn1_gamma"] / jnp.sqrt(params["bn1_var"] + BN_EPS)
    sh1 = params["bn1_beta"] - params["bn1_mean"] * s1
    s2 = params["bn2_gamma"] / jnp.sqrt(params["bn2_var"] + BN_EPS)
    sh2 = params["bn2_beta"] - params["bn2_mean"] * s2

    xpad = jnp.pad(x, ((0, 0), (0, 0), (pad, pad)))
    win = jnp.stack([xpad[:, :, k:k + T] for k in range(K)], axis=0)   # (K,B,C,T)
    h1 = jnp.einsum("fk,kbct->bfct", params["w1"], win, precision=hp)
    h1 = h1 + params["b1"][None, :, None, None]
    a1 = _elu(h1 * s1[None, :, None, None] + sh1[None, :, None, None])
    T4 = T // 4
    p1 = a1[..., :4 * T4].reshape(B, F1, C, T4, 4).mean(-1)

    w2r = params["w2"].reshape(2 * F1, C)
    p1rep = jnp.repeat(p1, 2, axis=1)                                  # (B,32,C,T4)
    h2 = jnp.einsum("oc,boct->bot", w2r, p1rep, precision=hp)
    h2 = h2 + params["b2"][None, :, None]
    a2 = _elu(h2 * s2[None, :, None] + sh2[None, :, None])
    T32 = T4 // 8
    p2 = a2[..., :8 * T32].reshape(B, 2 * F1, T32, 8).mean(-1)
    flat = p2.reshape(B, -1)
    return jnp.dot(flat, params["wfc"].T, precision=hp) + params["bfc"][None, :]


if __name__ == "__main__":
    num_classes, channels, timepoints, batch = 4, 8, 128, 2
    key = jax.random.PRNGKey(0)
    pkey, xkey = jax.random.split(key)
    params = init_params(pkey, num_classes, channels, timepoints)
    x = jax.random.normal(xkey, (batch, channels, timepoints), jnp.float32)

    out = simple_eegnet_forward(x, params)
    out = jax.block_until_ready(out)
    assert out.shape == (batch, num_classes), out.shape

    ref = ref_forward(x, params)
    err = float(jnp.max(jnp.abs(out - ref)))
    tol = 5e-2 * (1.0 + float(jnp.max(jnp.abs(ref))))
    assert err <= tol, f"kernel/reference mismatch: max_abs_err={err}, tol={tol}"
    print("KERNEL_OK")
</pallas_src>

<mosaic_0001>
module attributes {stable_mosaic.version = 11 : i64} {
  func.func @_eegnet_fused_kernel(%arg0: i32, %arg1: memref<2x8x128xf32, #tpu.memory_space<vmem>>, %arg2: memref<128x2048xf32, #tpu.memory_space<vmem>>, %arg3: memref<1x2048xf32, #tpu.memory_space<vmem>>, %arg4: memref<2048x512xf32, #tpu.memory_space<vmem>>, %arg5: memref<64x16xf32, #tpu.memory_space<vmem>>, %arg6: memref<64x1xf32, #tpu.memory_space<vmem>>, %arg7: memref<512x128xf32, #tpu.memory_space<vmem>>, %arg8: memref<64x128xf32, #tpu.memory_space<vmem>>, %arg9: memref<2x64xf32, #tpu.memory_space<vmem>>, %arg10: memref<128x4xf32, #tpu.memory_space<vmem>>, %arg11: memref<1x4xf32, #tpu.memory_space<vmem>>, %arg12: memref<2x4xf32, #tpu.memory_space<vmem>>) attributes {dimension_semantics = [#tpu.dimension_semantics<parallel>], iteration_bounds = array<i64: 1>, scalar_prefetch = 0 : i64, scratch_operands = 0 : i64, tpu.core_type = #tpu.core_type<tc>, window_params = [{transform_indices = @transform_0, window_bounds = array<i64: 2, 8, 128>}, {pipeline_mode = #tpu.pipeline_mode<synchronous>, transform_indices = @transform_1, window_bounds = array<i64: 128, 2048>}, {pipeline_mode = #tpu.pipeline_mode<synchronous>, transform_indices = @transform_2, window_bounds = array<i64: 1, 2048>}, {pipeline_mode = #tpu.pipeline_mode<synchronous>, transform_indices = @transform_3, window_bounds = array<i64: 2048, 512>}, {pipeline_mode = #tpu.pipeline_mode<synchronous>, transform_indices = @transform_4, window_bounds = array<i64: 64, 16>}, {pipeline_mode = #tpu.pipeline_mode<synchronous>, transform_indices = @transform_5, window_bounds = array<i64: 64, 1>}, {pipeline_mode = #tpu.pipeline_mode<synchronous>, transform_indices = @transform_6, window_bounds = array<i64: 512, 128>}, {pipeline_mode = #tpu.pipeline_mode<synchronous>, transform_indices = @transform_7, window_bounds = array<i64: 64, 128>}, {pipeline_mode = #tpu.pipeline_mode<synchronous>, transform_indices = @transform_8, window_bounds = array<i64: 2, 64>}, {pipeline_mode = #tpu.pipeline_mode<synchronous>, transform_indices = @transform_9, window_bounds = array<i64: 128, 4>}, {pipeline_mode = #tpu.pipeline_mode<synchronous>, transform_indices = @transform_10, window_bounds = array<i64: 1, 4>}, {transform_indices = @transform_11, window_bounds = array<i64: 2, 4>}]} {
    %c0 = arith.constant 0 : index
    %c0_0 = arith.constant 0 : index
    %c0_1 = arith.constant 0 : index
    %0 = vector.load %arg1[%c0, %c0_0, %c0_1] : memref<2x8x128xf32, #tpu.memory_space<vmem>>, vector<2x8x128xf32>
    %1 = vector.shape_cast %0 : vector<2x8x128xf32> to vector<16x128xf32>
    %c0_2 = arith.constant 0 : index
    %c0_3 = arith.constant 0 : index
    %2 = vector.load %arg2[%c0_2, %c0_3] : memref<128x2048xf32, #tpu.memory_space<vmem>>, vector<128x2048xf32>
    %cst = arith.constant dense<0.000000e+00> : vector<16x2048xf32>
    %3 = tpu.matmul %1, %2, %cst {dimension_numbers = #tpu.dot_dimension_numbers<[1], [0], [0], [1], [0, 0, 1, 1], [], []>} : vector<16x128xf32>, vector<128x2048xf32>, vector<16x2048xf32> -> vector<16x2048xf32>
    %c0_4 = arith.constant 0 : index
    %c0_5 = arith.constant 0 : index
    %4 = vector.load %arg3[%c0_4, %c0_5] : memref<1x2048xf32, #tpu.memory_space<vmem>>, vector<1x2048xf32>
    %5 = vector.broadcast %4 : vector<1x2048xf32> to vector<16x2048xf32>
    %6 = arith.addf %3, %5 : vector<16x2048xf32>
    %cst_6 = arith.constant 0.000000e+00 : f32
    %7 = vector.broadcast %cst_6 : f32 to vector<16x2048xf32>
    %8 = arith.cmpf ogt, %6, %7 : vector<16x2048xf32>
    %cst_7 = arith.constant 0.000000e+00 : f32
    %9 = vector.broadcast %cst_7 : f32 to vector<16x2048xf32>
    %10 = arith.minimumf %6, %9 : vector<16x2048xf32>
    %11 = math.exp %10 : vector<16x2048xf32>
    %cst_8 = arith.constant 1.000000e+00 : f32
    %12 = vector.broadcast %cst_8 : f32 to vector<16x2048xf32>
    %13 = arith.subf %11, %12 : vector<16x2048xf32>
    %14 = arith.select %8, %6, %13 : vector<16x2048xi1>, vector<16x2048xf32>
    %c0_9 = arith.constant 0 : index
    %c0_10 = arith.constant 0 : index
    %15 = vector.load %arg4[%c0_9, %c0_10] : memref<2048x512xf32, #tpu.memory_space<vmem>>, vector<2048x512xf32>
    %cst_11 = arith.constant dense<0.000000e+00> : vector<16x512xf32>
    %16 = tpu.matmul %14, %15, %cst_11 {dimension_numbers = #tpu.dot_dimension_numbers<[1], [0], [0], [1], [0, 0, 1, 1], [], []>} : vector<16x2048xf32>, vector<2048x512xf32>, vector<16x512xf32> -> vector<16x512xf32>
    %c0_12 = arith.constant 0 : index
    %c0_13 = arith.constant 0 : index
    %17 = vector.load %arg5[%c0_12, %c0_13] : memref<64x16xf32, #tpu.memory_space<vmem>>, vector<64x16xf32>
    %cst_14 = arith.constant dense<0.000000e+00> : vector<64x512xf32>
    %18 = tpu.matmul %17, %16, %cst_14 {dimension_numbers = #tpu.dot_dimension_numbers<[1], [0], [0], [1], [0, 0, 1, 1], [], []>} : vector<64x16xf32>, vector<16x512xf32>, vector<64x512xf32> -> vector<64x512xf32>
    %c0_15 = arith.constant 0 : index
    %c0_16 = arith.constant 0 : index
    %19 = vector.load %arg6[%c0_15, %c0_16] : memref<64x1xf32, #tpu.memory_space<vmem>>, vector<64x1xf32>
    %20 = vector.broadcast %19 : vector<64x1xf32> to vector<64x512xf32>
    %21 = arith.addf %18, %20 : vector<64x512xf32>
    %cst_17 = arith.constant 0.000000e+00 : f32
    %22 = vector.broadcast %cst_17 : f32 to vector<64x512xf32>
    %23 = arith.cmpf ogt, %21, %22 : vector<64x512xf32>
    %cst_18 = arith.constant 0.000000e+00 : f32
    %24 = vector.broadcast %cst_18 : f32 to vector<64x512xf32>
    %25 = arith.minimumf %21, %24 : vector<64x512xf32>
    %26 = math.exp %25 : vector<64x512xf32>
    %cst_19 = arith.constant 1.000000e+00 : f32
    %27 = vector.broadcast %cst_19 : f32 to vector<64x512xf32>
    %28 = arith.subf %26, %27 : vector<64x512xf32>
    %29 = arith.select %23, %21, %28 : vector<64x512xi1>, vector<64x512xf32>
    %c0_20 = arith.constant 0 : index
    %c0_21 = arith.constant 0 : index
    %30 = vector.load %arg7[%c0_20, %c0_21] : memref<512x128xf32, #tpu.memory_space<vmem>>, vector<512x128xf32>
    %cst_22 = arith.constant dense<0.000000e+00> : vector<64x128xf32>
    %31 = tpu.matmul %29, %30, %cst_22 {dimension_numbers = #tpu.dot_dimension_numbers<[1], [0], [0], [1], [0, 0, 1, 1], [], []>} : vector<64x512xf32>, vector<512x128xf32>, vector<64x128xf32> -> vector<64x128xf32>
    %c0_23 = arith.constant 0 : index
    %c0_24 = arith.constant 0 : index
    %32 = vector.load %arg8[%c0_23, %c0_24] : memref<64x128xf32, #tpu.memory_space<vmem>>, vector<64x128xf32>
    %33 = arith.mulf %31, %32 : vector<64x128xf32>
    %c0_25 = arith.constant 0 : index
    %c0_26 = arith.constant 0 : index
    %34 = vector.load %arg9[%c0_25, %c0_26] : memref<2x64xf32, #tpu.memory_space<vmem>>, vector<2x64xf32>
    %cst_27 = arith.constant dense<0.000000e+00> : vector<2x128xf32>
    %35 = tpu.matmul %34, %33, %cst_27 {dimension_numbers = #tpu.dot_dimension_numbers<[1], [0], [0], [1], [0, 0, 1, 1], [], []>} : vector<2x64xf32>, vector<64x128xf32>, vector<2x128xf32> -> vector<2x128xf32>
    %c0_28 = arith.constant 0 : index
    %c0_29 = arith.constant 0 : index
    %36 = vector.load %arg10[%c0_28, %c0_29] : memref<128x4xf32, #tpu.memory_space<vmem>>, vector<128x4xf32>
    %cst_30 = arith.constant dense<0.000000e+00> : vector<2x4xf32>
    %37 = tpu.matmul %35, %36, %cst_30 {dimension_numbers = #tpu.dot_dimension_numbers<[1], [0], [0], [1], [0, 0, 1, 1], [], []>} : vector<2x128xf32>, vector<128x4xf32>, vector<2x4xf32> -> vector<2x4xf32>
    %c0_31 = arith.constant 0 : index
    %c0_32 = arith.constant 0 : index
    %38 = vector.load %arg11[%c0_31, %c0_32] : memref<1x4xf32, #tpu.memory_space<vmem>>, vector<1x4xf32>
    %39 = vector.broadcast %38 : vector<1x4xf32> to vector<2x4xf32>
    %40 = arith.addf %37, %39 : vector<2x4xf32>
    %c0_33 = arith.constant 0 : index
    %c0_34 = arith.constant 0 : index
    %41 = vector.load %arg12[%c0_33, %c0_34] : memref<2x4xf32, #tpu.memory_space<vmem>>, vector<2x4xf32>
    tpu.vector_store %arg12[%c0_33, %c0_34], %40 {strides = array<i32>} : memref<2x4xf32, #tpu.memory_space<vmem>>, vector<2x4xf32>,
    return
  }
  func.func @transform_0(%arg0: i32) -> (i32, i32, i32) {
    %c0_i32 = arith.constant 0 : i32
    %c0_i32_0 = arith.constant 0 : i32
    %c0_i32_1 = arith.constant 0 : i32
    return %arg0, %c0_i32, %c0_i32_0 : i32, i32, i32
  }
  func.func @transform_1(%arg0: i32) -> (i32, i32) {
    %c0_i32 = arith.constant 0 : i32
    %c0_i32_0 = arith.constant 0 : i32
    %c0_i32_1 = arith.constant 0 : i32
    return %c0_i32, %c0_i32_0 : i32, i32
  }
  func.func @transform_2(%arg0: i32) -> (i32, i32) {
    %c0_i32 = arith.constant 0 : i32
    %c0_i32_0 = arith.constant 0 : i32
    %c0_i32_1 = arith.constant 0 : i32
    return %c0_i32, %c0_i32_0 : i32, i32
  }
  func.func @transform_3(%arg0: i32) -> (i32, i32) {
    %c0_i32 = arith.constant 0 : i32
    %c0_i32_0 = arith.constant 0 : i32
    %c0_i32_1 = arith.constant 0 : i32
    return %c0_i32, %c0_i32_0 : i32, i32
  }
  func.func @transform_4(%arg0: i32) -> (i32, i32) {
    %c0_i32 = arith.constant 0 : i32
    %c0_i32_0 = arith.constant 0 : i32
    %c0_i32_1 = arith.constant 0 : i32
    return %c0_i32, %c0_i32_0 : i32, i32
  }
  func.func @transform_5(%arg0: i32) -> (i32, i32) {
    %c0_i32 = arith.constant 0 : i32
    %c0_i32_0 = arith.constant 0 : i32
    %c0_i32_1 = arith.constant 0 : i32
    return %c0_i32, %c0_i32_0 : i32, i32
  }
  func.func @transform_6(%arg0: i32) -> (i32, i32) {
    %c0_i32 = arith.constant 0 : i32
    %c0_i32_0 = arith.constant 0 : i32
    %c0_i32_1 = arith.constant 0 : i32
    return %c0_i32, %c0_i32_0 : i32, i32
  }
  func.func @transform_7(%arg0: i32) -> (i32, i32) {
    %c0_i32 = arith.constant 0 : i32
    %c0_i32_0 = arith.constant 0 : i32
    %c0_i32_1 = arith.constant 0 : i32
    return %c0_i32, %c0_i32_0 : i32, i32
  }
  func.func @transform_8(%arg0: i32) -> (i32, i32) {
    %c0_i32 = arith.constant 0 : i32
    %c0_i32_0 = arith.constant 0 : i32
    %c0_i32_1 = arith.constant 0 : i32
    return %c0_i32, %c0_i32_0 : i32, i32
  }
  func.func @transform_9(%arg0: i32) -> (i32, i32) {
    %c0_i32 = arith.constant 0 : i32
    %c0_i32_0 = arith.constant 0 : i32
    %c0_i32_1 = arith.constant 0 : i32
    return %c0_i32, %c0_i32_0 : i32, i32
  }
  func.func @transform_10(%arg0: i32) -> (i32, i32) {
    %c0_i32 = arith.constant 0 : i32
    %c0_i32_0 = arith.constant 0 : i32
    %c0_i32_1 = arith.constant 0 : i32
    return %c0_i32, %c0_i32_0 : i32, i32
  }
  func.func @transform_11(%arg0: i32) -> (i32, i32) {
    %c0_i32 = arith.constant 0 : i32
    %c0_i32_0 = arith.constant 0 : i32
    return %arg0, %c0_i32 : i32, i32
  }
}

</mosaic_0001>

<llo_original>
// kernel: tpu_custom_call.1
$region0: #{tpu_custom_call.1}
  #allocation0 [shape = 'u32[]', space=smem, size = 0x4, offset = 0x4, fixed_abs, tag = 'smem constant byte address 0x4 - core index']
  #allocation1 [shape = 'u32[144,128]{1,0:T(1,128)}', space=vmem, size = 0x12000, scoped, tag = 'internal scratch']
  %s0 = inlined_call_operand.hbm [shape: f32[2,8,128], index: 0, kind: input, shape index: {}]
  %s1 = inlined_call_operand.hbm [shape: f32[128,2048], index: 1, kind: input, shape index: {}]
  %s2 = inlined_call_operand.hbm [shape: f32[1,2048], index: 2, kind: input, shape index: {}]
  %s3 = inlined_call_operand.hbm [shape: f32[2048,512], index: 3, kind: input, shape index: {}]
  %s4 = inlined_call_operand.vmem [shape: f32[64,16], index: 4, kind: input, shape index: {}]
  %s5 = inlined_call_operand.vmem [shape: f32[64,1], index: 5, kind: input, shape index: {}]
  %s6 = inlined_call_operand.hbm [shape: f32[512,128], index: 6, kind: input, shape index: {}]
  %s7 = inlined_call_operand.hbm [shape: f32[64,128], index: 7, kind: input, shape index: {}]
  %s8 = inlined_call_operand.hbm [shape: f32[2,64], index: 8, kind: input, shape index: {}]
  %s9 = inlined_call_operand.vmem [shape: f32[128,4], index: 9, kind: input, shape index: {}]
  %s10 = inlined_call_operand.hbm [shape: f32[1,4], index: 10, kind: input, shape index: {}]
  %s11 = inlined_call_operand.hbm [shape: f32[2,4], index: 11, kind: output, shape index: {}]
  %s12 = sld [smem:[#allocation0]]
  $region86: #{tpu_custom_call.1} parent=0
    _
  %s14 = ssub.s32 1, %s12
  %s15 = scalar_select 0, %s14, %s12
  $region1: #{tpu_custom_call.1} parent=0
    #allocation2 [shape = 'u8[8192]{0}', space=vmem, size = 0x2000, scoped, tag = 'input window, operand 0, single buffered']
    #allocation3 [shape = 's32[1]{0}', space=sflag, size = 0x4, scoped, tag = 'scoped memory for tpu_custom_call.1']
    #allocation4 [shape = 's32[1]{0}', space=sflag, size = 0x4, scoped, tag = 'scoped memory for tpu_custom_call.1']
    #allocation5 [shape = 'u8[1048576]{0}', space=vmem, size = 0x100000, scoped, tag = 'input window, operand 1, single buffered']
    #allocation6 [shape = 's32[1]{0}', space=sflag, size = 0x4, scoped, tag = 'scoped memory for tpu_custom_call.1']
    #allocation7 [shape = 'u8[8192]{0}', space=vmem, size = 0x2000, scoped, tag = 'input window, operand 2, single buffered']
    #allocation8 [shape = 'u8[4194304]{0}', space=vmem, size = 0x400000, scoped, tag = 'input window, operand 3, single buffered']
    #allocation9 [shape = 's32[1]{0}', space=sflag, size = 0x4, scoped, tag = 'scoped memory for tpu_custom_call.1']
    #allocation10 [shape = 'u8[262144]{0}', space=vmem, size = 0x40000, scoped, tag = 'input window, operand 6, single buffered']
    #allocation11 [shape = 'u8[32768]{0}', space=vmem, size = 0x8000, scoped, tag = 'input window, operand 7, single buffered']
    #allocation12 [shape = 's32[1]{0}', space=sflag, size = 0x4, scoped, tag = 'scoped memory for tpu_custom_call.1']
    #allocation13 [shape = 'u8[1024]{0}', space=vmem, size = 0x400, scoped, tag = 'input window, operand 8, single buffered']
    #allocation14 [shape = 'u8[512]{0}', space=vmem, size = 0x400, scoped, tag = 'input window, operand 10, single buffered']
    #allocation15 [shape = 's32[1]{0}', space=sflag, size = 0x4, scoped, tag = 'scoped memory for tpu_custom_call.1']
    #allocation16 [shape = 'u8[1024]{0}', space=vmem, size = 0x400, scoped, tag = 'output window, operand 0, single buffered']
    %16 = vsyncpa [#allocation3], 0
    %17 = vsyncpa [#allocation6], 0
    %18 = vsyncpa [#allocation9], 0
    %19 = vsyncpa [#allocation12], 0
    %20 = vsyncpa [#allocation15], 0
    %21 = vsyncpa [#allocation4], 0
    // Predicated region
    $region2: #{tpu_custom_call.1} parent=1 // pred_check
      _
    $region3: #{tpu_custom_call.1} parent=1 // pred_check_branch
      %23 = sbr.rel (0) target = $region5
    $region4: #{tpu_custom_call.1} parent=1 // pred_region
      %s25 = ssub.s32 256, 256
      %26 = vsyncadd [#allocation3], %s25
      %s27 = sshll.u32 [#allocation2], 4
      %s28 = int_to_ptr.vmem [resolvable:$true] %s27
      %33 = dma.hbm_to_vmem [thread:$0]  %s0, 256, %s28, [#allocation3], 128, 128, 8
    $region5: #{tpu_custom_call.1} parent=1 // pred_fallthru
      _
    // Predicated region
    $region6: #{tpu_custom_call.1} parent=1 // pred_check
      _
    $region7: #{tpu_custom_call.1} parent=1 // pred_check_branch
      %35 = sbr.rel (0) target = $region9
    $region8: #{tpu_custom_call.1} parent=1 // pred_region
      %s37 = ssub.s32 32768, 32768
      %38 = vsyncadd [#allocation6], %s37
      %s39 = sshll.u32 [#allocation5], 4
      %s40 = int_to_ptr.vmem [resolvable:$true] %s39
      %45 = dma.hbm_to_vmem [thread:$0]  %s1, 32768, %s40, [#allocation6], 2048, 2048, 128
    $region9: #{tpu_custom_call.1} parent=1 // pred_fallthru
      _
    // Predicated region
    $region10: #{tpu_custom_call.1} parent=1 // pred_check
      _
    $region11: #{tpu_custom_call.1} parent=1 // pred_check_branch
      %47 = sbr.rel (0) target = $region13
    $region12: #{tpu_custom_call.1} parent=1 // pred_region
      %s49 = ssub.s32 256, 256
      %50 = vsyncadd [#allocation6], %s49
      %s52 = sshll.u32 [#allocation7], 4
      %s53 = int_to_ptr.vmem [resolvable:$true] %s52
      %55 = dma.hbm_to_vmem [thread:$0]  %s2, 256, %s53, [#allocation6]
    $region13: #{tpu_custom_call.1} parent=1 // pred_fallthru
      _
    // Predicated region
    $region14: #{tpu_custom_call.1} parent=1 // pred_check
      _
    $region15: #{tpu_custom_call.1} parent=1 // pred_check_branch
      %57 = sbr.rel (0) target = $region17
    $region16: #{tpu_custom_call.1} parent=1 // pred_region
      %s59 = ssub.s32 131072, 131072
      %60 = vsyncadd [#allocation9], %s59
      %s61 = sshll.u32 [#allocation8], 4
      %s62 = int_to_ptr.vmem [resolvable:$true] %s61
      %67 = dma.hbm_to_vmem [thread:$0]  %s3, 131072, %s62, [#allocation9], 512, 512, 32
    $region17: #{tpu_custom_call.1} parent=1 // pred_fallthru
      _
    // Predicated region
    $region18: #{tpu_custom_call.1} parent=1 // pred_check
      _
    $region19: #{tpu_custom_call.1} parent=1 // pred_check_branch
      %69 = sbr.rel (0) target = $region21
    $region20: #{tpu_custom_call.1} parent=1 // pred_region
      _
    $region21: #{tpu_custom_call.1} parent=1 // pred_fallthru
      _
    // Predicated region
    $region22: #{tpu_custom_call.1} parent=1 // pred_check
      _
    $region23: #{tpu_custom_call.1} parent=1 // pred_check_branch
      %71 = sbr.rel (0) target = $region25
    $region24: #{tpu_custom_call.1} parent=1 // pred_region
      _
    $region25: #{tpu_custom_call.1} parent=1 // pred_fallthru
      _
    // Predicated region
    $region26: #{tpu_custom_call.1} parent=1 // pred_check
      _
    $region27: #{tpu_custom_call.1} parent=1 // pred_check_branch
      %73 = sbr.rel (0) target = $region29
    $region28: #{tpu_custom_call.1} parent=1 // pred_region
      %s75 = ssub.s32 8192, 8192
      %76 = vsyncadd [#allocation9], %s75
      %s77 = sshll.u32 [#allocation10], 4
      %s78 = int_to_ptr.vmem [resolvable:$true] %s77
      %83 = dma.hbm_to_vmem [thread:$0]  %s6, 8192, %s78, [#allocation9], 128, 128, 8
    $region29: #{tpu_custom_call.1} parent=1 // pred_fallthru
      _
    // Predicated region
    $region30: #{tpu_custom_call.1} parent=1 // pred_check
      _
    $region31: #{tpu_custom_call.1} parent=1 // pred_check_branch
      %85 = sbr.rel (0) target = $region33
    $region32: #{tpu_custom_call.1} parent=1 // pred_region
      %s87 = ssub.s32 1024, 1024
      %88 = vsyncadd [#allocation12], %s87
      %s89 = sshll.u32 [#allocation11], 4
      %s90 = int_to_ptr.vmem [resolvable:$true] %s89
      %95 = dma.hbm_to_vmem [thread:$0]  %s7, 1024, %s90, [#allocation12], 128, 128, 8
    $region33: #{tpu_custom_call.1} parent=1 // pred_fallthru
      _
    // Predicated region
    $region34: #{tpu_custom_call.1} parent=1 // pred_check
      _
    $region35: #{tpu_custom_call.1} parent=1 // pred_check_branch
      %97 = sbr.rel (0) target = $region37
    $region36: #{tpu_custom_call.1} parent=1 // pred_region
      %s99 = ssub.s32 32, 32
      %100 = vsyncadd [#allocation12], %s99
      %s102 = sshll.u32 [#allocation13], 4
      %s103 = int_to_ptr.vmem [resolvable:$true] %s102
      %105 = dma.hbm_to_vmem [thread:$0]  %s8, 32, %s103, [#allocation12]
    $region37: #{tpu_custom_call.1} parent=1 // pred_fallthru
      _
    // Predicated region
    $region38: #{tpu_custom_call.1} parent=1 // pred_check
      _
    $region39: #{tpu_custom_call.1} parent=1 // pred_check_branch
      %107 = sbr.rel (0) target = $region41
    $region40: #{tpu_custom_call.1} parent=1 // pred_region
      _
    $region41: #{tpu_custom_call.1} parent=1 // pred_fallthru
      _
    // Predicated region
    $region42: #{tpu_custom_call.1} parent=1 // pred_check
      _
    $region43: #{tpu_custom_call.1} parent=1 // pred_check_branch
      %109 = sbr.rel (0) target = $region45
    $region44: #{tpu_custom_call.1} parent=1 // pred_region
      %s111 = ssub.s32 16, 16
      %112 = vsyncadd [#allocation15], %s111
      %s114 = sshll.u32 [#allocation14], 4
      %s115 = int_to_ptr.vmem [resolvable:$true] %s114
      %117 = dma.hbm_to_vmem [thread:$0]  %s10, 16, %s115, [#allocation15]
    $region45: #{tpu_custom_call.1} parent=1 // pred_fallthru
      _
    // Predicated region
    $region46: #{tpu_custom_call.1} parent=1 // pred_check
      _
    $region47: #{tpu_custom_call.1} parent=1 // pred_check_branch
      %119 = sbr.rel (0) target = $region49
    $region48: #{tpu_custom_call.1} parent=1 // pred_region
      %120 = dma.done [#allocation3], 256
    $region49: #{tpu_custom_call.1} parent=1 // pred_fallthru
      _
    // Predicated region
    $region50: #{tpu_custom_call.1} parent=1 // pred_check
      _
    $region51: #{tpu_custom_call.1} parent=1 // pred_check_branch
      %122 = sbr.rel (0) target = $region53
    $region52: #{tpu_custom_call.1} parent=1 // pred_region
      %123 = dma.done [#allocation6], 32768
    $region53: #{tpu_custom_call.1} parent=1 // pred_fallthru
      _
    // Predicated region
    $region54: #{tpu_custom_call.1} parent=1 // pred_check
      _
    $region55: #{tpu_custom_call.1} parent=1 // pred_check_branch
      %125 = sbr.rel (0) target = $region57
    $region56: #{tpu_custom_call.1} parent=1 // pred_region
      %126 = dma.done [#allocation6], 256
    $region57: #{tpu_custom_call.1} parent=1 // pred_fallthru
      _
    // Predicated region
    $region58: #{tpu_custom_call.1} parent=1 // pred_check
      _
    $region59: #{tpu_custom_call.1} parent=1 // pred_check_branch
      %128 = sbr.rel (0) target = $region61
    $region60: #{tpu_custom_call.1} parent=1 // pred_region
      %129 = dma.done [#allocation9], 131072
    $region61: #{tpu_custom_call.1} parent=1 // pred_fallthru
      _
    // Predicated region
    $region62: #{tpu_custom_call.1} parent=1 // pred_check
      _
    $region63: #{tpu_custom_call.1} parent=1 // pred_check_branch
      %131 = sbr.rel (0) target = $region65
    $region64: #{tpu_custom_call.1} parent=1 // pred_region
      %132 = dma.done [#allocation9], 8192
    $region65: #{tpu_custom_call.1} parent=1 // pred_fallthru
      _
    // Predicated region
    $region66: #{tpu_custom_call.1} parent=1 // pred_check
      _
    $region67: #{tpu_custom_call.1} parent=1 // pred_check_branch
      %134 = sbr.rel (0) target = $region69
    $region68: #{tpu_custom_call.1} parent=1 // pred_region
      %135 = dma.done [#allocation12], 1024
    $region69: #{tpu_custom_call.1} parent=1 // pred_fallthru
      _
    // Predicated region
    $region70: #{tpu_custom_call.1} parent=1 // pred_check
      _
    $region71: #{tpu_custom_call.1} parent=1 // pred_check_branch
      %137 = sbr.rel (0) target = $region73
    $region72: #{tpu_custom_call.1} parent=1 // pred_region
      %138 = dma.done [#allocation12], 32
    $region73: #{tpu_custom_call.1} parent=1 // pred_fallthru
      _
    // Predicated region
    $region74: #{tpu_custom_call.1} parent=1 // pred_check
      _
    $region75: #{tpu_custom_call.1} parent=1 // pred_check_branch
      %140 = sbr.rel (0) target = $region77
    $region76: #{tpu_custom_call.1} parent=1 // pred_region
      %141 = dma.done [#allocation15], 16
    $region77: #{tpu_custom_call.1} parent=1 // pred_fallthru
      _
    %v142 = vld [vmem:[#allocation2] sm:$0xff]
    %v143 = vld [vmem:[#allocation2 + $0x8] sm:$0xff]
    %v144 = vld [vmem:[#allocation5] sm:$0xff]
    %v145 = vld [vmem:[#allocation5 + $0x8] sm:$0xff]
    %v146 = vld [vmem:[#allocation5 + $0x10] sm:$0xff]
    %v147 = vld [vmem:[#allocation5 + $0x18] sm:$0xff]
    %v148 = vld [vmem:[#allocation5 + $0x20] sm:$0xff]
    %v149 = vld [vmem:[#allocation5 + $0x28] sm:$0xff]
    %v150 = vld [vmem:[#allocation5 + $0x30] sm:$0xff]
    %v151 = vld [vmem:[#allocation5 + $0x38] sm:$0xff]
    %v152 = vld [vmem:[#allocation5 + $0x40] sm:$0xff]
    %v153 = vld [vmem:[#allocation5 + $0x48] sm:$0xff]
    %v154 = vld [vmem:[#allocation5 + $0x50] sm:$0xff]
    %v155 = vld [vmem:[#allocation5 + $0x58] sm:$0xff]
    %v156 = vld [vmem:[#allocation5 + $0x60] sm:$0xff]
    %v157 = vld [vmem:[#allocation5 + $0x68] sm:$0xff]
    %v158 = vld [vmem:[#allocation5 + $0x70] sm:$0xff]
    %v159 = vld [vmem:[#allocation5 + $0x78] sm:$0xff]
    %v160 = vld [vmem:[#allocation5 + $0x80] sm:$0xff]
    %v161 = vld [vmem:[#allocation5 + $0x88] sm:$0xff]
    %v162 = vld [vmem:[#allocation5 + $0x90] sm:$0xff]
    %v163 = vld [vmem:[#allocation5 + $0x98] sm:$0xff]
    %v164 = vld [vmem:[#allocation5 + $0xa0] sm:$0xff]
    %v165 = vld [vmem:[#allocation5 + $0xa8] sm:$0xff]
    %v166 = vld [vmem:[#allocation5 + $0xb0] sm:$0xff]
    %v167 = vld [vmem:[#allocation5 + $0xb8] sm:$0xff]
    %v168 = vld [vmem:[#allocation5 + $0xc0] sm:$0xff]
    %v169 = vld [vmem:[#allocation5 + $0xc8] sm:$0xff]
    %v170 = vld [vmem:[#allocation5 + $0xd0] sm:$0xff]
    %v171 = vld [vmem:[#allocation5 + $0xd8] sm:$0xff]
    %v172 = vld [vmem:[#allocation5 + $0xe0] sm:$0xff]
    %v173 = vld [vmem:[#allocation5 + $0xe8] sm:$0xff]
    %v174 = vld [vmem:[#allocation5 + $0xf0] sm:$0xff]
    %v175 = vld [vmem:[#allocation5 + $0xf8] sm:$0xff]
    %v176 = vld [vmem:[#allocation5 + $0x100] sm:$0xff]
    %v177 = vld [vmem:[#allocation5 + $0x108] sm:$0xff]
    %v178 = vld [vmem:[#allocation5 + $0x110] sm:$0xff]
    %v179 = vld [vmem:[#allocation5 + $0x118] sm:$0xff]
    %v180 = vld [vmem:[#allocation5 + $0x120] sm:$0xff]
    %v181 = vld [vmem:[#allocation5 + $0x128] sm:$0xff]
    %v182 = vld [vmem:[#allocation5 + $0x130] sm:$0xff]
    %v183 = vld [vmem:[#allocation5 + $0x138] sm:$0xff]
    %v184 = vld [vmem:[#allocation5 + $0x140] sm:$0xff]
    %v185 = vld [vmem:[#allocation5 + $0x148] sm:$0xff]
    %v186 = vld [vmem:[#allocation5 + $0x150] sm:$0xff]
    %v187 = vld [vmem:[#allocation5 + $0x158] sm:$0xff]
    %v188 = vld [vmem:[#allocation5 + $0x160] sm:$0xff]
    %v189 = vld [vmem:[#allocation5 + $0x168] sm:$0xff]
    %v190 = vld [vmem:[#allocation5 + $0x170] sm:$0xff]
    %v191 = vld [vmem:[#allocation5 + $0x178] sm:$0xff]
    %v192 = vld [vmem:[#allocation5 + $0x180] sm:$0xff]
    %v193 = vld [vmem:[#allocation5 + $0x188] sm:$0xff]
    %v194 = vld [vmem:[#allocation5 + $0x190] sm:$0xff]
    %v195 = vld [vmem:[#allocation5 + $0x198] sm:$0xff]
    %v196 = vld [vmem:[#allocation5 + $0x1a0] sm:$0xff]
    %v197 = vld [vmem:[#allocation5 + $0x1a8] sm:$0xff]
    %v198 = vld [vmem:[#allocation5 + $0x1b0] sm:$0xff]
    %v199 = vld [vmem:[#allocation5 + $0x1b8] sm:$0xff]
    %v200 = vld [vmem:[#allocation5 + $0x1c0] sm:$0xff]
    %v201 = vld [vmem:[#allocation5 + $0x1c8] sm:$0xff]
    %v202 = vld [vmem:[#allocation5 + $0x1d0] sm:$0xff]
    %v203 = vld [vmem:[#allocation5 + $0x1d8] sm:$0xff]
    %v204 = vld [vmem:[#allocation5 + $0x1e0] sm:$0xff]
    %v205 = vld [vmem:[#allocation5 + $0x1e8] sm:$0xff]
    %v206 = vld [vmem:[#allocation5 + $0x1f0] sm:$0xff]
    %v207 = vld [vmem:[#allocation5 + $0x1f8] sm:$0xff]
    %v208 = vld [vmem:[#allocation5 + $0x200] sm:$0xff]
    %v209 = vld [vmem:[#allocation5 + $0x208] sm:$0xff]
    %v210 = vld [vmem:[#allocation5 + $0x210] sm:$0xff]
    %v211 = vld [vmem:[#allocation5 + $0x218] sm:$0xff]
    %v212 = vld [vmem:[#allocation5 + $0x220] sm:$0xff]
    %v213 = vld [vmem:[#allocation5 + $0x228] sm:$0xff]
    %v214 = vld [vmem:[#allocation5 + $0x230] sm:$0xff]
    %v215 = vld [vmem:[#allocation5 + $0x238] sm:$0xff]
    %v216 = vld [vmem:[#allocation5 + $0x240] sm:$0xff]
    %v217 = vld [vmem:[#allocation5 + $0x248] sm:$0xff]
    %v218 = vld [vmem:[#allocation5 + $0x250] sm:$0xff]
    %v219 = vld [vmem:[#allocation5 + $0x258] sm:$0xff]
    %v220 = vld [vmem:[#allocation5 + $0x260] sm:$0xff]
    %v221 = vld [vmem:[#allocation5 + $0x268] sm:$0xff]
    %v222 = vld [vmem:[#allocation5 + $0x270] sm:$0xff]
    %v223 = vld [vmem:[#allocation5 + $0x278] sm:$0xff]
    %v224 = vld [vmem:[#allocation5 + $0x280] sm:$0xff]
    %v225 = vld [vmem:[#allocation5 + $0x288] sm:$0xff]
    %v226 = vld [vmem:[#allocation5 + $0x290] sm:$0xff]
    %v227 = vld [vmem:[#allocation5 + $0x298] sm:$0xff]
    %v228 = vld [vmem:[#allocation5 + $0x2a0] sm:$0xff]
    %v229 = vld [vmem:[#allocation5 + $0x2a8] sm:$0xff]
    %v230 = vld [vmem:[#allocation5 + $0x2b0] sm:$0xff]
    %v231 = vld [vmem:[#allocation5 + $0x2b8] sm:$0xff]
    %v232 = vld [vmem:[#allocation5 + $0x2c0] sm:$0xff]
    %v233 = vld [vmem:[#allocation5 + $0x2c8] sm:$0xff]
    %v234 = vld [vmem:[#allocation5 + $0x2d0] sm:$0xff]
    %v235 = vld [vmem:[#allocation5 + $0x2d8] sm:$0xff]
    %v236 = vld [vmem:[#allocation5 + $0x2e0] sm:$0xff]
    %v237 = vld [vmem:[#allocation5 + $0x2e8] sm:$0xff]
    %v238 = vld [vmem:[#allocation5 + $0x2f0] sm:$0xff]
    %v239 = vld [vmem:[#allocation5 + $0x2f8] sm:$0xff]
    %v240 = vld [vmem:[#allocation5 + $0x300] sm:$0xff]
    %v241 = vld [vmem:[#allocation5 + $0x308] sm:$0xff]
    %v242 = vld [vmem:[#allocation5 + $0x310] sm:$0xff]
    %v243 = vld [vmem:[#allocation5 + $0x318] sm:$0xff]
    %v244 = vld [vmem:[#allocation5 + $0x320] sm:$0xff]
    %v245 = vld [vmem:[#allocation5 + $0x328] sm:$0xff]
    %v246 = vld [vmem:[#allocation5 + $0x330] sm:$0xff]
    %v247 = vld [vmem:[#allocation5 + $0x338] sm:$0xff]
    %v248 = vld [vmem:[#allocation5 + $0x340] sm:$0xff]
    %v249 = vld [vmem:[#allocation5 + $0x348] sm:$0xff]
    %v250 = vld [vmem:[#allocation5 + $0x350] sm:$0xff]
    %v251 = vld [vmem:[#allocation5 + $0x358] sm:$0xff]
    %v252 = vld [vmem:[#allocation5 + $0x360] sm:$0xff]
    %v253 = vld [vmem:[#allocation5 + $0x368] sm:$0xff]
    %v254 = vld [vmem:[#allocation5 + $0x370] sm:$0xff]
    %v255 = vld [vmem:[#allocation5 + $0x378] sm:$0xff]
    %v256 = vld [vmem:[#allocation5 + $0x380] sm:$0xff]
    %v257 = vld [vmem:[#allocation5 + $0x388] sm:$0xff]
    %v258 = vld [vmem:[#allocation5 + $0x390] sm:$0xff]
    %v259 = vld [vmem:[#allocation5 + $0x398] sm:$0xff]
    %v260 = vld [vmem:[#allocation5 + $0x3a0] sm:$0xff]
    %v261 = vld [vmem:[#allocation5 + $0x3a8] sm:$0xff]
    %v262 = vld [vmem:[#allocation5 + $0x3b0] sm:$0xff]
    %v263 = vld [vmem:[#allocation5 + $0x3b8] sm:$0xff]
    %v264 = vld [vmem:[#allocation5 + $0x3c0] sm:$0xff]
    %v265 = vld [vmem:[#allocation5 + $0x3c8] sm:$0xff]
    %v266 = vld [vmem:[#allocation5 + $0x3d0] sm:$0xff]
    %v267 = vld [vmem:[#allocation5 + $0x3d8] sm:$0xff]
    %v268 = vld [vmem:[#allocation5 + $0x3e0] sm:$0xff]
    %v269 = vld [vmem:[#allocation5 + $0x3e8] sm:$0xff]
    %v270 = vld [vmem:[#allocation5 + $0x3f0] sm:$0xff]
    %v271 = vld [vmem:[#allocation5 + $0x3f8] sm:$0xff]
    %v272 = vld [vmem:[#allocation5 + $0x400] sm:$0xff]
    %v273 = vld [vmem:[#allocation5 + $0x408] sm:$0xff]
    %v274 = vld [vmem:[#allocation5 + $0x410] sm:$0xff]
    %v275 = vld [vmem:[#allocation5 + $0x418] sm:$0xff]
    %v276 = vld [vmem:[#allocation5 + $0x420] sm:$0xff]
    %v277 = vld [vmem:[#allocation5 + $0x428] sm:$0xff]
    %v278 = vld [vmem:[#allocation5 + $0x430] sm:$0xff]
    %v279 = vld [vmem:[#allocation5 + $0x438] sm:$0xff]
    %v280 = vld [vmem:[#allocation5 + $0x440] sm:$0xff]
    %v281 = vld [vmem:[#allocation5 + $0x448] sm:$0xff]
    %v282 = vld [vmem:[#allocation5 + $0x450] sm:$0xff]
    %v283 = vld [vmem:[#allocation5 + $0x458] sm:$0xff]
    %v284 = vld [vmem:[#allocation5 + $0x460] sm:$0xff]
    %v285 = vld [vmem:[#allocation5 + $0x468] sm:$0xff]
    %v286 = vld [vmem:[#allocation5 + $0x470] sm:$0xff]
    %v287 = vld [vmem:[#allocation5 + $0x478] sm:$0xff]
    %v288 = vld [vmem:[#allocation5 + $0x480] sm:$0xff]
    %v289 = vld [vmem:[#allocation5 + $0x488] sm:$0xff]
    %v290 = vld [vmem:[#allocation5 + $0x490] sm:$0xff]
    %v291 = vld [vmem:[#allocation5 + $0x498] sm:$0xff]
    %v292 = vld [vmem:[#allocation5 + $0x4a0] sm:$0xff]
    %v293 = vld [vmem:[#allocation5 + $0x4a8] sm:$0xff]
    %v294 = vld [vmem:[#allocation5 + $0x4b0] sm:$0xff]
    %v295 = vld [vmem:[#allocation5 + $0x4b8] sm:$0xff]
    %v296 = vld [vmem:[#allocation5 + $0x4c0] sm:$0xff]
    %v297 = vld [vmem:[#allocation5 + $0x4c8] sm:$0xff]
    %v298 = vld [vmem:[#allocation5 + $0x4d0] sm:$0xff]
    %v299 = vld [vmem:[#allocation5 + $0x4d8] sm:$0xff]
    %v300 = vld [vmem:[#allocation5 + $0x4e0] sm:$0xff]
    %v301 = vld [vmem:[#allocation5 + $0x4e8] sm:$0xff]
    %v302 = vld [vmem:[#allocation5 + $0x4f0] sm:$0xff]
    %v303 = vld [vmem:[#allocation5 + $0x4f8] sm:$0xff]
    %v304 = vld [vmem:[#allocation5 + $0x500] sm:$0xff]
    %v305 = vld [vmem:[#allocation5 + $0x508] sm:$0xff]
    %v306 = vld [vmem:[#allocation5 + $0x510] sm:$0xff]
    %v307 = vld [vmem:[#allocation5 + $0x518] sm:$0xff]
    %v308 = vld [vmem:[#allocation5 + $0x520] sm:$0xff]
    %v309 = vld [vmem:[#allocation5 + $0x528] sm:$0xff]
    %v310 = vld [vmem:[#allocation5 + $0x530] sm:$0xff]
    %v311 = vld [vmem:[#allocation5 + $0x538] sm:$0xff]
    %v312 = vld [vmem:[#allocation5 + $0x540] sm:$0xff]
    %v313 = vld [vmem:[#allocation5 + $0x548] sm:$0xff]
    %v314 = vld [vmem:[#allocation5 + $0x550] sm:$0xff]
    %v315 = vld [vmem:[#allocation5 + $0x558] sm:$0xff]
    %v316 = vld [vmem:[#allocation5 + $0x560] sm:$0xff]
    %v317 = vld [vmem:[#allocation5 + $0x568] sm:$0xff]
    %v318 = vld [vmem:[#allocation5 + $0x570] sm:$0xff]
    %v319 = vld [vmem:[#allocation5 + $0x578] sm:$0xff]
    %v320 = vld [vmem:[#allocation5 + $0x580] sm:$0xff]
    %v321 = vld [vmem:[#allocation5 + $0x588] sm:$0xff]
    %v322 = vld [vmem:[#allocation5 + $0x590] sm:$0xff]
    %v323 = vld [vmem:[#allocation5 + $0x598] sm:$0xff]
    %v324 = vld [vmem:[#allocation5 + $0x5a0] sm:$0xff]
    %v325 = vld [vmem:[#allocation5 + $0x5a8] sm:$0xff]
    %v326 = vld [vmem:[#allocation5 + $0x5b0] sm:$0xff]
    %v327 = vld [vmem:[#allocation5 + $0x5b8] sm:$0xff]
    %v328 = vld [vmem:[#allocation5 + $0x5c0] sm:$0xff]
    %v329 = vld [vmem:[#allocation5 + $0x5c8] sm:$0xff]
    %v330 = vld [vmem:[#allocation5 + $0x5d0] sm:$0xff]
    %v331 = vld [vmem:[#allocation5 + $0x5d8] sm:$0xff]
    %v332 = vld [vmem:[#allocation5 + $0x5e0] sm:$0xff]
    %v333 = vld [vmem:[#allocation5 + $0x5e8] sm:$0xff]
    %v334 = vld [vmem:[#allocation5 + $0x5f0] sm:$0xff]
    %v335 = vld [vmem:[#allocation5 + $0x5f8] sm:$0xff]
    %v336 = vld [vmem:[#allocation5 + $0x600] sm:$0xff]
    %v337 = vld [vmem:[#allocation5 + $0x608] sm:$0xff]
    %v338 = vld [vmem:[#allocation5 + $0x610] sm:$0xff]
    %v339 = vld [vmem:[#allocation5 + $0x618] sm:$0xff]
    %v340 = vld [vmem:[#allocation5 + $0x620] sm:$0xff]
    %v341 = vld [vmem:[#allocation5 + $0x628] sm:$0xff]
    %v342 = vld [vmem:[#allocation5 + $0x630] sm:$0xff]
    %v343 = vld [vmem:[#allocation5 + $0x638] sm:$0xff]
    %v344 = vld [vmem:[#allocation5 + $0x640] sm:$0xff]
    %v345 = vld [vmem:[#allocation5 + $0x648] sm:$0xff]
    %v346 = vld [vmem:[#allocation5 + $0x650] sm:$0xff]
    %v347 = vld [vmem:[#allocation5 + $0x658] sm:$0xff]
    %v348 = vld [vmem:[#allocation5 + $0x660] sm:$0xff]
    %v349 = vld [vmem:[#allocation5 + $0x668] sm:$0xff]
    %v350 = vld [vmem:[#allocation5 + $0x670] sm:$0xff]
    %v351 = vld [vmem:[#allocation5 + $0x678] sm:$0xff]
    %v352 = vld [vmem:[#allocation5 + $0x680] sm:$0xff]
    %v353 = vld [vmem:[#allocation5 + $0x688] sm:$0xff]
    %v354 = vld [vmem:[#allocation5 + $0x690] sm:$0xff]
    %v355 = vld [vmem:[#allocation5 + $0x698] sm:$0xff]
    %v356 = vld [vmem:[#allocation5 + $0x6a0] sm:$0xff]
    %v357 = vld [vmem:[#allocation5 + $0x6a8] sm:$0xff]
    %v358 = vld [vmem:[#allocation5 + $0x6b0] sm:$0xff]
    %v359 = vld [vmem:[#allocation5 + $0x6b8] sm:$0xff]
    %v360 = vld [vmem:[#allocation5 + $0x6c0] sm:$0xff]
    %v361 = vld [vmem:[#allocation5 + $0x6c8] sm:$0xff]
    %v362 = vld [vmem:[#allocation5 + $0x6d0] sm:$0xff]
    %v363 = vld [vmem:[#allocation5 + $0x6d8] sm:$0xff]
    %v364 = vld [vmem:[#allocation5 + $0x6e0] sm:$0xff]
    %v365 = vld [vmem:[#allocation5 + $0x6e8] sm:$0xff]
    %v366 = vld [vmem:[#allocation5 + $0x6f0] sm:$0xff]
    %v367 = vld [vmem:[#allocation5 + $0x6f8] sm:$0xff]
    %v368 = vld [vmem:[#allocation5 + $0x700] sm:$0xff]
    %v369 = vld [vmem:[#allocation5 + $0x708] sm:$0xff]
    %v370 = vld [vmem:[#allocation5 + $0x710] sm:$0xff]
    %v371 = vld [vmem:[#allocation5 + $0x718] sm:$0xff]
    %v372 = vld [vmem:[#allocation5 + $0x720] sm:$0xff]
    %v373 = vld [vmem:[#allocation5 + $0x728] sm:$0xff]
    %v374 = vld [vmem:[#allocation5 + $0x730] sm:$0xff]
    %v375 = vld [vmem:[#allocation5 + $0x738] sm:$0xff]
    %v376 = vld [vmem:[#allocation5 + $0x740] sm:$0xff]
    %v377 = vld [vmem:[#allocation5 + $0x748] sm:$0xff]
    %v378 = vld [vmem:[#allocation5 + $0x750] sm:$0xff]
    %v379 = vld [vmem:[#allocation5 + $0x758] sm:$0xff]
    %v380 = vld [vmem:[#allocation5 + $0x760] sm:$0xff]
    %v381 = vld [vmem:[#allocation5 + $0x768] sm:$0xff]
    %v382 = vld [vmem:[#allocation5 + $0x770] sm:$0xff]
    %v383 = vld [vmem:[#allocation5 + $0x778] sm:$0xff]
    %v384 = vld [vmem:[#allocation5 + $0x780] sm:$0xff]
    %v385 = vld [vmem:[#allocation5 + $0x788] sm:$0xff]
    %v386 = vld [vmem:[#allocation5 + $0x790] sm:$0xff]
    %v387 = vld [vmem:[#allocation5 + $0x798] sm:$0xff]
    %v388 = vld [vmem:[#allocation5 + $0x7a0] sm:$0xff]
    %v389 = vld [vmem:[#allocation5 + $0x7a8] sm:$0xff]
    %v390 = vld [vmem:[#allocation5 + $0x7b0] sm:$0xff]
    %v391 = vld [vmem:[#allocation5 + $0x7b8] sm:$0xff]
    %v392 = vld [vmem:[#allocation5 + $0x7c0] sm:$0xff]
    %v393 = vld [vmem:[#allocation5 + $0x7c8] sm:$0xff]
    %v394 = vld [vmem:[#allocation5 + $0x7d0] sm:$0xff]
    %v395 = vld [vmem:[#allocation5 + $0x7d8] sm:$0xff]
    %v396 = vld [vmem:[#allocation5 + $0x7e0] sm:$0xff]
    %v397 = vld [vmem:[#allocation5 + $0x7e8] sm:$0xff]
    %v398 = vld [vmem:[#allocation5 + $0x7f0] sm:$0xff]
    %v399 = vld [vmem:[#allocation5 + $0x7f8] sm:$0xff]
    %v400 = vld [vmem:[#allocation7] sm:$0xff]
    %v401 = vld [vmem:[#allocation7 + $0x8] sm:$0xff]
    %v404 = vlaneseq
    %v405 = vshrl.u32 %v404, 7
    %v406 = vsub.s32 0, %v405
    %v407 = vrot.slane %v400, %v406
    %v408 = vlaneseq
    %v409 = vshrl.u32 %v408, 7
    %v410 = vsub.s32 1, %v409
    %v411 = vrot.slane %v400, %v410
    %v412 = vlaneseq
    %v413 = vshrl.u32 %v412, 7
    %v414 = vsub.s32 2, %v413
    %v415 = vrot.slane %v400, %v414
    %v416 = vlaneseq
    %v417 = vshrl.u32 %v416, 7
    %v418 = vsub.s32 3, %v417
    %v419 = vrot.slane %v400, %v418
    %v420 = vlaneseq
    %v421 = vshrl.u32 %v420, 7
    %v422 = vsub.s32 4, %v421
    %v423 = vrot.slane %v400, %v422
    %v424 = vlaneseq
    %v425 = vshrl.u32 %v424, 7
    %v426 = vsub.s32 5, %v425
    %v427 = vrot.slane %v400, %v426
    %v428 = vlaneseq
    %v429 = vshrl.u32 %v428, 7
    %v430 = vsub.s32 6, %v429
    %v431 = vrot.slane %v400, %v430
    %v432 = vlaneseq
    %v433 = vshrl.u32 %v432, 7
    %v434 = vsub.s32 7, %v433
    %v435 = vrot.slane %v400, %v434
    %v436 = vlaneseq
    %v437 = vshrl.u32 %v436, 7
    %v438 = vsub.s32 0, %v437
    %v439 = vrot.slane %v401, %v438
    %v440 = vlaneseq
    %v441 = vshrl.u32 %v440, 7
    %v442 = vsub.s32 1, %v441
    %v443 = vrot.slane %v401, %v442
    %v444 = vlaneseq
    %v445 = vshrl.u32 %v444, 7
    %v446 = vsub.s32 2, %v445
    %v447 = vrot.slane %v401, %v446
    %v448 = vlaneseq
    %v449 = vshrl.u32 %v448, 7
    %v450 = vsub.s32 3, %v449
    %v451 = vrot.slane %v401, %v450
    %v452 = vlaneseq
    %v453 = vshrl.u32 %v452, 7
    %v454 = vsub.s32 4, %v453
    %v455 = vrot.slane %v401, %v454
    %v456 = vlaneseq
    %v457 = vshrl.u32 %v456, 7
    %v458 = vsub.s32 5, %v457
    %v459 = vrot.slane %v401, %v458
    %v460 = vlaneseq
    %v461 = vshrl.u32 %v460, 7
    %v462 = vsub.s32 6, %v461
    %v463 = vrot.slane %v401, %v462
    %v464 = vlaneseq
    %v465 = vshrl.u32 %v464, 7
    %v466 = vsub.s32 7, %v465
    %v467 = vrot.slane %v401, %v466
    %484 = vmatprep.subr.mxu0 %v145
    %485 = vmatpush1.msra.mxu0 %v144
    %486 = vmatprep.subr.mxu0 %v161
    %487 = vmatpush1.msra.mxu0 %v160
    %488 = vmatprep.subr.mxu0 %v177
    %489 = vmatpush1.msra.mxu0 %v176
    %490 = vmatprep.subr.mxu0 %v193
    %491 = vmatpush1.msra.mxu0 %v192
    %492 = vmatprep.subr.mxu0 %v209
    %493 = vmatpush1.msra.mxu0 %v208
    %494 = vmatprep.subr.mxu0 %v225
    %495 = vmatpush1.msra.mxu0 %v224
    %496 = vmatprep.subr.mxu0 %v241
    %497 = vmatpush1.msra.mxu0 %v240
    %498 = vmatprep.subr.mxu0 %v257
    %499 = vmatpush1.msra.mxu0 %v256
    %500 = vmatprep.subr.mxu0 %v273
    %501 = vmatpush1.msra.mxu0 %v272
    %502 = vmatprep.subr.mxu0 %v289
    %503 = vmatpush1.msra.mxu0 %v288
    %504 = vmatprep.subr.mxu0 %v305
    %505 = vmatpush1.msra.mxu0 %v304
    %506 = vmatprep.subr.mxu0 %v321
    %507 = vmatpush1.msra.mxu0 %v320
    %508 = vmatprep.subr.mxu0 %v337
    %509 = vmatpush1.msra.mxu0 %v336
    %510 = vmatprep.subr.mxu0 %v353
    %511 = vmatpush1.msra.mxu0 %v352
    %512 = vmatprep.subr.mxu0 %v369
    %513 = vmatpush1.msra.mxu0 %v368
    %514 = vmatprep.subr.mxu0 %v385
    %515 = vmatpush1.msra.mxu0 %v384
    %516 = vmatprep.subr.mxu0 0.0
    %517 = vmatpush1.msra.mxu0 0.0
    %518 = vmatprep.subr.mxu0 0.0
    %519 = vmatpush1.msra.mxu0 0.0
    %520 = vmatprep.subr.mxu0 0.0
    %521 = vmatpush1.msra.mxu0 0.0
    %522 = vmatprep.subr.mxu0 0.0
    %523 = vmatpush1.msra.mxu0 0.0
    %524 = vmatprep.subr.mxu0 0.0
    %525 = vmatpush1.msra.mxu0 0.0
    %526 = vmatprep.subr.mxu0 0.0
    %527 = vmatpush1.msra.mxu0 0.0
    %528 = vmatprep.subr.mxu0 0.0
    %529 = vmatpush1.msra.mxu0 0.0
    %530 = vmatprep.subr.mxu0 0.0
    %531 = vmatpush1.msra.mxu0 0.0
    %532 = vmatprep.subr.mxu0 0.0
    %533 = vmatpush1.msra.mxu0 0.0
    %534 = vmatprep.subr.mxu0 0.0
    %535 = vmatpush1.msra.mxu0 0.0
    %536 = vmatprep.subr.mxu0 0.0
    %537 = vmatpush1.msra.mxu0 0.0
    %538 = vmatprep.subr.mxu0 0.0
    %539 = vmatpush1.msra.mxu0 0.0
    %540 = vmatprep.subr.mxu0 0.0
    %541 = vmatpush1.msra.mxu0 0.0
    %542 = vmatprep.subr.mxu0 0.0
    %543 = vmatpush1.msra.mxu0 0.0
    %544 = vmatprep.subr.mxu0 0.0
    %545 = vmatpush1.msra.mxu0 0.0
    %546 = vmatprep.subr.mxu0 0.0
    %547 = vmatpush1.msra.mxu0 0.0
    %548 = vmatprep.mubr.f32.mxu0 0.0
    %549 = vmatmul.mubr.f32.gmra.mrb[0].mxu0 %v142
    %v550 = vpop.f32.mrb[0].mxu0
    %v551 = vadd.f32 %v407, %v550
    %v552 = vpop.f32.mrb[0].mxu0
    %v553 = vadd.f32 %v411, %v552
    %554 = vmatprep.mubr.f32.mxu0 0.0
    %555 = vmatmul.mubr.f32.gmra.mrb[0].mxu0 %v143
    %v556 = vpop.f32.mrb[0].mxu0
    %v557 = vadd.f32 %v407, %v556
    %v558 = vpop.f32.mrb[0].mxu0
    %v559 = vadd.f32 %v411, %v558
    %560 = vdwg.mxu0
    %561 = vmatprep.subr.mxu0 %v147
    %562 = vmatpush1.msra.mxu0 %v146
    %563 = vmatprep.subr.mxu0 %v163
    %564 = vmatpush1.msra.mxu0 %v162
    %565 = vmatprep.subr.mxu0 %v179
    %566 = vmatpush1.msra.mxu0 %v178
    %567 = vmatprep.subr.mxu0 %v195
    %568 = vmatpush1.msra.mxu0 %v194
    %569 = vmatprep.subr.mxu0 %v211
    %570 = vmatpush1.msra.mxu0 %v210
    %571 = vmatprep.subr.mxu0 %v227
    %572 = vmatpush1.msra.mxu0 %v226
    %573 = vmatprep.subr.mxu0 %v243
    %574 = vmatpush1.msra.mxu0 %v242
    %575 = vmatprep.subr.mxu0 %v259
    %576 = vmatpush1.msra.mxu0 %v258
    %577 = vmatprep.subr.mxu0 %v275
    %578 = vmatpush1.msra.mxu0 %v274
    %579 = vmatprep.subr.mxu0 %v291
    %580 = vmatpush1.msra.mxu0 %v290
    %581 = vmatprep.subr.mxu0 %v307
    %582 = vmatpush1.msra.mxu0 %v306
    %583 = vmatprep.subr.mxu0 %v323
    %584 = vmatpush1.msra.mxu0 %v322
    %585 = vmatprep.subr.mxu0 %v339
    %586 = vmatpush1.msra.mxu0 %v338
    %587 = vmatprep.subr.mxu0 %v355
    %588 = vmatpush1.msra.mxu0 %v354
    %589 = vmatprep.subr.mxu0 %v371
    %590 = vmatpush1.msra.mxu0 %v370
    %591 = vmatprep.subr.mxu0 %v387
    %592 = vmatpush1.msra.mxu0 %v386
    %593 = vmatprep.subr.mxu0 0.0
    %594 = vmatpush1.msra.mxu0 0.0
    %595 = vmatprep.subr.mxu0 0.0
    %596 = vmatpush1.msra.mxu0 0.0
    %597 = vmatprep.subr.mxu0 0.0
    %598 = vmatpush1.msra.mxu0 0.0
    %599 = vmatprep.subr.mxu0 0.0
    %600 = vmatpush1.msra.mxu0 0.0
    %601 = vmatprep.subr.mxu0 0.0
    %602 = vmatpush1.msra.mxu0 0.0
    %603 = vmatprep.subr.mxu0 0.0
    %604 = vmatpush1.msra.mxu0 0.0
    %605 = vmatprep.subr.mxu0 0.0
    %606 = vmatpush1.msra.mxu0 0.0
    %607 = vmatprep.subr.mxu0 0.0
    %608 = vmatpush1.msra.mxu0 0.0
    %609 = vmatprep.subr.mxu0 0.0
    %610 = vmatpush1.msra.mxu0 0.0
    %611 = vmatprep.subr.mxu0 0.0
    %612 = vmatpush1.msra.mxu0 0.0
    %613 = vmatprep.subr.mxu0 0.0
    %614 = vmatpush1.msra.mxu0 0.0
    %615 = vmatprep.subr.mxu0 0.0
    %616 = vmatpush1.msra.mxu0 0.0
    %617 = vmatprep.subr.mxu0 0.0
    %618 = vmatpush1.msra.mxu0 0.0
    %619 = vmatprep.subr.mxu0 0.0
    %620 = vmatpush1.msra.mxu0 0.0
    %621 = vmatprep.subr.mxu0 0.0
    %622 = vmatpush1.msra.mxu0 0.0
    %623 = vmatprep.subr.mxu0 0.0
    %624 = vmatpush1.msra.mxu0 0.0
    %625 = vmatprep.mubr.f32.mxu0 0.0
    %626 = vmatmul.mubr.f32.gmra.mrb[0].mxu0 %v142
    %v627 = vpop.f32.mrb[0].mxu0
    %v628 = vadd.f32 %v415, %v627
    %v629 = vpop.f32.mrb[0].mxu0
    %v630 = vadd.f32 %v419, %v629
    %631 = vmatprep.mubr.f32.mxu0 0.0
    %632 = vmatmul.mubr.f32.gmra.mrb[0].mxu0 %v143
    %v633 = vpop.f32.mrb[0].mxu0
    %v634 = vadd.f32 %v415, %v633
    %v635 = vpop.f32.mrb[0].mxu0
    %v636 = vadd.f32 %v419, %v635
    %637 = vdwg.mxu0
    %638 = vmatprep.subr.mxu0 %v149
    %639 = vmatpush1.msra.mxu0 %v148
    %640 = vmatprep.subr.mxu0 %v165
    %641 = vmatpush1.msra.mxu0 %v164
    %642 = vmatprep.subr.mxu0 %v181
    %643 = vmatpush1.msra.mxu0 %v180
    %644 = vmatprep.subr.mxu0 %v197
    %645 = vmatpush1.msra.mxu0 %v196
    %646 = vmatprep.subr.mxu0 %v213
    %647 = vmatpush1.msra.mxu0 %v212
    %648 = vmatprep.subr.mxu0 %v229
    %649 = vmatpush1.msra.mxu0 %v228
    %650 = vmatprep.subr.mxu0 %v245
    %651 = vmatpush1.msra.mxu0 %v244
    %652 = vmatprep.subr.mxu0 %v261
    %653 = vmatpush1.msra.mxu0 %v260
    %654 = vmatprep.subr.mxu0 %v277
    %655 = vmatpush1.msra.mxu0 %v276
    %656 = vmatprep.subr.mxu0 %v293
    %657 = vmatpush1.msra.mxu0 %v292
    %658 = vmatprep.subr.mxu0 %v309
    %659 = vmatpush1.msra.mxu0 %v308
    %660 = vmatprep.subr.mxu0 %v325
    %661 = vmatpush1.msra.mxu0 %v324
    %662 = vmatprep.subr.mxu0 %v341
    %663 = vmatpush1.msra.mxu0 %v340
    %664 = vmatprep.subr.mxu0 %v357
    %665 = vmatpush1.msra.mxu0 %v356
    %666 = vmatprep.subr.mxu0 %v373
    %667 = vmatpush1.msra.mxu0 %v372
    %668 = vmatprep.subr.mxu0 %v389
    %669 = vmatpush1.msra.mxu0 %v388
    %670 = vmatprep.subr.mxu0 0.0
    %671 = vmatpush1.msra.mxu0 0.0
    %672 = vmatprep.subr.mxu0 0.0
    %673 = vmatpush1.msra.mxu0 0.0
    %674 = vmatprep.subr.mxu0 0.0
    %675 = vmatpush1.msra.mxu0 0.0
    %676 = vmatprep.subr.mxu0 0.0
    %677 = vmatpush1.msra.mxu0 0.0
    %678 = vmatprep.subr.mxu0 0.0
    %679 = vmatpush1.msra.mxu0 0.0
    %680 = vmatprep.subr.mxu0 0.0
    %681 = vmatpush1.msra.mxu0 0.0
    %682 = vmatprep.subr.mxu0 0.0
    %683 = vmatpush1.msra.mxu0 0.0
    %684 = vmatprep.subr.mxu0 0.0
    %685 = vmatpush1.msra.mxu0 0.0
    %686 = vmatprep.subr.mxu0 0.0
    %687 = vmatpush1.msra.mxu0 0.0
    %688 = vmatprep.subr.mxu0 0.0
    %689 = vmatpush1.msra.mxu0 0.0
    %690 = vmatprep.subr.mxu0 0.0
    %691 = vmatpush1.msra.mxu0 0.0
    %692 = vmatprep.subr.mxu0 0.0
    %693 = vmatpush1.msra.mxu0 0.0
    %694 = vmatprep.subr.mxu0 0.0
    %695 = vmatpush1.msra.mxu0 0.0
    %696 = vmatprep.subr.mxu0 0.0
    %697 = vmatpush1.msra.mxu0 0.0
    %698 = vmatprep.subr.mxu0 0.0
    %699 = vmatpush1.msra.mxu0 0.0
    %700 = vmatprep.subr.mxu0 0.0
    %701 = vmatpush1.msra.mxu0 0.0
    %702 = vmatprep.mubr.f32.mxu0 0.0
    %703 = vmatmul.mubr.f32.gmra.mrb[0].mxu0 %v142
    %v704 = vpop.f32.mrb[0].mxu0
    %v705 = vadd.f32 %v423, %v704
    %v706 = vpop.f32.mrb[0].mxu0
    %v707 = vadd.f32 %v427, %v706
    %708 = vmatprep.mubr.f32.mxu0 0.0
    %709 = vmatmul.mubr.f32.gmra.mrb[0].mxu0 %v143
    %v710 = vpop.f32.mrb[0].mxu0
    %v711 = vadd.f32 %v423, %v710
    %v712 = vpop.f32.mrb[0].mxu0
    %v713 = vadd.f32 %v427, %v712
    %714 = vdwg.mxu0
    %715 = vmatprep.subr.mxu0 %v151
    %716 = vmatpush1.msra.mxu0 %v150
    %717 = vmatprep.subr.mxu0 %v167
    %718 = vmatpush1.msra.mxu0 %v166
    %719 = vmatprep.subr.mxu0 %v183
    %720 = vmatpush1.msra.mxu0 %v182
    %721 = vmatprep.subr.mxu0 %v199
    %722 = vmatpush1.msra.mxu0 %v198
    %723 = vmatprep.subr.mxu0 %v215
    %724 = vmatpush1.msra.mxu0 %v214
    %725 = vmatprep.subr.mxu0 %v231
    %726 = vmatpush1.msra.mxu0 %v230
    %727 = vmatprep.subr.mxu0 %v247
    %728 = vmatpush1.msra.mxu0 %v246
    %729 = vmatprep.subr.mxu0 %v263
    %730 = vmatpush1.msra.mxu0 %v262
    %731 = vmatprep.subr.mxu0 %v279
    %732 = vmatpush1.msra.mxu0 %v278
    %733 = vmatprep.subr.mxu0 %v295
    %734 = vmatpush1.msra.mxu0 %v294
    %735 = vmatprep.subr.mxu0 %v311
    %736 = vmatpush1.msra.mxu0 %v310
    %737 = vmatprep.subr.mxu0 %v327
    %738 = vmatpush1.msra.mxu0 %v326
    %739 = vmatprep.subr.mxu0 %v343
    %740 = vmatpush1.msra.mxu0 %v342
    %741 = vmatprep.subr.mxu0 %v359
    %742 = vmatpush1.msra.mxu0 %v358
    %743 = vmatprep.subr.mxu0 %v375
    %744 = vmatpush1.msra.mxu0 %v374
    %745 = vmatprep.subr.mxu0 %v391
    %746 = vmatpush1.msra.mxu0 %v390
    %747 = vmatprep.subr.mxu0 0.0
    %748 = vmatpush1.msra.mxu0 0.0
    %749 = vmatprep.subr.mxu0 0.0
    %750 = vmatpush1.msra.mxu0 0.0
    %751 = vmatprep.subr.mxu0 0.0
    %752 = vmatpush1.msra.mxu0 0.0
    %753 = vmatprep.subr.mxu0 0.0
    %754 = vmatpush1.msra.mxu0 0.0
    %755 = vmatprep.subr.mxu0 0.0
    %756 = vmatpush1.msra.mxu0 0.0
    %757 = vmatprep.subr.mxu0 0.0
    %758 = vmatpush1.msra.mxu0 0.0
    %759 = vmatprep.subr.mxu0 0.0
    %760 = vmatpush1.msra.mxu0 0.0
    %761 = vmatprep.subr.mxu0 0.0
    %762 = vmatpush1.msra.mxu0 0.0
    %763 = vmatprep.subr.mxu0 0.0
    %764 = vmatpush1.msra.mxu0 0.0
    %765 = vmatprep.subr.mxu0 0.0
    %766 = vmatpush1.msra.mxu0 0.0
    %767 = vmatprep.subr.mxu0 0.0
    %768 = vmatpush1.msra.mxu0 0.0
    %769 = vmatprep.subr.mxu0 0.0
    %770 = vmatpush1.msra.mxu0 0.0
    %771 = vmatprep.subr.mxu0 0.0
    %772 = vmatpush1.msra.mxu0 0.0
    %773 = vmatprep.subr.mxu0 0.0
    %774 = vmatpush1.msra.mxu0 0.0
    %775 = vmatprep.subr.mxu0 0.0
    %776 = vmatpush1.msra.mxu0 0.0
    %777 = vmatprep.subr.mxu0 0.0
    %778 = vmatpush1.msra.mxu0 0.0
    %779 = vmatprep.mubr.f32.mxu0 0.0
    %780 = vmatmul.mubr.f32.gmra.mrb[0].mxu0 %v142
    %v781 = vpop.f32.mrb[0].mxu0
    %v782 = vadd.f32 %v431, %v781
    %v783 = vpop.f32.mrb[0].mxu0
    %v784 = vadd.f32 %v435, %v783
    %785 = vmatprep.mubr.f32.mxu0 0.0
    %786 = vmatmul.mubr.f32.gmra.mrb[0].mxu0 %v143
    %v787 = vpop.f32.mrb[0].mxu0
    %v788 = vadd.f32 %v431, %v787
    %v789 = vpop.f32.mrb[0].mxu0
    %v790 = vadd.f32 %v435, %v789
    %791 = vdwg.mxu0
    %792 = vmatprep.subr.mxu0 %v153
    %793 = vmatpush1.msra.mxu0 %v152
    %794 = vmatprep.subr.mxu0 %v169
    %795 = vmatpush1.msra.mxu0 %v168
    %796 = vmatprep.subr.mxu0 %v185
    %797 = vmatpush1.msra.mxu0 %v184
    %798 = vmatprep.subr.mxu0 %v201
    %799 = vmatpush1.msra.mxu0 %v200
    %800 = vmatprep.subr.mxu0 %v217
    %801 = vmatpush1.msra.mxu0 %v216
    %802 = vmatprep.subr.mxu0 %v233
    %803 = vmatpush1.msra.mxu0 %v232
    %804 = vmatprep.subr.mxu0 %v249
    %805 = vmatpush1.msra.mxu0 %v248
    %806 = vmatprep.subr.mxu0 %v265
    %807 = vmatpush1.msra.mxu0 %v264
    %808 = vmatprep.subr.mxu0 %v281
    %809 = vmatpush1.msra.mxu0 %v280
    %810 = vmatprep.subr.mxu0 %v297
    %811 = vmatpush1.msra.mxu0 %v296
    %812 = vmatprep.subr.mxu0 %v313
    %813 = vmatpush1.msra.mxu0 %v312
    %814 = vmatprep.subr.mxu0 %v329
    %815 = vmatpush1.msra.mxu0 %v328
    %816 = vmatprep.subr.mxu0 %v345
    %817 = vmatpush1.msra.mxu0 %v344
    %818 = vmatprep.subr.mxu0 %v361
    %819 = vmatpush1.msra.mxu0 %v360
    %820 = vmatprep.subr.mxu0 %v377
    %821 = vmatpush1.msra.mxu0 %v376
    %822 = vmatprep.subr.mxu0 %v393
    %823 = vmatpush1.msra.mxu0 %v392
    %824 = vmatprep.subr.mxu0 0.0
    %825 = vmatpush1.msra.mxu0 0.0
    %826 = vmatprep.subr.mxu0 0.0
    %827 = vmatpush1.msra.mxu0 0.0
    %828 = vmatprep.subr.mxu0 0.0
    %829 = vmatpush1.msra.mxu0 0.0
    %830 = vmatprep.subr.mxu0 0.0
    %831 = vmatpush1.msra.mxu0 0.0
    %832 = vmatprep.subr.mxu0 0.0
    %833 = vmatpush1.msra.mxu0 0.0
    %834 = vmatprep.subr.mxu0 0.0
    %835 = vmatpush1.msra.mxu0 0.0
    %836 = vmatprep.subr.mxu0 0.0
    %837 = vmatpush1.msra.mxu0 0.0
    %838 = vmatprep.subr.mxu0 0.0
    %839 = vmatpush1.msra.mxu0 0.0
    %840 = vmatprep.subr.mxu0 0.0
    %841 = vmatpush1.msra.mxu0 0.0
    %842 = vmatprep.subr.mxu0 0.0
    %843 = vmatpush1.msra.mxu0 0.0
    %844 = vmatprep.subr.mxu0 0.0
    %845 = vmatpush1.msra.mxu0 0.0
    %846 = vmatprep.subr.mxu0 0.0
    %847 = vmatpush1.msra.mxu0 0.0
    %848 = vmatprep.subr.mxu0 0.0
    %849 = vmatpush1.msra.mxu0 0.0
    %850 = vmatprep.subr.mxu0 0.0
    %851 = vmatpush1.msra.mxu0 0.0
    %852 = vmatprep.subr.mxu0 0.0
    %853 = vmatpush1.msra.mxu0 0.0
    %854 = vmatprep.subr.mxu0 0.0
    %855 = vmatpush1.msra.mxu0 0.0
    %856 = vmatprep.mubr.f32.mxu0 0.0
    %857 = vmatmul.mubr.f32.gmra.mrb[0].mxu0 %v142
    %v858 = vpop.f32.mrb[0].mxu0
    %v859 = vadd.f32 %v439, %v858
    %v860 = vpop.f32.mrb[0].mxu0
    %v861 = vadd.f32 %v443, %v860
    %862 = vmatprep.mubr.f32.mxu0 0.0
    %863 = vmatmul.mubr.f32.gmra.mrb[0].mxu0 %v143
    %v864 = vpop.f32.mrb[0].mxu0
    %v865 = vadd.f32 %v439, %v864
    %v866 = vpop.f32.mrb[0].mxu0
    %v867 = vadd.f32 %v443, %v866
    %868 = vdwg.mxu0
    %869 = vmatprep.subr.mxu0 %v155
    %870 = vmatpush1.msra.mxu0 %v154
    %871 = vmatprep.subr.mxu0 %v171
    %872 = vmatpush1.msra.mxu0 %v170
    %873 = vmatprep.subr.mxu0 %v187
    %874 = vmatpush1.msra.mxu0 %v186
    %875 = vmatprep.subr.mxu0 %v203
    %876 = vmatpush1.msra.mxu0 %v202
    %877 = vmatprep.subr.mxu0 %v219
    %878 = vmatpush1.msra.mxu0 %v218
    %879 = vmatprep.subr.mxu0 %v235
    %880 = vmatpush1.msra.mxu0 %v234
    %881 = vmatprep.subr.mxu0 %v251
    %882 = vmatpush1.msra.mxu0 %v250
    %883 = vmatprep.subr.mxu0 %v267
    %884 = vmatpush1.msra.mxu0 %v266
    %885 = vmatprep.subr.mxu0 %v283
    %886 = vmatpush1.msra.mxu0 %v282
    %887 = vmatprep.subr.mxu0 %v299
    %888 = vmatpush1.msra.mxu0 %v298
    %889 = vmatprep.subr.mxu0 %v315
    %890 = vmatpush1.msra.mxu0 %v314
    %891 = vmatprep.subr.mxu0 %v331
    %892 = vmatpush1.msra.mxu0 %v330
    %893 = vmatprep.subr.mxu0 %v347
    %894 = vmatpush1.msra.mxu0 %v346
    %895 = vmatprep.subr.mxu0 %v363
    %896 = vmatpush1.msra.mxu0 %v362
    %897 = vmatprep.subr.mxu0 %v379
    %898 = vmatpush1.msra.mxu0 %v378
    %899 = vmatprep.subr.mxu0 %v395
    %900 = vmatpush1.msra.mxu0 %v394
    %901 = vmatprep.subr.mxu0 0.0
    %902 = vmatpush1.msra.mxu0 0.0
    %903 = vmatprep.subr.mxu0 0.0
    %904 = vmatpush1.msra.mxu0 0.0
    %905 = vmatprep.subr.mxu0 0.0
    %906 = vmatpush1.msra.mxu0 0.0
    %907 = vmatprep.subr.mxu0 0.0
    %908 = vmatpush1.msra.mxu0 0.0
    %909 = vmatprep.subr.mxu0 0.0
    %910 = vmatpush1.msra.mxu0 0.0
    %911 = vmatprep.subr.mxu0 0.0
    %912 = vmatpush1.msra.mxu0 0.0
    %913 = vmatprep.subr.mxu0 0.0
    %914 = vmatpush1.msra.mxu0 0.0
    %915 = vmatprep.subr.mxu0 0.0
    %916 = vmatpush1.msra.mxu0 0.0
    %917 = vmatprep.subr.mxu0 0.0
    %918 = vmatpush1.msra.mxu0 0.0
    %919 = vmatprep.subr.mxu0 0.0
    %920 = vmatpush1.msra.mxu0 0.0
    %921 = vmatprep.subr.mxu0 0.0
    %922 = vmatpush1.msra.mxu0 0.0
    %923 = vmatprep.subr.mxu0 0.0
    %924 = vmatpush1.msra.mxu0 0.0
    %925 = vmatprep.subr.mxu0 0.0
    %926 = vmatpush1.msra.mxu0 0.0
    %927 = vmatprep.subr.mxu0 0.0
    %928 = vmatpush1.msra.mxu0 0.0
    %929 = vmatprep.subr.mxu0 0.0
    %930 = vmatpush1.msra.mxu0 0.0
    %931 = vmatprep.subr.mxu0 0.0
    %932 = vmatpush1.msra.mxu0 0.0
    %933 = vmatprep.mubr.f32.mxu0 0.0
    %934 = vmatmul.mubr.f32.gmra.mrb[0].mxu0 %v142
    %v935 = vpop.f32.mrb[0].mxu0
    %v936 = vadd.f32 %v447, %v935
    %v937 = vpop.f32.mrb[0].mxu0
    %v938 = vadd.f32 %v451, %v937
    %939 = vmatprep.mubr.f32.mxu0 0.0
    %940 = vmatmul.mubr.f32.gmra.mrb[0].mxu0 %v143
    %v941 = vpop.f32.mrb[0].mxu0
    %v942 = vadd.f32 %v447, %v941
    %v943 = vpop.f32.mrb[0].mxu0
    %v944 = vadd.f32 %v451, %v943
    %945 = vdwg.mxu0
    %946 = vmatprep.subr.mxu0 %v157
    %947 = vmatpush1.msra.mxu0 %v156
    %948 = vmatprep.subr.mxu0 %v173
    %949 = vmatpush1.msra.mxu0 %v172
    %950 = vmatprep.subr.mxu0 %v189
    %951 = vmatpush1.msra.mxu0 %v188
    %952 = vmatprep.subr.mxu0 %v205
    %953 = vmatpush1.msra.mxu0 %v204
    %954 = vmatprep.subr.mxu0 %v221
    %955 = vmatpush1.msra.mxu0 %v220
    %956 = vmatprep.subr.mxu0 %v237
    %957 = vmatpush1.msra.mxu0 %v236
    %958 = vmatprep.subr.mxu0 %v253
    %959 = vmatpush1.msra.mxu0 %v252
    %960 = vmatprep.subr.mxu0 %v269
    %961 = vmatpush1.msra.mxu0 %v268
    %962 = vmatprep.subr.mxu0 %v285
    %963 = vmatpush1.msra.mxu0 %v284
    %964 = vmatprep.subr.mxu0 %v301
    %965 = vmatpush1.msra.mxu0 %v300
    %966 = vmatprep.subr.mxu0 %v317
    %967 = vmatpush1.msra.mxu0 %v316
    %968 = vmatprep.subr.mxu0 %v333
    %969 = vmatpush1.msra.mxu0 %v332
    %970 = vmatprep.subr.mxu0 %v349
    %971 = vmatpush1.msra.mxu0 %v348
    %972 = vmatprep.subr.mxu0 %v365
    %973 = vmatpush1.msra.mxu0 %v364
    %974 = vmatprep.subr.mxu0 %v381
    %975 = vmatpush1.msra.mxu0 %v380
    %976 = vmatprep.subr.mxu0 %v397
    %977 = vmatpush1.msra.mxu0 %v396
    %978 = vmatprep.subr.mxu0 0.0
    %979 = vmatpush1.msra.mxu0 0.0
    %980 = vmatprep.subr.mxu0 0.0
    %981 = vmatpush1.msra.mxu0 0.0
    %982 = vmatprep.subr.mxu0 0.0
    %983 = vmatpush1.msra.mxu0 0.0
    %984 = vmatprep.subr.mxu0 0.0
    %985 = vmatpush1.msra.mxu0 0.0
    %986 = vmatprep.subr.mxu0 0.0
    %987 = vmatpush1.msra.mxu0 0.0
    %988 = vmatprep.subr.mxu0 0.0
    %989 = vmatpush1.msra.mxu0 0.0
    %990 = vmatprep.subr.mxu0 0.0
    %991 = vmatpush1.msra.mxu0 0.0
    %992 = vmatprep.subr.mxu0 0.0
    %993 = vmatpush1.msra.mxu0 0.0
    %994 = vmatprep.subr.mxu0 0.0
    %995 = vmatpush1.msra.mxu0 0.0
    %996 = vmatprep.subr.mxu0 0.0
    %997 = vmatpush1.msra.mxu0 0.0
    %998 = vmatprep.subr.mxu0 0.0
    %999 = vmatpush1.msra.mxu0 0.0
    %1000 = vmatprep.subr.mxu0 0.0
    %1001 = vmatpush1.msra.mxu0 0.0
    %1002 = vmatprep.subr.mxu0 0.0
    %1003 = vmatpush1.msra.mxu0 0.0
    %1004 = vmatprep.subr.mxu0 0.0
    %1005 = vmatpush1.msra.mxu0 0.0
    %1006 = vmatprep.subr.mxu0 0.0
    %1007 = vmatpush1.msra.mxu0 0.0
    %1008 = vmatprep.subr.mxu0 0.0
    %1009 = vmatpush1.msra.mxu0 0.0
    %1010 = vmatprep.mubr.f32.mxu0 0.0
    %1011 = vmatmul.mubr.f32.gmra.mrb[0].mxu0 %v142
    %v1012 = vpop.f32.mrb[0].mxu0
    %v1013 = vadd.f32 %v455, %v1012
    %v1014 = vpop.f32.mrb[0].mxu0
    %v1015 = vadd.f32 %v459, %v1014
    %1016 = vmatprep.mubr.f32.mxu0 0.0
    %1017 = vmatmul.mubr.f32.gmra.mrb[0].mxu0 %v143
    %v1018 = vpop.f32.mrb[0].mxu0
    %v1019 = vadd.f32 %v455, %v1018
    %v1020 = vpop.f32.mrb[0].mxu0
    %v1021 = vadd.f32 %v459, %v1020
    %1022 = vdwg.mxu0
    %1023 = vmatprep.subr.mxu0 %v159
    %1024 = vmatpush1.msra.mxu0 %v158
    %1025 = vmatprep.subr.mxu0 %v175
    %1026 = vmatpush1.msra.mxu0 %v174
    %1027 = vmatprep.subr.mxu0 %v191
    %1028 = vmatpush1.msra.mxu0 %v190
    %1029 = vmatprep.subr.mxu0 %v207
    %1030 = vmatpush1.msra.mxu0 %v206
    %1031 = vmatprep.subr.mxu0 %v223
    %1032 = vmatpush1.msra.mxu0 %v222
    %1033 = vmatprep.subr.mxu0 %v239
    %1034 = vmatpush1.msra.mxu0 %v238
    %1035 = vmatprep.subr.mxu0 %v255
    %1036 = vmatpush1.msra.mxu0 %v254
    %1037 = vmatprep.subr.mxu0 %v271
    %1038 = vmatpush1.msra.mxu0 %v270
    %1039 = vmatprep.subr.mxu0 %v287
    %1040 = vmatpush1.msra.mxu0 %v286
    %1041 = vmatprep.subr.mxu0 %v303
    %1042 = vmatpush1.msra.mxu0 %v302
    %1043 = vmatprep.subr.mxu0 %v319
    %1044 = vmatpush1.msra.mxu0 %v318
    %1045 = vmatprep.subr.mxu0 %v335
    %1046 = vmatpush1.msra.mxu0 %v334
    %1047 = vmatprep.subr.mxu0 %v351
    %1048 = vmatpush1.msra.mxu0 %v350
    %1049 = vmatprep.subr.mxu0 %v367
    %1050 = vmatpush1.msra.mxu0 %v366
    %1051 = vmatprep.subr.mxu0 %v383
    %1052 = vmatpush1.msra.mxu0 %v382
    %1053 = vmatprep.subr.mxu0 %v399
    %1054 = vmatpush1.msra.mxu0 %v398
    %1055 = vmatprep.subr.mxu0 0.0
    %1056 = vmatpush1.msra.mxu0 0.0
    %1057 = vmatprep.subr.mxu0 0.0
    %1058 = vmatpush1.msra.mxu0 0.0
    %1059 = vmatprep.subr.mxu0 0.0
    %1060 = vmatpush1.msra.mxu0 0.0
    %1061 = vmatprep.subr.mxu0 0.0
    %1062 = vmatpush1.msra.mxu0 0.0
    %1063 = vmatprep.subr.mxu0 0.0
    %1064 = vmatpush1.msra.mxu0 0.0
    %1065 = vmatprep.subr.mxu0 0.0
    %1066 = vmatpush1.msra.mxu0 0.0
    %1067 = vmatprep.subr.mxu0 0.0
    %1068 = vmatpush1.msra.mxu0 0.0
    %1069 = vmatprep.subr.mxu0 0.0
    %1070 = vmatpush1.msra.mxu0 0.0
    %1071 = vmatprep.subr.mxu0 0.0
    %1072 = vmatpush1.msra.mxu0 0.0
    %1073 = vmatprep.subr.mxu0 0.0
    %1074 = vmatpush1.msra.mxu0 0.0
    %1075 = vmatprep.subr.mxu0 0.0
    %1076 = vmatpush1.msra.mxu0 0.0
    %1077 = vmatprep.subr.mxu0 0.0
    %1078 = vmatpush1.msra.mxu0 0.0
    %1079 = vmatprep.subr.mxu0 0.0
    %1080 = vmatpush1.msra.mxu0 0.0
    %1081 = vmatprep.subr.mxu0 0.0
    %1082 = vmatpush1.msra.mxu0 0.0
    %1083 = vmatprep.subr.mxu0 0.0
    %1084 = vmatpush1.msra.mxu0 0.0
    %1085 = vmatprep.subr.mxu0 0.0
    %1086 = vmatpush1.msra.mxu0 0.0
    %1087 = vmatprep.mubr.f32.mxu0 0.0
    %1088 = vmatmul.mubr.f32.gmra.mrb[0].mxu0 %v142
    %v1089 = vpop.f32.mrb[0].mxu0
    %v1090 = vadd.f32 %v463, %v1089
    %v1091 = vpop.f32.mrb[0].mxu0
    %v1092 = vadd.f32 %v467, %v1091
    %1093 = vmatprep.mubr.f32.mxu0 0.0
    %1094 = vmatmul.mubr.f32.gmra.mrb[0].mxu0 %v143
    %v1095 = vpop.f32.mrb[0].mxu0
    %v1096 = vadd.f32 %v463, %v1095
    %v1097 = vpop.f32.mrb[0].mxu0
    %v1098 = vadd.f32 %v467, %v1097
    %1099 = vdwg.mxu0
    %vm1100 = vcmp.gt.f32.partialorder %v551, 0.0
    %vm1101 = vcmp.gt.f32.partialorder %v553, 0.0
    %vm1102 = vcmp.gt.f32.partialorder %v628, 0.0
    %vm1103 = vcmp.gt.f32.partialorder %v630, 0.0
    %vm1104 = vcmp.gt.f32.partialorder %v705, 0.0
    %vm1105 = vcmp.gt.f32.partialorder %v707, 0.0
    %vm1106 = vcmp.gt.f32.partialorder %v782, 0.0
    %vm1107 = vcmp.gt.f32.partialorder %v784, 0.0
    %vm1108 = vcmp.gt.f32.partialorder %v859, 0.0
    %vm1109 = vcmp.gt.f32.partialorder %v861, 0.0
    %vm1110 = vcmp.gt.f32.partialorder %v936, 0.0
    %vm1111 = vcmp.gt.f32.partialorder %v938, 0.0
    %vm1112 = vcmp.gt.f32.partialorder %v1013, 0.0
    %vm1113 = vcmp.gt.f32.partialorder %v1015, 0.0
    %vm1114 = vcmp.gt.f32.partialorder %v1090, 0.0
    %vm1115 = vcmp.gt.f32.partialorder %v1092, 0.0
    %vm1116 = vcmp.gt.f32.partialorder %v557, 0.0
    %vm1117 = vcmp.gt.f32.partialorder %v559, 0.0
    %vm1118 = vcmp.gt.f32.partialorder %v634, 0.0
    %vm1119 = vcmp.gt.f32.partialorder %v636, 0.0
    %vm1120 = vcmp.gt.f32.partialorder %v711, 0.0
    %vm1121 = vcmp.gt.f32.partialorder %v713, 0.0
    %vm1122 = vcmp.gt.f32.partialorder %v788, 0.0
    %vm1123 = vcmp.gt.f32.partialorder %v790, 0.0
    %vm1124 = vcmp.gt.f32.partialorder %v865, 0.0
    %vm1125 = vcmp.gt.f32.partialorder %v867, 0.0
    %vm1126 = vcmp.gt.f32.partialorder %v942, 0.0
    %vm1127 = vcmp.gt.f32.partialorder %v944, 0.0
    %vm1128 = vcmp.gt.f32.partialorder %v1019, 0.0
    %vm1129 = vcmp.gt.f32.partialorder %v1021, 0.0
    %vm1130 = vcmp.gt.f32.partialorder %v1096, 0.0
    %vm1131 = vcmp.gt.f32.partialorder %v1098, 0.0
    %v1132 = vmin.f32 %v551, 0.0
    %v1133 = vmin.f32 %v553, 0.0
    %v1134 = vmin.f32 %v628, 0.0
    %v1135 = vmin.f32 %v630, 0.0
    %v1136 = vmin.f32 %v705, 0.0
    %v1137 = vmin.f32 %v707, 0.0
    %v1138 = vmin.f32 %v782, 0.0
    %v1139 = vmin.f32 %v784, 0.0
    %v1140 = vmin.f32 %v859, 0.0
    %v1141 = vmin.f32 %v861, 0.0
    %v1142 = vmin.f32 %v936, 0.0
    %v1143 = vmin.f32 %v938, 0.0
    %v1144 = vmin.f32 %v1013, 0.0
    %v1145 = vmin.f32 %v1015, 0.0
    %v1146 = vmin.f32 %v1090, 0.0
    %v1147 = vmin.f32 %v1092, 0.0
    %v1148 = vmin.f32 %v557, 0.0
    %v1149 = vmin.f32 %v559, 0.0
    %v1150 = vmin.f32 %v634, 0.0
    %v1151 = vmin.f32 %v636, 0.0
    %v1152 = vmin.f32 %v711, 0.0
    %v1153 = vmin.f32 %v713, 0.0
    %v1154 = vmin.f32 %v788, 0.0
    %v1155 = vmin.f32 %v790, 0.0
    %v1156 = vmin.f32 %v865, 0.0
    %v1157 = vmin.f32 %v867, 0.0
    %v1158 = vmin.f32 %v942, 0.0
    %v1159 = vmin.f32 %v944, 0.0
    %v1160 = vmin.f32 %v1019, 0.0
    %v1161 = vmin.f32 %v1021, 0.0
    %v1162 = vmin.f32 %v1096, 0.0
    %v1163 = vmin.f32 %v1098, 0.0
    %v1164 = vmul.f32 %v1132, 1.442695
    %v1165 = vpow.pop %v1164
    %v1166 = vmul.f32 %v1133, 1.442695
    %v1167 = vpow.pop %v1166
    %v1168 = vmul.f32 %v1134, 1.442695
    %v1169 = vpow.pop %v1168
    %v1170 = vmul.f32 %v1135, 1.442695
    %v1171 = vpow.pop %v1170
    %v1172 = vmul.f32 %v1136, 1.442695
    %v1173 = vpow.pop %v1172
    %v1174 = vmul.f32 %v1137, 1.442695
    %v1175 = vpow.pop %v1174
    %v1176 = vmul.f32 %v1138, 1.442695
    %v1177 = vpow.pop %v1176
    %v1178 = vmul.f32 %v1139, 1.442695
    %v1179 = vpow.pop %v1178
    %v1180 = vmul.f32 %v1140, 1.442695
    %v1181 = vpow.pop %v1180
    %v1182 = vmul.f32 %v1141, 1.442695
    %v1183 = vpow.pop %v1182
    %v1184 = vmul.f32 %v1142, 1.442695
    %v1185 = vpow.pop %v1184
    %v1186 = vmul.f32 %v1143, 1.442695
    %v1187 = vpow.pop %v1186
    %v1188 = vmul.f32 %v1144, 1.442695
    %v1189 = vpow.pop %v1188
    %v1190 = vmul.f32 %v1145, 1.442695
    %v1191 = vpow.pop %v1190
    %v1192 = vmul.f32 %v1146, 1.442695
    %v1193 = vpow.pop %v1192
    %v1194 = vmul.f32 %v1147, 1.442695
    %v1195 = vpow.pop %v1194
    %v1196 = vmul.f32 %v1148, 1.442695
    %v1197 = vpow.pop %v1196
    %v1198 = vmul.f32 %v1149, 1.442695
    %v1199 = vpow.pop %v1198
    %v1200 = vmul.f32 %v1150, 1.442695
    %v1201 = vpow.pop %v1200
    %v1202 = vmul.f32 %v1151, 1.442695
    %v1203 = vpow.pop %v1202
    %v1204 = vmul.f32 %v1152, 1.442695
    %v1205 = vpow.pop %v1204
    %v1206 = vmul.f32 %v1153, 1.442695
    %v1207 = vpow.pop %v1206
    %v1208 = vmul.f32 %v1154, 1.442695
    %v1209 = vpow.pop %v1208
    %v1210 = vmul.f32 %v1155, 1.442695
    %v1211 = vpow.pop %v1210
    %v1212 = vmul.f32 %v1156, 1.442695
    %v1213 = vpow.pop %v1212
    %v1214 = vmul.f32 %v1157, 1.442695
    %v1215 = vpow.pop %v1214
    %v1216 = vmul.f32 %v1158, 1.442695
    %v1217 = vpow.pop %v1216
    %v1218 = vmul.f32 %v1159, 1.442695
    %v1219 = vpow.pop %v1218
    %v1220 = vmul.f32 %v1160, 1.442695
    %v1221 = vpow.pop %v1220
    %v1222 = vmul.f32 %v1161, 1.442695
    %v1223 = vpow.pop %v1222
    %v1224 = vmul.f32 %v1162, 1.442695
    %v1225 = vpow.pop %v1224
    %v1226 = vmul.f32 %v1163, 1.442695
    %v1227 = vpow.pop %v1226
    %v1228 = vsub.f32 %v1165, 1.0
    %v1229 = vsub.f32 %v1167, 1.0
    %v1230 = vsub.f32 %v1169, 1.0
    %v1231 = vsub.f32 %v1171, 1.0
    %v1232 = vsub.f32 %v1173, 1.0
    %v1233 = vsub.f32 %v1175, 1.0
    %v1234 = vsub.f32 %v1177, 1.0
    %v1235 = vsub.f32 %v1179, 1.0
    %v1236 = vsub.f32 %v1181, 1.0
    %v1237 = vsub.f32 %v1183, 1.0
    %v1238 = vsub.f32 %v1185, 1.0
    %v1239 = vsub.f32 %v1187, 1.0
    %v1240 = vsub.f32 %v1189, 1.0
    %v1241 = vsub.f32 %v1191, 1.0
    %v1242 = vsub.f32 %v1193, 1.0
    %v1243 = vsub.f32 %v1195, 1.0
    %v1244 = vsub.f32 %v1197, 1.0
    %v1245 = vsub.f32 %v1199, 1.0
    %v1246 = vsub.f32 %v1201, 1.0
    %v1247 = vsub.f32 %v1203, 1.0
    %v1248 = vsub.f32 %v1205, 1.0
    %v1249 = vsub.f32 %v1207, 1.0
    %v1250 = vsub.f32 %v1209, 1.0
    %v1251 = vsub.f32 %v1211, 1.0
    %v1252 = vsub.f32 %v1213, 1.0
    %v1253 = vsub.f32 %v1215, 1.0
    %v1254 = vsub.f32 %v1217, 1.0
    %v1255 = vsub.f32 %v1219, 1.0
    %v1256 = vsub.f32 %v1221, 1.0
    %v1257 = vsub.f32 %v1223, 1.0
    %v1258 = vsub.f32 %v1225, 1.0
    %v1259 = vsub.f32 %v1227, 1.0
    %v1260 = vsel %vm1100, %v551, %v1228
    %v1261 = vsel %vm1101, %v553, %v1229
    %v1262 = vsel %vm1102, %v628, %v1230
    %v1263 = vsel %vm1103, %v630, %v1231
    %v1264 = vsel %vm1104, %v705, %v1232
    %v1265 = vsel %vm1105, %v707, %v1233
    %v1266 = vsel %vm1106, %v782, %v1234
    %v1267 = vsel %vm1107, %v784, %v1235
    %v1268 = vsel %vm1108, %v859, %v1236
    %v1269 = vsel %vm1109, %v861, %v1237
    %v1270 = vsel %vm1110, %v936, %v1238
    %v1271 = vsel %vm1111, %v938, %v1239
    %v1272 = vsel %vm1112, %v1013, %v1240
    %v1273 = vsel %vm1113, %v1015, %v1241
    %v1274 = vsel %vm1114, %v1090, %v1242
    %v1275 = vsel %vm1115, %v1092, %v1243
    %v1276 = vsel %vm1116, %v557, %v1244
    %v1277 = vsel %vm1117, %v559, %v1245
    %v1278 = vsel %vm1118, %v634, %v1246
    %v1279 = vsel %vm1119, %v636, %v1247
    %v1280 = vsel %vm1120, %v711, %v1248
    %v1281 = vsel %vm1121, %v713, %v1249
    %v1282 = vsel %vm1122, %v788, %v1250
    %v1283 = vsel %vm1123, %v790, %v1251
    %v1284 = vsel %vm1124, %v865, %v1252
    %v1285 = vsel %vm1125, %v867, %v1253
    %v1286 = vsel %vm1126, %v942, %v1254
    %v1287 = vsel %vm1127, %v944, %v1255
    %v1288 = vsel %vm1128, %v1019, %v1256
    %v1289 = vsel %vm1129, %v1021, %v1257
    %v1290 = vsel %vm1130, %v1096, %v1258
    %v1291 = vsel %vm1131, %v1098, %v1259
    %v1292 = vld [vmem:[#allocation8] sm:$0xff]
    %v1293 = vld [vmem:[#allocation8 + $0x8] sm:$0xff]
    %v1294 = vld [vmem:[#allocation8 + $0x10] sm:$0xff]
    %v1295 = vld [vmem:[#allocation8 + $0x18] sm:$0xff]
    %v1296 = vld [vmem:[#allocation8 + $0x20] sm:$0xff]
    %v1297 = vld [vmem:[#allocation8 + $0x28] sm:$0xff]
    %v1298 = vld [vmem:[#allocation8 + $0x30] sm:$0xff]
    %v1299 = vld [vmem:[#allocation8 + $0x38] sm:$0xff]
    %v1300 = vld [vmem:[#allocation8 + $0x40] sm:$0xff]
    %v1301 = vld [vmem:[#allocation8 + $0x48] sm:$0xff]
    %v1302 = vld [vmem:[#allocation8 + $0x50] sm:$0xff]
    %v1303 = vld [vmem:[#allocation8 + $0x58] sm:$0xff]
    %v1304 = vld [vmem:[#allocation8 + $0x60] sm:$0xff]
    %v1305 = vld [vmem:[#allocation8 + $0x68] sm:$0xff]
    %v1306 = vld [vmem:[#allocation8 + $0x70] sm:$0xff]
    %v1307 = vld [vmem:[#allocation8 + $0x78] sm:$0xff]
    %v1308 = vld [vmem:[#allocation8 + $0x80] sm:$0xff]
    %v1309 = vld [vmem:[#allocation8 + $0x88] sm:$0xff]
    %v1310 = vld [vmem:[#allocation8 + $0x90] sm:$0xff]
    %v1311 = vld [vmem:[#allocation8 + $0x98] sm:$0xff]
    %v1312 = vld [vmem:[#allocation8 + $0xa0] sm:$0xff]
    %v1313 = vld [vmem:[#allocation8 + $0xa8] sm:$0xff]
    %v1314 = vld [vmem:[#allocation8 + $0xb0] sm:$0xff]
    %v1315 = vld [vmem:[#allocation8 + $0xb8] sm:$0xff]
    %v1316 = vld [vmem:[#allocation8 + $0xc0] sm:$0xff]
    %v1317 = vld [vmem:[#allocation8 + $0xc8] sm:$0xff]
    %v1318 = vld [vmem:[#allocation8 + $0xd0] sm:$0xff]
    %v1319 = vld [vmem:[#allocation8 + $0xd8] sm:$0xff]
    %v1320 = vld [vmem:[#allocation8 + $0xe0] sm:$0xff]
    %v1321 = vld [vmem:[#allocation8 + $0xe8] sm:$0xff]
    %v1322 = vld [vmem:[#allocation8 + $0xf0] sm:$0xff]
    %v1323 = vld [vmem:[#allocation8 + $0xf8] sm:$0xff]
    %v1324 = vld [vmem:[#allocation8 + $0x100] sm:$0xff]
    %v1325 = vld [vmem:[#allocation8 + $0x108] sm:$0xff]
    %v1326 = vld [vmem:[#allocation8 + $0x110] sm:$0xff]
    %v1327 = vld [vmem:[#allocation8 + $0x118] sm:$0xff]
    %v1328 = vld [vmem:[#allocation8 + $0x120] sm:$0xff]
    %v1329 = vld [vmem:[#allocation8 + $0x128] sm:$0xff]
    %v1330 = vld [vmem:[#allocation8 + $0x130] sm:$0xff]
    %v1331 = vld [vmem:[#allocation8 + $0x138] sm:$0xff]
    %v1332 = vld [vmem:[#allocation8 + $0x140] sm:$0xff]
    %v1333 = vld [vmem:[#allocation8 + $0x148] sm:$0xff]
    %v1334 = vld [vmem:[#allocation8 + $0x150] sm:$0xff]
    %v1335 = vld [vmem:[#allocation8 + $0x158] sm:$0xff]
    %v1336 = vld [vmem:[#allocation8 + $0x160] sm:$0xff]
    %v1337 = vld [vmem:[#allocation8 + $0x168] sm:$0xff]
    %v1338 = vld [vmem:[#allocation8 + $0x170] sm:$0xff]
    %v1339 = vld [vmem:[#allocation8 + $0x178] sm:$0xff]
    %v1340 = vld [vmem:[#allocation8 + $0x180] sm:$0xff]
    %v1341 = vld [vmem:[#allocation8 + $0x188] sm:$0xff]
    %v1342 = vld [vmem:[#allocation8 + $0x190] sm:$0xff]
    %v1343 = vld [vmem:[#allocation8 + $0x198] sm:$0xff]
    %v1344 = vld [vmem:[#allocation8 + $0x1a0] sm:$0xff]
    %v1345 = vld [vmem:[#allocation8 + $0x1a8] sm:$0xff]
    %v1346 = vld [vmem:[#allocation8 + $0x1b0] sm:$0xff]
    %v1347 = vld [vmem:[#allocation8 + $0x1b8] sm:$0xff]
    %v1348 = vld [vmem:[#allocation8 + $0x1c0] sm:$0xff]
    %v1349 = vld [vmem:[#allocation8 + $0x1c8] sm:$0xff]
    %v1350 = vld [vmem:[#allocation8 + $0x1d0] sm:$0xff]
    %v1351 = vld [vmem:[#allocation8 + $0x1d8] sm:$0xff]
    %v1352 = vld [vmem:[#allocation8 + $0x1e0] sm:$0xff]
    %v1353 = vld [vmem:[#allocation8 + $0x1e8] sm:$0xff]
    %v1354 = vld [vmem:[#allocation8 + $0x1f0] sm:$0xff]
    %v1355 = vld [vmem:[#allocation8 + $0x1f8] sm:$0xff]
    %v1356 = vld [vmem:[#allocation8 + $0x200] sm:$0xff]
    %v1357 = vld [vmem:[#allocation8 + $0x208] sm:$0xff]
    %v1358 = vld [vmem:[#allocation8 + $0x210] sm:$0xff]
    %v1359 = vld [vmem:[#allocation8 + $0x218] sm:$0xff]
    %v1360 = vld [vmem:[#allocation8 + $0x220] sm:$0xff]
    %v1361 = vld [vmem:[#allocation8 + $0x228] sm:$0xff]
    %v1362 = vld [vmem:[#allocation8 + $0x230] sm:$0xff]
    %v1363 = vld [vmem:[#allocation8 + $0x238] sm:$0xff]
    %v1364 = vld [vmem:[#allocation8 + $0x240] sm:$0xff]
    %v1365 = vld [vmem:[#allocation8 + $0x248] sm:$0xff]
    %v1366 = vld [vmem:[#allocation8 + $0x250] sm:$0xff]
    %v1367 = vld [vmem:[#allocation8 + $0x258] sm:$0xff]
    %v1368 = vld [vmem:[#allocation8 + $0x260] sm:$0xff]
    %v1369 = vld [vmem:[#allocation8 + $0x268] sm:$0xff]
    %v1370 = vld [vmem:[#allocation8 + $0x270] sm:$0xff]
    %v1371 = vld [vmem:[#allocation8 + $0x278] sm:$0xff]
    %v1372 = vld [vmem:[#allocation8 + $0x280] sm:$0xff]
    %v1373 = vld [vmem:[#allocation8 + $0x288] sm:$0xff]
    %v1374 = vld [vmem:[#allocation8 + $0x290] sm:$0xff]
    %v1375 = vld [vmem:[#allocation8 + $0x298] sm:$0xff]
    %v1376 = vld [vmem:[#allocation8 + $0x2a0] sm:$0xff]
    %v1377 = vld [vmem:[#allocation8 + $0x2a8] sm:$0xff]
    %v1378 = vld [vmem:[#allocation8 + $0x2b0] sm:$0xff]
    %v1379 = vld [vmem:[#allocation8 + $0x2b8] sm:$0xff]
    %v1380 = vld [vmem:[#allocation8 + $0x2c0] sm:$0xff]
    %v1381 = vld [vmem:[#allocation8 + $0x2c8] sm:$0xff]
    %v1382 = vld [vmem:[#allocation8 + $0x2d0] sm:$0xff]
    %v1383 = vld [vmem:[#allocation8 + $0x2d8] sm:$0xff]
    %v1384 = vld [vmem:[#allocation8 + $0x2e0] sm:$0xff]
    %v1385 = vld [vmem:[#allocation8 + $0x2e8] sm:$0xff]
    %v1386 = vld [vmem:[#allocation8 + $0x2f0] sm:$0xff]
    %v1387 = vld [vmem:[#allocation8 + $0x2f8] sm:$0xff]
    %v1388 = vld [vmem:[#allocation8 + $0x300] sm:$0xff]
    %v1389 = vld [vmem:[#allocation8 + $0x308] sm:$0xff]
    %v1390 = vld [vmem:[#allocation8 + $0x310] sm:$0xff]
    %v1391 = vld [vmem:[#allocation8 + $0x318] sm:$0xff]
    %v1392 = vld [vmem:[#allocation8 + $0x320] sm:$0xff]
    %v1393 = vld [vmem:[#allocation8 + $0x328] sm:$0xff]
    %v1394 = vld [vmem:[#allocation8 + $0x330] sm:$0xff]
    %v1395 = vld [vmem:[#allocation8 + $0x338] sm:$0xff]
    %v1396 = vld [vmem:[#allocation8 + $0x340] sm:$0xff]
    %v1397 = vld [vmem:[#allocation8 + $0x348] sm:$0xff]
    %v1398 = vld [vmem:[#allocation8 + $0x350] sm:$0xff]
    %v1399 = vld [vmem:[#allocation8 + $0x358] sm:$0xff]
    %v1400 = vld [vmem:[#allocation8 + $0x360] sm:$0xff]
    %v1401 = vld [vmem:[#allocation8 + $0x368] sm:$0xff]
    %v1402 = vld [vmem:[#allocation8 + $0x370] sm:$0xff]
    %v1403 = vld [vmem:[#allocation8 + $0x378] sm:$0xff]
    %v1404 = vld [vmem:[#allocation8 + $0x380] sm:$0xff]
    %v1405 = vld [vmem:[#allocation8 + $0x388] sm:$0xff]
    %v1406 = vld [vmem:[#allocation8 + $0x390] sm:$0xff]
    %v1407 = vld [vmem:[#allocation8 + $0x398] sm:$0xff]
    %v1408 = vld [vmem:[#allocation8 + $0x3a0] sm:$0xff]
    %v1409 = vld [vmem:[#allocation8 + $0x3a8] sm:$0xff]
    %v1410 = vld [vmem:[#allocation8 + $0x3b0] sm:$0xff]
    %v1411 = vld [vmem:[#allocation8 + $0x3b8] sm:$0xff]
    %v1412 = vld [vmem:[#allocation8 + $0x3c0] sm:$0xff]
    %v1413 = vld [vmem:[#allocation8 + $0x3c8] sm:$0xff]
    %v1414 = vld [vmem:[#allocation8 + $0x3d0] sm:$0xff]
    %v1415 = vld [vmem:[#allocation8 + $0x3d8] sm:$0xff]
    %v1416 = vld [vmem:[#allocation8 + $0x3e0] sm:$0xff]
    %v1417 = vld [vmem:[#allocation8 + $0x3e8] sm:$0xff]
    %v1418 = vld [vmem:[#allocation8 + $0x3f0] sm:$0xff]
    %v1419 = vld [vmem:[#allocation8 + $0x3f8] sm:$0xff]
    %v1420 = vld [vmem:[#allocation8 + $0x400] sm:$0xff]
    %v1421 = vld [vmem:[#allocation8 + $0x408] sm:$0xff]
    %v1422 = vld [vmem:[#allocation8 + $0x410] sm:$0xff]
    %v1423 = vld [vmem:[#allocation8 + $0x418] sm:$0xff]
    %v1424 = vld [vmem:[#allocation8 + $0x420] sm:$0xff]
    %v1425 = vld [vmem:[#allocation8 + $0x428] sm:$0xff]
    %v1426 = vld [vmem:[#allocation8 + $0x430] sm:$0xff]
    %v1427 = vld [vmem:[#allocation8 + $0x438] sm:$0xff]
    %v1428 = vld [vmem:[#allocation8 + $0x440] sm:$0xff]
    %v1429 = vld [vmem:[#allocation8 + $0x448] sm:$0xff]
    %v1430 = vld [vmem:[#allocation8 + $0x450] sm:$0xff]
    %v1431 = vld [vmem:[#allocation8 + $0x458] sm:$0xff]
    %v1432 = vld [vmem:[#allocation8 + $0x460] sm:$0xff]
    %v1433 = vld [vmem:[#allocation8 + $0x468] sm:$0xff]
    %v1434 = vld [vmem:[#allocation8 + $0x470] sm:$0xff]
    %v1435 = vld [vmem:[#allocation8 + $0x478] sm:$0xff]
    %v1436 = vld [vmem:[#allocation8 + $0x480] sm:$0xff]
    %v1437 = vld [vmem:[#allocation8 + $0x488] sm:$0xff]
    %v1438 = vld [vmem:[#allocation8 + $0x490] sm:$0xff]
    %v1439 = vld [vmem:[#allocation8 + $0x498] sm:$0xff]
    %v1440 = vld [vmem:[#allocation8 + $0x4a0] sm:$0xff]
    %v1441 = vld [vmem:[#allocation8 + $0x4a8] sm:$0xff]
    %v1442 = vld [vmem:[#allocation8 + $0x4b0] sm:$0xff]
    %v1443 = vld [vmem:[#allocation8 + $0x4b8] sm:$0xff]
    %v1444 = vld [vmem:[#allocation8 + $0x4c0] sm:$0xff]
    %v1445 = vld [vmem:[#allocation8 + $0x4c8] sm:$0xff]
    %v1446 = vld [vmem:[#allocation8 + $0x4d0] sm:$0xff]
    %v1447 = vld [vmem:[#allocation8 + $0x4d8] sm:$0xff]
    %v1448 = vld [vmem:[#allocation8 + $0x4e0] sm:$0xff]
    %v1449 = vld [vmem:[#allocation8 + $0x4e8] sm:$0xff]
    %v1450 = vld [vmem:[#allocation8 + $0x4f0] sm:$0xff]
    %v1451 = vld [vmem:[#allocation8 + $0x4f8] sm:$0xff]
    %v1452 = vld [vmem:[#allocation8 + $0x500] sm:$0xff]
    %v1453 = vld [vmem:[#allocation8 + $0x508] sm:$0xff]
    %v1454 = vld [vmem:[#allocation8 + $0x510] sm:$0xff]
    %v1455 = vld [vmem:[#allocation8 + $0x518] sm:$0xff]
    %v1456 = vld [vmem:[#allocation8 + $0x520] sm:$0xff]
    %v1457 = vld [vmem:[#allocation8 + $0x528] sm:$0xff]
    %v1458 = vld [vmem:[#allocation8 + $0x530] sm:$0xff]
    %v1459 = vld [vmem:[#allocation8 + $0x538] sm:$0xff]
    %v1460 = vld [vmem:[#allocation8 + $0x540] sm:$0xff]
    %v1461 = vld [vmem:[#allocation8 + $0x548] sm:$0xff]
    %v1462 = vld [vmem:[#allocation8 + $0x550] sm:$0xff]
    %v1463 = vld [vmem:[#allocation8 + $0x558] sm:$0xff]
    %v1464 = vld [vmem:[#allocation8 + $0x560] sm:$0xff]
    %v1465 = vld [vmem:[#allocation8 + $0x568] sm:$0xff]
    %v1466 = vld [vmem:[#allocation8 + $0x570] sm:$0xff]
    %v1467 = vld [vmem:[#allocation8 + $0x578] sm:$0xff]
    %v1468 = vld [vmem:[#allocation8 + $0x580] sm:$0xff]
    %v1469 = vld [vmem:[#allocation8 + $0x588] sm:$0xff]
    %v1470 = vld [vmem:[#allocation8 + $0x590] sm:$0xff]
    %v1471 = vld [vmem:[#allocation8 + $0x598] sm:$0xff]
    %v1472 = vld [vmem:[#allocation8 + $0x5a0] sm:$0xff]
    %v1473 = vld [vmem:[#allocation8 + $0x5a8] sm:$0xff]
    %v1474 = vld [vmem:[#allocation8 + $0x5b0] sm:$0xff]
    %v1475 = vld [vmem:[#allocation8 + $0x5b8] sm:$0xff]
    %v1476 = vld [vmem:[#allocation8 + $0x5c0] sm:$0xff]
    %v1477 = vld [vmem:[#allocation8 + $0x5c8] sm:$0xff]
    %v1478 = vld [vmem:[#allocation8 + $0x5d0] sm:$0xff]
    %v1479 = vld [vmem:[#allocation8 + $0x5d8] sm:$0xff]
    %v1480 = vld [vmem:[#allocation8 + $0x5e0] sm:$0xff]
    %v1481 = vld [vmem:[#allocation8 + $0x5e8] sm:$0xff]
    %v1482 = vld [vmem:[#allocation8 + $0x5f0] sm:$0xff]
    %v1483 = vld [vmem:[#allocation8 + $0x5f8] sm:$0xff]
    %v1484 = vld [vmem:[#allocation8 + $0x600] sm:$0xff]
    %v1485 = vld [vmem:[#allocation8 + $0x608] sm:$0xff]
    %v1486 = vld [vmem:[#allocation8 + $0x610] sm:$0xff]
    %v1487 = vld [vmem:[#allocation8 + $0x618] sm:$0xff]
    %v1488 = vld [vmem:[#allocation8 + $0x620] sm:$0xff]
    %v1489 = vld [vmem:[#allocation8 + $0x628] sm:$0xff]
    %v1490 = vld [vmem:[#allocation8 + $0x630] sm:$0xff]
    %v1491 = vld [vmem:[#allocation8 + $0x638] sm:$0xff]
    %v1492 = vld [vmem:[#allocation8 + $0x640] sm:$0xff]
    %v1493 = vld [vmem:[#allocation8 + $0x648] sm:$0xff]
    %v1494 = vld [vmem:[#allocation8 + $0x650] sm:$0xff]
    %v1495 = vld [vmem:[#allocation8 + $0x658] sm:$0xff]
    %v1496 = vld [vmem:[#allocation8 + $0x660] sm:$0xff]
    %v1497 = vld [vmem:[#allocation8 + $0x668] sm:$0xff]
    %v1498 = vld [vmem:[#allocation8 + $0x670] sm:$0xff]
    %v1499 = vld [vmem:[#allocation8 + $0x678] sm:$0xff]
    %v1500 = vld [vmem:[#allocation8 + $0x680] sm:$0xff]
    %v1501 = vld [vmem:[#allocation8 + $0x688] sm:$0xff]
    %v1502 = vld [vmem:[#allocation8 + $0x690] sm:$0xff]
    %v1503 = vld [vmem:[#allocation8 + $0x698] sm:$0xff]
    %v1504 = vld [vmem:[#allocation8 + $0x6a0] sm:$0xff]
    %v1505 = vld [vmem:[#allocation8 + $0x6a8] sm:$0xff]
    %v1506 = vld [vmem:[#allocation8 + $0x6b0] sm:$0xff]
    %v1507 = vld [vmem:[#allocation8 + $0x6b8] sm:$0xff]
    %v1508 = vld [vmem:[#allocation8 + $0x6c0] sm:$0xff]
    %v1509 = vld [vmem:[#allocation8 + $0x6c8] sm:$0xff]
    %v1510 = vld [vmem:[#allocation8 + $0x6d0] sm:$0xff]
    %v1511 = vld [vmem:[#allocation8 + $0x6d8] sm:$0xff]
    %v1512 = vld [vmem:[#allocation8 + $0x6e0] sm:$0xff]
    %v1513 = vld [vmem:[#allocation8 + $0x6e8] sm:$0xff]
    %v1514 = vld [vmem:[#allocation8 + $0x6f0] sm:$0xff]
    %v1515 = vld [vmem:[#allocation8 + $0x6f8] sm:$0xff]
    %v1516 = vld [vmem:[#allocation8 + $0x700] sm:$0xff]
    %v1517 = vld [vmem:[#allocation8 + $0x708] sm:$0xff]
    %v1518 = vld [vmem:[#allocation8 + $0x710] sm:$0xff]
    %v1519 = vld [vmem:[#allocation8 + $0x718] sm:$0xff]
    %v1520 = vld [vmem:[#allocation8 + $0x720] sm:$0xff]
    %v1521 = vld [vmem:[#allocation8 + $0x728] sm:$0xff]
    %v1522 = vld [vmem:[#allocation8 + $0x730] sm:$0xff]
    %v1523 = vld [vmem:[#allocation8 + $0x738] sm:$0xff]
    %v1524 = vld [vmem:[#allocation8 + $0x740] sm:$0xff]
    %v1525 = vld [vmem:[#allocation8 + $0x748] sm:$0xff]
    %v1526 = vld [vmem:[#allocation8 + $0x750] sm:$0xff]
    %v1527 = vld [vmem:[#allocation8 + $0x758] sm:$0xff]
    %v1528 = vld [vmem:[#allocation8 + $0x760] sm:$0xff]
    %v1529 = vld [vmem:[#allocation8 + $0x768] sm:$0xff]
    %v1530 = vld [vmem:[#allocation8 + $0x770] sm:$0xff]
    %v1531 = vld [vmem:[#allocation8 + $0x778] sm:$0xff]
    %v1532 = vld [vmem:[#allocation8 + $0x780] sm:$0xff]
    %v1533 = vld [vmem:[#allocation8 + $0x788] sm:$0xff]
    %v1534 = vld [vmem:[#allocation8 + $0x790] sm:$0xff]
    %v1535 = vld [vmem:[#allocation8 + $0x798] sm:$0xff]
    %v1536 = vld [vmem:[#allocation8 + $0x7a0] sm:$0xff]
    %v1537 = vld [vmem:[#allocation8 + $0x7a8] sm:$0xff]
    %v1538 = vld [vmem:[#allocation8 + $0x7b0] sm:$0xff]
    %v1539 = vld [vmem:[#allocation8 + $0x7b8] sm:$0xff]
    %v1540 = vld [vmem:[#allocation8 + $0x7c0] sm:$0xff]
    %v1541 = vld [vmem:[#allocation8 + $0x7c8] sm:$0xff]
    %v1542 = vld [vmem:[#allocation8 + $0x7d0] sm:$0xff]
    %v1543 = vld [vmem:[#allocation8 + $0x7d8] sm:$0xff]
    %v1544 = vld [vmem:[#allocation8 + $0x7e0] sm:$0xff]
    %v1545 = vld [vmem:[#allocation8 + $0x7e8] sm:$0xff]
    %v1546 = vld [vmem:[#allocation8 + $0x7f0] sm:$0xff]
    %v1547 = vld [vmem:[#allocation8 + $0x7f8] sm:$0xff]
    %v1548 = vld [vmem:[#allocation8 + $0x800] sm:$0xff]
    %v1549 = vld [vmem:[#allocation8 + $0x808] sm:$0xff]
    %v1550 = vld [vmem:[#allocation8 + $0x810] sm:$0xff]
    %v1551 = vld [vmem:[#allocation8 + $0x818] sm:$0xff]
    %v1552 = vld [vmem:[#allocation8 + $0x820] sm:$0xff]
    %v1553 = vld [vmem:[#allocation8 + $0x828] sm:$0xff]
    %v1554 = vld [vmem:[#allocation8 + $0x830] sm:$0xff]
    %v1555 = vld [vmem:[#allocation8 + $0x838] sm:$0xff]
    %v1556 = vld [vmem:[#allocation8 + $0x840] sm:$0xff]
    %v1557 = vld [vmem:[#allocation8 + $0x848] sm:$0xff]
    %v1558 = vld [vmem:[#allocation8 + $0x850] sm:$0xff]
    %v1559 = vld [vmem:[#allocation8 + $0x858] sm:$0xff]
    %v1560 = vld [vmem:[#allocation8 + $0x860] sm:$0xff]
    %v1561 = vld [vmem:[#allocation8 + $0x868] sm:$0xff]
    %v1562 = vld [vmem:[#allocation8 + $0x870] sm:$0xff]
    %v1563 = vld [vmem:[#allocation8 + $0x878] sm:$0xff]
    %v1564 = vld [vmem:[#allocation8 + $0x880] sm:$0xff]
    %v1565 = vld [vmem:[#allocation8 + $0x888] sm:$0xff]
    %v1566 = vld [vmem:[#allocation8 + $0x890] sm:$0xff]
    %v1567 = vld [vmem:[#allocation8 + $0x898] sm:$0xff]
    %v1568 = vld [vmem:[#allocation8 + $0x8a0] sm:$0xff]
    %v1569 = vld [vmem:[#allocation8 + $0x8a8] sm:$0xff]
    %v1570 = vld [vmem:[#allocation8 + $0x8b0] sm:$0xff]
    %v1571 = vld [vmem:[#allocation8 + $0x8b8] sm:$0xff]
    %v1572 = vld [vmem:[#allocation8 + $0x8c0] sm:$0xff]
    %v1573 = vld [vmem:[#allocation8 + $0x8c8] sm:$0xff]
    %v1574 = vld [vmem:[#allocation8 + $0x8d0] sm:$0xff]
    %v1575 = vld [vmem:[#allocation8 + $0x8d8] sm:$0xff]
    %v1576 = vld [vmem:[#allocation8 + $0x8e0] sm:$0xff]
    %v1577 = vld [vmem:[#allocation8 + $0x8e8] sm:$0xff]
    %v1578 = vld [vmem:[#allocation8 + $0x8f0] sm:$0xff]
    %v1579 = vld [vmem:[#allocation8 + $0x8f8] sm:$0xff]
    %v1580 = vld [vmem:[#allocation8 + $0x900] sm:$0xff]
    %v1581 = vld [vmem:[#allocation8 + $0x908] sm:$0xff]
    %v1582 = vld [vmem:[#allocation8 + $0x910] sm:$0xff]
    %v1583 = vld [vmem:[#allocation8 + $0x918] sm:$0xff]
    %v1584 = vld [vmem:[#allocation8 + $0x920] sm:$0xff]
    %v1585 = vld [vmem:[#allocation8 + $0x928] sm:$0xff]
    %v1586 = vld [vmem:[#allocation8 + $0x930] sm:$0xff]
    %v1587 = vld [vmem:[#allocation8 + $0x938] sm:$0xff]
    %v1588 = vld [vmem:[#allocation8 + $0x940] sm:$0xff]
    %v1589 = vld [vmem:[#allocation8 + $0x948] sm:$0xff]
    %v1590 = vld [vmem:[#allocation8 + $0x950] sm:$0xff]
    %v1591 = vld [vmem:[#allocation8 + $0x958] sm:$0xff]
    %v1592 = vld [vmem:[#allocation8 + $0x960] sm:$0xff]
    %v1593 = vld [vmem:[#allocation8 + $0x968] sm:$0xff]
    %v1594 = vld [vmem:[#allocation8 + $0x970] sm:$0xff]
    %v1595 = vld [vmem:[#allocation8 + $0x978] sm:$0xff]
    %v1596 = vld [vmem:[#allocation8 + $0x980] sm:$0xff]
    %v1597 = vld [vmem:[#allocation8 + $0x988] sm:$0xff]
    %v1598 = vld [vmem:[#allocation8 + $0x990] sm:$0xff]
    %v1599 = vld [vmem:[#allocation8 + $0x998] sm:$0xff]
    %v1600 = vld [vmem:[#allocation8 + $0x9a0] sm:$0xff]
    %v1601 = vld [vmem:[#allocation8 + $0x9a8] sm:$0xff]
    %v1602 = vld [vmem:[#allocation8 + $0x9b0] sm:$0xff]
    %v1603 = vld [vmem:[#allocation8 + $0x9b8] sm:$0xff]
    %v1604 = vld [vmem:[#allocation8 + $0x9c0] sm:$0xff]
    %v1605 = vld [vmem:[#allocation8 + $0x9c8] sm:$0xff]
    %v1606 = vld [vmem:[#allocation8 + $0x9d0] sm:$0xff]
    %v1607 = vld [vmem:[#allocation8 + $0x9d8] sm:$0xff]
    %v1608 = vld [vmem:[#allocation8 + $0x9e0] sm:$0xff]
    %v1609 = vld [vmem:[#allocation8 + $0x9e8] sm:$0xff]
    %v1610 = vld [vmem:[#allocation8 + $0x9f0] sm:$0xff]
    %v1611 = vld [vmem:[#allocation8 + $0x9f8] sm:$0xff]
    %v1612 = vld [vmem:[#allocation8 + $0xa00] sm:$0xff]
    %v1613 = vld [vmem:[#allocation8 + $0xa08] sm:$0xff]
    %v1614 = vld [vmem:[#allocation8 + $0xa10] sm:$0xff]
    %v1615 = vld [vmem:[#allocation8 + $0xa18] sm:$0xff]
    %v1616 = vld [vmem:[#allocation8 + $0xa20] sm:$0xff]
    %v1617 = vld [vmem:[#allocation8 + $0xa28] sm:$0xff]
    %v1618 = vld [vmem:[#allocation8 + $0xa30] sm:$0xff]
    %v1619 = vld [vmem:[#allocation8 + $0xa38] sm:$0xff]
    %v1620 = vld [vmem:[#allocation8 + $0xa40] sm:$0xff]
    %v1621 = vld [vmem:[#allocation8 + $0xa48] sm:$0xff]
    %v1622 = vld [vmem:[#allocation8 + $0xa50] sm:$0xff]
    %v1623 = vld [vmem:[#allocation8 + $0xa58] sm:$0xff]
    %v1624 = vld [vmem:[#allocation8 + $0xa60] sm:$0xff]
    %v1625 = vld [vmem:[#allocation8 + $0xa68] sm:$0xff]
    %v1626 = vld [vmem:[#allocation8 + $0xa70] sm:$0xff]
    %v1627 = vld [vmem:[#allocation8 + $0xa78] sm:$0xff]
    %v1628 = vld [vmem:[#allocation8 + $0xa80] sm:$0xff]
    %v1629 = vld [vmem:[#allocation8 + $0xa88] sm:$0xff]
    %v1630 = vld [vmem:[#allocation8 + $0xa90] sm:$0xff]
    %v1631 = vld [vmem:[#allocation8 + $0xa98] sm:$0xff]
    %v1632 = vld [vmem:[#allocation8 + $0xaa0] sm:$0xff]
    %v1633 = vld [vmem:[#allocation8 + $0xaa8] sm:$0xff]
    %v1634 = vld [vmem:[#allocation8 + $0xab0] sm:$0xff]
    %v1635 = vld [vmem:[#allocation8 + $0xab8] sm:$0xff]
    %v1636 = vld [vmem:[#allocation8 + $0xac0] sm:$0xff]
    %v1637 = vld [vmem:[#allocation8 + $0xac8] sm:$0xff]
    %v1638 = vld [vmem:[#allocation8 + $0xad0] sm:$0xff]
    %v1639 = vld [vmem:[#allocation8 + $0xad8] sm:$0xff]
    %v1640 = vld [vmem:[#allocation8 + $0xae0] sm:$0xff]
    %v1641 = vld [vmem:[#allocation8 + $0xae8] sm:$0xff]
    %v1642 = vld [vmem:[#allocation8 + $0xaf0] sm:$0xff]
    %v1643 = vld [vmem:[#allocation8 + $0xaf8] sm:$0xff]
    %v1644 = vld [vmem:[#allocation8 + $0xb00] sm:$0xff]
    %v1645 = vld [vmem:[#allocation8 + $0xb08] sm:$0xff]
    %v1646 = vld [vmem:[#allocation8 + $0xb10] sm:$0xff]
    %v1647 = vld [vmem:[#allocation8 + $0xb18] sm:$0xff]
    %v1648 = vld [vmem:[#allocation8 + $0xb20] sm:$0xff]
    %v1649 = vld [vmem:[#allocation8 + $0xb28] sm:$0xff]
    %v1650 = vld [vmem:[#allocation8 + $0xb30] sm:$0xff]
    %v1651 = vld [vmem:[#allocation8 + $0xb38] sm:$0xff]
    %v1652 = vld [vmem:[#allocation8 + $0xb40] sm:$0xff]
    %v1653 = vld [vmem:[#allocation8 + $0xb48] sm:$0xff]
    %v1654 = vld [vmem:[#allocation8 + $0xb50] sm:$0xff]
    %v1655 = vld [vmem:[#allocation8 + $0xb58] sm:$0xff]
    %v1656 = vld [vmem:[#allocation8 + $0xb60] sm:$0xff]
    %v1657 = vld [vmem:[#allocation8 + $0xb68] sm:$0xff]
    %v1658 = vld [vmem:[#allocation8 + $0xb70] sm:$0xff]
    %v1659 = vld [vmem:[#allocation8 + $0xb78] sm:$0xff]
    %v1660 = vld [vmem:[#allocation8 + $0xb80] sm:$0xff]
    %v1661 = vld [vmem:[#allocation8 + $0xb88] sm:$0xff]
    %v1662 = vld [vmem:[#allocation8 + $0xb90] sm:$0xff]
    %v1663 = vld [vmem:[#allocation8 + $0xb98] sm:$0xff]
    %v1664 = vld [vmem:[#allocation8 + $0xba0] sm:$0xff]
    %v1665 = vld [vmem:[#allocation8 + $0xba8] sm:$0xff]
    %v1666 = vld [vmem:[#allocation8 + $0xbb0] sm:$0xff]
    %v1667 = vld [vmem:[#allocation8 + $0xbb8] sm:$0xff]
    %v1668 = vld [vmem:[#allocation8 + $0xbc0] sm:$0xff]
    %v1669 = vld [vmem:[#allocation8 + $0xbc8] sm:$0xff]
    %v1670 = vld [vmem:[#allocation8 + $0xbd0] sm:$0xff]
    %v1671 = vld [vmem:[#allocation8 + $0xbd8] sm:$0xff]
    %v1672 = vld [vmem:[#allocation8 + $0xbe0] sm:$0xff]
    %v1673 = vld [vmem:[#allocation8 + $0xbe8] sm:$0xff]
    %v1674 = vld [vmem:[#allocation8 + $0xbf0] sm:$0xff]
    %v1675 = vld [vmem:[#allocation8 + $0xbf8] sm:$0xff]
    %v1676 = vld [vmem:[#allocation8 + $0xc00] sm:$0xff]
    %v1677 = vld [vmem:[#allocation8 + $0xc08] sm:$0xff]
    %v1678 = vld [vmem:[#allocation8 + $0xc10] sm:$0xff]
    %v1679 = vld [vmem:[#allocation8 + $0xc18] sm:$0xff]
    %v1680 = vld [vmem:[#allocation8 + $0xc20] sm:$0xff]
    %v1681 = vld [vmem:[#allocation8 + $0xc28] sm:$0xff]
    %v1682 = vld [vmem:[#allocation8 + $0xc30] sm:$0xff]
    %v1683 = vld [vmem:[#allocation8 + $0xc38] sm:$0xff]
    %v1684 = vld [vmem:[#allocation8 + $0xc40] sm:$0xff]
    %v1685 = vld [vmem:[#allocation8 + $0xc48] sm:$0xff]
    %v1686 = vld [vmem:[#allocation8 + $0xc50] sm:$0xff]
    %v1687 = vld [vmem:[#allocation8 + $0xc58] sm:$0xff]
    %v1688 = vld [vmem:[#allocation8 + $0xc60] sm:$0xff]
    %v1689 = vld [vmem:[#allocation8 + $0xc68] sm:$0xff]
    %v1690 = vld [vmem:[#allocation8 + $0xc70] sm:$0xff]
    %v1691 = vld [vmem:[#allocation8 + $0xc78] sm:$0xff]
    %v1692 = vld [vmem:[#allocation8 + $0xc80] sm:$0xff]
    %v1693 = vld [vmem:[#allocation8 + $0xc88] sm:$0xff]
    %v1694 = vld [vmem:[#allocation8 + $0xc90] sm:$0xff]
    %v1695 = vld [vmem:[#allocation8 + $0xc98] sm:$0xff]
    %v1696 = vld [vmem:[#allocation8 + $0xca0] sm:$0xff]
    %v1697 = vld [vmem:[#allocation8 + $0xca8] sm:$0xff]
    %v1698 = vld [vmem:[#allocation8 + $0xcb0] sm:$0xff]
    %v1699 = vld [vmem:[#allocation8 + $0xcb8] sm:$0xff]
    %v1700 = vld [vmem:[#allocation8 + $0xcc0] sm:$0xff]
    %v1701 = vld [vmem:[#allocation8 + $0xcc8] sm:$0xff]
    %v1702 = vld [vmem:[#allocation8 + $0xcd0] sm:$0xff]
    %v1703 = vld [vmem:[#allocation8 + $0xcd8] sm:$0xff]
    %v1704 = vld [vmem:[#allocation8 + $0xce0] sm:$0xff]
    %v1705 = vld [vmem:[#allocation8 + $0xce8] sm:$0xff]
    %v1706 = vld [vmem:[#allocation8 + $0xcf0] sm:$0xff]
    %v1707 = vld [vmem:[#allocation8 + $0xcf8] sm:$0xff]
    %v1708 = vld [vmem:[#allocation8 + $0xd00] sm:$0xff]
    %v1709 = vld [vmem:[#allocation8 + $0xd08] sm:$0xff]
    %v1710 = vld [vmem:[#allocation8 + $0xd10] sm:$0xff]
    %v1711 = vld [vmem:[#allocation8 + $0xd18] sm:$0xff]
    %v1712 = vld [vmem:[#allocation8 + $0xd20] sm:$0xff]
    %v1713 = vld [vmem:[#allocation8 + $0xd28] sm:$0xff]
    %v1714 = vld [vmem:[#allocation8 + $0xd30] sm:$0xff]
    %v1715 = vld [vmem:[#allocation8 + $0xd38] sm:$0xff]
    %v1716 = vld [vmem:[#allocation8 + $0xd40] sm:$0xff]
    %v1717 = vld [vmem:[#allocation8 + $0xd48] sm:$0xff]
    %v1718 = vld [vmem:[#allocation8 + $0xd50] sm:$0xff]
    %v1719 = vld [vmem:[#allocation8 + $0xd58] sm:$0xff]
    %v1720 = vld [vmem:[#allocation8 + $0xd60] sm:$0xff]
    %v1721 = vld [vmem:[#allocation8 + $0xd68] sm:$0xff]
    %v1722 = vld [vmem:[#allocation8 + $0xd70] sm:$0xff]
    %v1723 = vld [vmem:[#allocation8 + $0xd78] sm:$0xff]
    %v1724 = vld [vmem:[#allocation8 + $0xd80] sm:$0xff]
    %v1725 = vld [vmem:[#allocation8 + $0xd88] sm:$0xff]
    %v1726 = vld [vmem:[#allocation8 + $0xd90] sm:$0xff]
    %v1727 = vld [vmem:[#allocation8 + $0xd98] sm:$0xff]
    %v1728 = vld [vmem:[#allocation8 + $0xda0] sm:$0xff]
    %v1729 = vld [vmem:[#allocation8 + $0xda8] sm:$0xff]
    %v1730 = vld [vmem:[#allocation8 + $0xdb0] sm:$0xff]
    %v1731 = vld [vmem:[#allocation8 + $0xdb8] sm:$0xff]
    %v1732 = vld [vmem:[#allocation8 + $0xdc0] sm:$0xff]
    %v1733 = vld [vmem:[#allocation8 + $0xdc8] sm:$0xff]
    %v1734 = vld [vmem:[#allocation8 + $0xdd0] sm:$0xff]
    %v1735 = vld [vmem:[#allocation8 + $0xdd8] sm:$0xff]
    %v1736 = vld [vmem:[#allocation8 + $0xde0] sm:$0xff]
    %v1737 = vld [vmem:[#allocation8 + $0xde8] sm:$0xff]
    %v1738 = vld [vmem:[#allocation8 + $0xdf0] sm:$0xff]
    %v1739 = vld [vmem:[#allocation8 + $0xdf8] sm:$0xff]
    %v1740 = vld [vmem:[#allocation8 + $0xe00] sm:$0xff]
    %v1741 = vld [vmem:[#allocation8 + $0xe08] sm:$0xff]
    %v1742 = vld [vmem:[#allocation8 + $0xe10] sm:$0xff]
    %v1743 = vld [vmem:[#allocation8 + $0xe18] sm:$0xff]
    %v1744 = vld [vmem:[#allocation8 + $0xe20] sm:$0xff]
    %v1745 = vld [vmem:[#allocation8 + $0xe28] sm:$0xff]
    %v1746 = vld [vmem:[#allocation8 + $0xe30] sm:$0xff]
    %v1747 = vld [vmem:[#allocation8 + $0xe38] sm:$0xff]
    %v1748 = vld [vmem:[#allocation8 + $0xe40] sm:$0xff]
    %v1749 = vld [vmem:[#allocation8 + $0xe48] sm:$0xff]
    %v1750 = vld [vmem:[#allocation8 + $0xe50] sm:$0xff]
    %v1751 = vld [vmem:[#allocation8 + $0xe58] sm:$0xff]
    %v1752 = vld [vmem:[#allocation8 + $0xe60] sm:$0xff]
    %v1753 = vld [vmem:[#allocation8 + $0xe68] sm:$0xff]
    %v1754 = vld [vmem:[#allocation8 + $0xe70] sm:$0xff]
    %v1755 = vld [vmem:[#allocation8 + $0xe78] sm:$0xff]
    %v1756 = vld [vmem:[#allocation8 + $0xe80] sm:$0xff]
    %v1757 = vld [vmem:[#allocation8 + $0xe88] sm:$0xff]
    %v1758 = vld [vmem:[#allocation8 + $0xe90] sm:$0xff]
    %v1759 = vld [vmem:[#allocation8 + $0xe98] sm:$0xff]
    %v1760 = vld [vmem:[#allocation8 + $0xea0] sm:$0xff]
    %v1761 = vld [vmem:[#allocation8 + $0xea8] sm:$0xff]
    %v1762 = vld [vmem:[#allocation8 + $0xeb0] sm:$0xff]
    %v1763 = vld [vmem:[#allocation8 + $0xeb8] sm:$0xff]
    %v1764 = vld [vmem:[#allocation8 + $0xec0] sm:$0xff]
    %v1765 = vld [vmem:[#allocation8 + $0xec8] sm:$0xff]
    %v1766 = vld [vmem:[#allocation8 + $0xed0] sm:$0xff]
    %v1767 = vld [vmem:[#allocation8 + $0xed8] sm:$0xff]
    %v1768 = vld [vmem:[#allocation8 + $0xee0] sm:$0xff]
    %v1769 = vld [vmem:[#allocation8 + $0xee8] sm:$0xff]
    %v1770 = vld [vmem:[#allocation8 + $0xef0] sm:$0xff]
    %v1771 = vld [vmem:[#allocation8 + $0xef8] sm:$0xff]
    %v1772 = vld [vmem:[#allocation8 + $0xf00] sm:$0xff]
    %v1773 = vld [vmem:[#allocation8 + $0xf08] sm:$0xff]
    %v1774 = vld [vmem:[#allocation8 + $0xf10] sm:$0xff]
    %v1775 = vld [vmem:[#allocation8 + $0xf18] sm:$0xff]
    %v1776 = vld [vmem:[#allocation8 + $0xf20] sm:$0xff]
    %v1777 = vld [vmem:[#allocation8 + $0xf28] sm:$0xff]
    %v1778 = vld [vmem:[#allocation8 + $0xf30] sm:$0xff]
    %v1779 = vld [vmem:[#allocation8 + $0xf38] sm:$0xff]
    %v1780 = vld [vmem:[#allocation8 + $0xf40] sm:$0xff]
    %v1781 = vld [vmem:[#allocation8 + $0xf48] sm:$0xff]
    %v1782 = vld [vmem:[#allocation8 + $0xf50] sm:$0xff]
    %v1783 = vld [vmem:[#allocation8 + $0xf58] sm:$0xff]
    %v1784 = vld [vmem:[#allocation8 + $0xf60] sm:$0xff]
    %v1785 = vld [vmem:[#allocation8 + $0xf68] sm:$0xff]
    %v1786 = vld [vmem:[#allocation8 + $0xf70] sm:$0xff]
    %v1787 = vld [vmem:[#allocation8 + $0xf78] sm:$0xff]
    %v1788 = vld [vmem:[#allocation8 + $0xf80] sm:$0xff]
    %v1789 = vld [vmem:[#allocation8 + $0xf88] sm:$0xff]
    %v1790 = vld [vmem:[#allocation8 + $0xf90] sm:$0xff]
    %v1791 = vld [vmem:[#allocation8 + $0xf98] sm:$0xff]
    %v1792 = vld [vmem:[#allocation8 + $0xfa0] sm:$0xff]
    %v1793 = vld [vmem:[#allocation8 + $0xfa8] sm:$0xff]
    %v1794 = vld [vmem:[#allocation8 + $0xfb0] sm:$0xff]
    %v1795 = vld [vmem:[#allocation8 + $0xfb8] sm:$0xff]
    %v1796 = vld [vmem:[#allocation8 + $0xfc0] sm:$0xff]
    %v1797 = vld [vmem:[#allocation8 + $0xfc8] sm:$0xff]
    %v1798 = vld [vmem:[#allocation8 + $0xfd0] sm:$0xff]
    %v1799 = vld [vmem:[#allocation8 + $0xfd8] sm:$0xff]
    %v1800 = vld [vmem:[#allocation8 + $0xfe0] sm:$0xff]
    %v1801 = vld [vmem:[#allocation8 + $0xfe8] sm:$0xff]
    %v1802 = vld [vmem:[#allocation8 + $0xff0] sm:$0xff]
    %v1803 = vld [vmem:[#allocation8 + $0xff8] sm:$0xff]
    %v1804 = vld [vmem:[#allocation8 + $0x1000] sm:$0xff]
    %v1805 = vld [vmem:[#allocation8 + $0x1008] sm:$0xff]
    %v1806 = vld [vmem:[#allocation8 + $0x1010] sm:$0xff]
    %v1807 = vld [vmem:[#allocation8 + $0x1018] sm:$0xff]
    %v1808 = vld [vmem:[#allocation8 + $0x1020] sm:$0xff]
    %v1809 = vld [vmem:[#allocation8 + $0x1028] sm:$0xff]
    %v1810 = vld [vmem:[#allocation8 + $0x1030] sm:$0xff]
    %v1811 = vld [vmem:[#allocation8 + $0x1038] sm:$0xff]
    %v1812 = vld [vmem:[#allocation8 + $0x1040] sm:$0xff]
    %v1813 = vld [vmem:[#allocation8 + $0x1048] sm:$0xff]
    %v1814 = vld [vmem:[#allocation8 + $0x1050] sm:$0xff]
    %v1815 = vld [vmem:[#allocation8 + $0x1058] sm:$0xff]
    %v1816 = vld [vmem:[#allocation8 + $0x1060] sm:$0xff]
    %v1817 = vld [vmem:[#allocation8 + $0x1068] sm:$0xff]
    %v1818 = vld [vmem:[#allocation8 + $0x1070] sm:$0xff]
    %v1819 = vld [vmem:[#allocation8 + $0x1078] sm:$0xff]
    %v1820 = vld [vmem:[#allocation8 + $0x1080] sm:$0xff]
    %v1821 = vld [vmem:[#allocation8 + $0x1088] sm:$0xff]
    %v1822 = vld [vmem:[#allocation8 + $0x1090] sm:$0xff]
    %v1823 = vld [vmem:[#allocation8 + $0x1098] sm:$0xff]
    %v1824 = vld [vmem:[#allocation8 + $0x10a0] sm:$0xff]
    %v1825 = vld [vmem:[#allocation8 + $0x10a8] sm:$0xff]
    %v1826 = vld [vmem:[#allocation8 + $0x10b0] sm:$0xff]
    %v1827 = vld [vmem:[#allocation8 + $0x10b8] sm:$0xff]
    %v1828 = vld [vmem:[#allocation8 + $0x10c0] sm:$0xff]
    %v1829 = vld [vmem:[#allocation8 + $0x10c8] sm:$0xff]
    %v1830 = vld [vmem:[#allocation8 + $0x10d0] sm:$0xff]
    %v1831 = vld [vmem:[#allocation8 + $0x10d8] sm:$0xff]
    %v1832 = vld [vmem:[#allocation8 + $0x10e0] sm:$0xff]
    %v1833 = vld [vmem:[#allocation8 + $0x10e8] sm:$0xff]
    %v1834 = vld [vmem:[#allocation8 + $0x10f0] sm:$0xff]
    %v1835 = vld [vmem:[#allocation8 + $0x10f8] sm:$0xff]
    %v1836 = vld [vmem:[#allocation8 + $0x1100] sm:$0xff]
    %v1837 = vld [vmem:[#allocation8 + $0x1108] sm:$0xff]
    %v1838 = vld [vmem:[#allocation8 + $0x1110] sm:$0xff]
    %v1839 = vld [vmem:[#allocation8 + $0x1118] sm:$0xff]
    %v1840 = vld [vmem:[#allocation8 + $0x1120] sm:$0xff]
    %v1841 = vld [vmem:[#allocation8 + $0x1128] sm:$0xff]
    %v1842 = vld [vmem:[#allocation8 + $0x1130] sm:$0xff]
    %v1843 = vld [vmem:[#allocation8 + $0x1138] sm:$0xff]
    %v1844 = vld [vmem:[#allocation8 + $0x1140] sm:$0xff]
    %v1845 = vld [vmem:[#allocation8 + $0x1148] sm:$0xff]
    %v1846 = vld [vmem:[#allocation8 + $0x1150] sm:$0xff]
    %v1847 = vld [vmem:[#allocation8 + $0x1158] sm:$0xff]
    %v1848 = vld [vmem:[#allocation8 + $0x1160] sm:$0xff]
    %v1849 = vld [vmem:[#allocation8 + $0x1168] sm:$0xff]
    %v1850 = vld [vmem:[#allocation8 + $0x1170] sm:$0xff]
    %v1851 = vld [vmem:[#allocation8 + $0x1178] sm:$0xff]
    %v1852 = vld [vmem:[#allocation8 + $0x1180] sm:$0xff]
    %v1853 = vld [vmem:[#allocation8 + $0x1188] sm:$0xff]
    %v1854 = vld [vmem:[#allocation8 + $0x1190] sm:$0xff]
    %v1855 = vld [vmem:[#allocation8 + $0x1198] sm:$0xff]
    %v1856 = vld [vmem:[#allocation8 + $0x11a0] sm:$0xff]
    %v1857 = vld [vmem:[#allocation8 + $0x11a8] sm:$0xff]
    %v1858 = vld [vmem:[#allocation8 + $0x11b0] sm:$0xff]
    %v1859 = vld [vmem:[#allocation8 + $0x11b8] sm:$0xff]
    %v1860 = vld [vmem:[#allocation8 + $0x11c0] sm:$0xff]
    %v1861 = vld [vmem:[#allocation8 + $0x11c8] sm:$0xff]
    %v1862 = vld [vmem:[#allocation8 + $0x11d0] sm:$0xff]
    %v1863 = vld [vmem:[#allocation8 + $0x11d8] sm:$0xff]
    %v1864 = vld [vmem:[#allocation8 + $0x11e0] sm:$0xff]
    %v1865 = vld [vmem:[#allocation8 + $0x11e8] sm:$0xff]
    %v1866 = vld [vmem:[#allocation8 + $0x11f0] sm:$0xff]
    %v1867 = vld [vmem:[#allocation8 + $0x11f8] sm:$0xff]
    %v1868 = vld [vmem:[#allocation8 + $0x1200] sm:$0xff]
    %v1869 = vld [vmem:[#allocation8 + $0x1208] sm:$0xff]
    %v1870 = vld [vmem:[#allocation8 + $0x1210] sm:$0xff]
    %v1871 = vld [vmem:[#allocation8 + $0x1218] sm:$0xff]
    %v1872 = vld [vmem:[#allocation8 + $0x1220] sm:$0xff]
    %v1873 = vld [vmem:[#allocation8 + $0x1228] sm:$0xff]
    %v1874 = vld [vmem:[#allocation8 + $0x1230] sm:$0xff]
    %v1875 = vld [vmem:[#allocation8 + $0x1238] sm:$0xff]
    %v1876 = vld [vmem:[#allocation8 + $0x1240] sm:$0xff]
    %v1877 = vld [vmem:[#allocation8 + $0x1248] sm:$0xff]
    %v1878 = vld [vmem:[#allocation8 + $0x1250] sm:$0xff]
    %v1879 = vld [vmem:[#allocation8 + $0x1258] sm:$0xff]
    %v1880 = vld [vmem:[#allocation8 + $0x1260] sm:$0xff]
    %v1881 = vld [vmem:[#allocation8 + $0x1268] sm:$0xff]
    %v1882 = vld [vmem:[#allocation8 + $0x1270] sm:$0xff]
    %v1883 = vld [vmem:[#allocation8 + $0x1278] sm:$0xff]
    %v1884 = vld [vmem:[#allocation8 + $0x1280] sm:$0xff]
    %v1885 = vld [vmem:[#allocation8 + $0x1288] sm:$0xff]
    %v1886 = vld [vmem:[#allocation8 + $0x1290] sm:$0xff]
    %v1887 = vld [vmem:[#allocation8 + $0x1298] sm:$0xff]
    %v1888 = vld [vmem:[#allocation8 + $0x12a0] sm:$0xff]
    %v1889 = vld [vmem:[#allocation8 + $0x12a8] sm:$0xff]
    %v1890 = vld [vmem:[#allocation8 + $0x12b0] sm:$0xff]
    %v1891 = vld [vmem:[#allocation8 + $0x12b8] sm:$0xff]
    %v1892 = vld [vmem:[#allocation8 + $0x12c0] sm:$0xff]
    %v1893 = vld [vmem:[#allocation8 + $0x12c8] sm:$0xff]
    %v1894 = vld [vmem:[#allocation8 + $0x12d0] sm:$0xff]
    %v1895 = vld [vmem:[#allocation8 + $0x12d8] sm:$0xff]
    %v1896 = vld [vmem:[#allocation8 + $0x12e0] sm:$0xff]
    %v1897 = vld [vmem:[#allocation8 + $0x12e8] sm:$0xff]
    %v1898 = vld [vmem:[#allocation8 + $0x12f0] sm:$0xff]
    %v1899 = vld [vmem:[#allocation8 + $0x12f8] sm:$0xff]
    %v1900 = vld [vmem:[#allocation8 + $0x1300] sm:$0xff]
    %v1901 = vld [vmem:[#allocation8 + $0x1308] sm:$0xff]
    %v1902 = vld [vmem:[#allocation8 + $0x1310] sm:$0xff]
    %v1903 = vld [vmem:[#allocation8 + $0x1318] sm:$0xff]
    %v1904 = vld [vmem:[#allocation8 + $0x1320] sm:$0xff]
    %v1905 = vld [vmem:[#allocation8 + $0x1328] sm:$0xff]
    %v1906 = vld [vmem:[#allocation8 + $0x1330] sm:$0xff]
    %v1907 = vld [vmem:[#allocation8 + $0x1338] sm:$0xff]
    %v1908 = vld [vmem:[#allocation8 + $0x1340] sm:$0xff]
    %v1909 = vld [vmem:[#allocation8 + $0x1348] sm:$0xff]
    %v1910 = vld [vmem:[#allocation8 + $0x1350] sm:$0xff]
    %v1911 = vld [vmem:[#allocation8 + $0x1358] sm:$0xff]
    %v1912 = vld [vmem:[#allocation8 + $0x1360] sm:$0xff]
    %v1913 = vld [vmem:[#allocation8 + $0x1368] sm:$0xff]
    %v1914 = vld [vmem:[#allocation8 + $0x1370] sm:$0xff]
    %v1915 = vld [vmem:[#allocation8 + $0x1378] sm:$0xff]
    %v1916 = vld [vmem:[#allocation8 + $0x1380] sm:$0xff]
    %v1917 = vld [vmem:[#allocation8 + $0x1388] sm:$0xff]
    %v1918 = vld [vmem:[#allocation8 + $0x1390] sm:$0xff]
    %v1919 = vld [vmem:[#allocation8 + $0x1398] sm:$0xff]
    %v1920 = vld [vmem:[#allocation8 + $0x13a0] sm:$0xff]
    %v1921 = vld [vmem:[#allocation8 + $0x13a8] sm:$0xff]
    %v1922 = vld [vmem:[#allocation8 + $0x13b0] sm:$0xff]
    %v1923 = vld [vmem:[#allocation8 + $0x13b8] sm:$0xff]
    %v1924 = vld [vmem:[#allocation8 + $0x13c0] sm:$0xff]
    %v1925 = vld [vmem:[#allocation8 + $0x13c8] sm:$0xff]
    %v1926 = vld [vmem:[#allocation8 + $0x13d0] sm:$0xff]
    %v1927 = vld [vmem:[#allocation8 + $0x13d8] sm:$0xff]
    %v1928 = vld [vmem:[#allocation8 + $0x13e0] sm:$0xff]
    %v1929 = vld [vmem:[#allocation8 + $0x13e8] sm:$0xff]
    %v1930 = vld [vmem:[#allocation8 + $0x13f0] sm:$0xff]
    %v1931 = vld [vmem:[#allocation8 + $0x13f8] sm:$0xff]
    %v1932 = vld [vmem:[#allocation8 + $0x1400] sm:$0xff]
    %v1933 = vld [vmem:[#allocation8 + $0x1408] sm:$0xff]
    %v1934 = vld [vmem:[#allocation8 + $0x1410] sm:$0xff]
    %v1935 = vld [vmem:[#allocation8 + $0x1418] sm:$0xff]
    %v1936 = vld [vmem:[#allocation8 + $0x1420] sm:$0xff]
    %v1937 = vld [vmem:[#allocation8 + $0x1428] sm:$0xff]
    %v1938 = vld [vmem:[#allocation8 + $0x1430] sm:$0xff]
    %v1939 = vld [vmem:[#allocation8 + $0x1438] sm:$0xff]
    %v1940 = vld [vmem:[#allocation8 + $0x1440] sm:$0xff]
    %v1941 = vld [vmem:[#allocation8 + $0x1448] sm:$0xff]
    %v1942 = vld [vmem:[#allocation8 + $0x1450] sm:$0xff]
    %v1943 = vld [vmem:[#allocation8 + $0x1458] sm:$0xff]
    %v1944 = vld [vmem:[#allocation8 + $0x1460] sm:$0xff]
    %v1945 = vld [vmem:[#allocation8 + $0x1468] sm:$0xff]
    %v1946 = vld [vmem:[#allocation8 + $0x1470] sm:$0xff]
    %v1947 = vld [vmem:[#allocation8 + $0x1478] sm:$0xff]
    %v1948 = vld [vmem:[#allocation8 + $0x1480] sm:$0xff]
    %v1949 = vld [vmem:[#allocation8 + $0x1488] sm:$0xff]
    %v1950 = vld [vmem:[#allocation8 + $0x1490] sm:$0xff]
    %v1951 = vld [vmem:[#allocation8 + $0x1498] sm:$0xff]
    %v1952 = vld [vmem:[#allocation8 + $0x14a0] sm:$0xff]
    %v1953 = vld [vmem:[#allocation8 + $0x14a8] sm:$0xff]
    %v1954 = vld [vmem:[#allocation8 + $0x14b0] sm:$0xff]
    %v1955 = vld [vmem:[#allocation8 + $0x14b8] sm:$0xff]
    %v1956 = vld [vmem:[#allocation8 + $0x14c0] sm:$0xff]
    %v1957 = vld [vmem:[#allocation8 + $0x14c8] sm:$0xff]
    %v1958 = vld [vmem:[#allocation8 + $0x14d0] sm:$0xff]
    %v1959 = vld [vmem:[#allocation8 + $0x14d8] sm:$0xff]
    %v1960 = vld [vmem:[#allocation8 + $0x14e0] sm:$0xff]
    %v1961 = vld [vmem:[#allocation8 + $0x14e8] sm:$0xff]
    %v1962 = vld [vmem:[#allocation8 + $0x14f0] sm:$0xff]
    %v1963 = vld [vmem:[#allocation8 + $0x14f8] sm:$0xff]
    %v1964 = vld [vmem:[#allocation8 + $0x1500] sm:$0xff]
    %v1965 = vld [vmem:[#allocation8 + $0x1508] sm:$0xff]
    %v1966 = vld [vmem:[#allocation8 + $0x1510] sm:$0xff]
    %v1967 = vld [vmem:[#allocation8 + $0x1518] sm:$0xff]
    %v1968 = vld [vmem:[#allocation8 + $0x1520] sm:$0xff]
    %v1969 = vld [vmem:[#allocation8 + $0x1528] sm:$0xff]
    %v1970 = vld [vmem:[#allocation8 + $0x1530] sm:$0xff]
    %v1971 = vld [vmem:[#allocation8 + $0x1538] sm:$0xff]
    %v1972 = vld [vmem:[#allocation8 + $0x1540] sm:$0xff]
    %v1973 = vld [vmem:[#allocation8 + $0x1548] sm:$0xff]
    %v1974 = vld [vmem:[#allocation8 + $0x1550] sm:$0xff]
    %v1975 = vld [vmem:[#allocation8 + $0x1558] sm:$0xff]
    %v1976 = vld [vmem:[#allocation8 + $0x1560] sm:$0xff]
    %v1977 = vld [vmem:[#allocation8 + $0x1568] sm:$0xff]
    %v1978 = vld [vmem:[#allocation8 + $0x1570] sm:$0xff]
    %v1979 = vld [vmem:[#allocation8 + $0x1578] sm:$0xff]
    %v1980 = vld [vmem:[#allocation8 + $0x1580] sm:$0xff]
    %v1981 = vld [vmem:[#allocation8 + $0x1588] sm:$0xff]
    %v1982 = vld [vmem:[#allocation8 + $0x1590] sm:$0xff]
    %v1983 = vld [vmem:[#allocation8 + $0x1598] sm:$0xff]
    %v1984 = vld [vmem:[#allocation8 + $0x15a0] sm:$0xff]
    %v1985 = vld [vmem:[#allocation8 + $0x15a8] sm:$0xff]
    %v1986 = vld [vmem:[#allocation8 + $0x15b0] sm:$0xff]
    %v1987 = vld [vmem:[#allocation8 + $0x15b8] sm:$0xff]
    %v1988 = vld [vmem:[#allocation8 + $0x15c0] sm:$0xff]
    %v1989 = vld [vmem:[#allocation8 + $0x15c8] sm:$0xff]
    %v1990 = vld [vmem:[#allocation8 + $0x15d0] sm:$0xff]
    %v1991 = vld [vmem:[#allocation8 + $0x15d8] sm:$0xff]
    %v1992 = vld [vmem:[#allocation8 + $0x15e0] sm:$0xff]
    %v1993 = vld [vmem:[#allocation8 + $0x15e8] sm:$0xff]
    %v1994 = vld [vmem:[#allocation8 + $0x15f0] sm:$0xff]
    %v1995 = vld [vmem:[#allocation8 + $0x15f8] sm:$0xff]
    %v1996 = vld [vmem:[#allocation8 + $0x1600] sm:$0xff]
    %v1997 = vld [vmem:[#allocation8 + $0x1608] sm:$0xff]
    %v1998 = vld [vmem:[#allocation8 + $0x1610] sm:$0xff]
    %v1999 = vld [vmem:[#allocation8 + $0x1618] sm:$0xff]
    %v2000 = vld [vmem:[#allocation8 + $0x1620] sm:$0xff]
    %v2001 = vld [vmem:[#allocation8 + $0x1628] sm:$0xff]
    %v2002 = vld [vmem:[#allocation8 + $0x1630] sm:$0xff]
    %v2003 = vld [vmem:[#allocation8 + $0x1638] sm:$0xff]
    %v2004 = vld [vmem:[#allocation8 + $0x1640] sm:$0xff]
    %v2005 = vld [vmem:[#allocation8 + $0x1648] sm:$0xff]
    %v2006 = vld [vmem:[#allocation8 + $0x1650] sm:$0xff]
    %v2007 = vld [vmem:[#allocation8 + $0x1658] sm:$0xff]
    %v2008 = vld [vmem:[#allocation8 + $0x1660] sm:$0xff]
    %v2009 = vld [vmem:[#allocation8 + $0x1668] sm:$0xff]
    %v2010 = vld [vmem:[#allocation8 + $0x1670] sm:$0xff]
    %v2011 = vld [vmem:[#allocation8 + $0x1678] sm:$0xff]
    %v2012 = vld [vmem:[#allocation8 + $0x1680] sm:$0xff]
    %v2013 = vld [vmem:[#allocation8 + $0x1688] sm:$0xff]
    %v2014 = vld [vmem:[#allocation8 + $0x1690] sm:$0xff]
    %v2015 = vld [vmem:[#allocation8 + $0x1698] sm:$0xff]
    %v2016 = vld [vmem:[#allocation8 + $0x16a0] sm:$0xff]
    %v2017 = vld [vmem:[#allocation8 + $0x16a8] sm:$0xff]
    %v2018 = vld [vmem:[#allocation8 + $0x16b0] sm:$0xff]
    %v2019 = vld [vmem:[#allocation8 + $0x16b8] sm:$0xff]
    %v2020 = vld [vmem:[#allocation8 + $0x16c0] sm:$0xff]
    %v2021 = vld [vmem:[#allocation8 + $0x16c8] sm:$0xff]
    %v2022 = vld [vmem:[#allocation8 + $0x16d0] sm:$0xff]
    %v2023 = vld [vmem:[#allocation8 + $0x16d8] sm:$0xff]
    %v2024 = vld [vmem:[#allocation8 + $0x16e0] sm:$0xff]
    %v2025 = vld [vmem:[#allocation8 + $0x16e8] sm:$0xff]
    %v2026 = vld [vmem:[#allocation8 + $0x16f0] sm:$0xff]
    %v2027 = vld [vmem:[#allocation8 + $0x16f8] sm:$0xff]
    %v2028 = vld [vmem:[#allocation8 + $0x1700] sm:$0xff]
    %v2029 = vld [vmem:[#allocation8 + $0x1708] sm:$0xff]
    %v2030 = vld [vmem:[#allocation8 + $0x1710] sm:$0xff]
    %v2031 = vld [vmem:[#allocation8 + $0x1718] sm:$0xff]
    %v2032 = vld [vmem:[#allocation8 + $0x1720] sm:$0xff]
    %v2033 = vld [vmem:[#allocation8 + $0x1728] sm:$0xff]
    %v2034 = vld [vmem:[#allocation8 + $0x1730] sm:$0xff]
    %v2035 = vld [vmem:[#allocation8 + $0x1738] sm:$0xff]
    %v2036 = vld [vmem:[#allocation8 + $0x1740] sm:$0xff]
    %v2037 = vld [vmem:[#allocation8 + $0x1748] sm:$0xff]
    %v2038 = vld [vmem:[#allocation8 + $0x1750] sm:$0xff]
    %v2039 = vld [vmem:[#allocation8 + $0x1758] sm:$0xff]
    %v2040 = vld [vmem:[#allocation8 + $0x1760] sm:$0xff]
    %v2041 = vld [vmem:[#allocation8 + $0x1768] sm:$0xff]
    %v2042 = vld [vmem:[#allocation8 + $0x1770] sm:$0xff]
    %v2043 = vld [vmem:[#allocation8 + $0x1778] sm:$0xff]
    %v2044 = vld [vmem:[#allocation8 + $0x1780] sm:$0xff]
    %v2045 = vld [vmem:[#allocation8 + $0x1788] sm:$0xff]
    %v2046 = vld [vmem:[#allocation8 + $0x1790] sm:$0xff]
    %v2047 = vld [vmem:[#allocation8 + $0x1798] sm:$0xff]
    %v2048 = vld [vmem:[#allocation8 + $0x17a0] sm:$0xff]
    %v2049 = vld [vmem:[#allocation8 + $0x17a8] sm:$0xff]
    %v2050 = vld [vmem:[#allocation8 + $0x17b0] sm:$0xff]
    %v2051 = vld [vmem:[#allocation8 + $0x17b8] sm:$0xff]
    %v2052 = vld [vmem:[#allocation8 + $0x17c0] sm:$0xff]
    %v2053 = vld [vmem:[#allocation8 + $0x17c8] sm:$0xff]
    %v2054 = vld [vmem:[#allocation8 + $0x17d0] sm:$0xff]
    %v2055 = vld [vmem:[#allocation8 + $0x17d8] sm:$0xff]
    %v2056 = vld [vmem:[#allocation8 + $0x17e0] sm:$0xff]
    %v2057 = vld [vmem:[#allocation8 + $0x17e8] sm:$0xff]
    %v2058 = vld [vmem:[#allocation8 + $0x17f0] sm:$0xff]
    %v2059 = vld [vmem:[#allocation8 + $0x17f8] sm:$0xff]
    %v2060 = vld [vmem:[#allocation8 + $0x1800] sm:$0xff]
    %v2061 = vld [vmem:[#allocation8 + $0x1808] sm:$0xff]
    %v2062 = vld [vmem:[#allocation8 + $0x1810] sm:$0xff]
    %v2063 = vld [vmem:[#allocation8 + $0x1818] sm:$0xff]
    %v2064 = vld [vmem:[#allocation8 + $0x1820] sm:$0xff]
    %v2065 = vld [vmem:[#allocation8 + $0x1828] sm:$0xff]
    %v2066 = vld [vmem:[#allocation8 + $0x1830] sm:$0xff]
    %v2067 = vld [vmem:[#allocation8 + $0x1838] sm:$0xff]
    %v2068 = vld [vmem:[#allocation8 + $0x1840] sm:$0xff]
    %v2069 = vld [vmem:[#allocation8 + $0x1848] sm:$0xff]
    %v2070 = vld [vmem:[#allocation8 + $0x1850] sm:$0xff]
    %v2071 = vld [vmem:[#allocation8 + $0x1858] sm:$0xff]
    %v2072 = vld [vmem:[#allocation8 + $0x1860] sm:$0xff]
    %v2073 = vld [vmem:[#allocation8 + $0x1868] sm:$0xff]
    %v2074 = vld [vmem:[#allocation8 + $0x1870] sm:$0xff]
    %v2075 = vld [vmem:[#allocation8 + $0x1878] sm:$0xff]
    %v2076 = vld [vmem:[#allocation8 + $0x1880] sm:$0xff]
    %v2077 = vld [vmem:[#allocation8 + $0x1888] sm:$0xff]
    %v2078 = vld [vmem:[#allocation8 + $0x1890] sm:$0xff]
    %v2079 = vld [vmem:[#allocation8 + $0x1898] sm:$0xff]
    %v2080 = vld [vmem:[#allocation8 + $0x18a0] sm:$0xff]
    %v2081 = vld [vmem:[#allocation8 + $0x18a8] sm:$0xff]
    %v2082 = vld [vmem:[#allocation8 + $0x18b0] sm:$0xff]
    %v2083 = vld [vmem:[#allocation8 + $0x18b8] sm:$0xff]
    %v2084 = vld [vmem:[#allocation8 + $0x18c0] sm:$0xff]
    %v2085 = vld [vmem:[#allocation8 + $0x18c8] sm:$0xff]
    %v2086 = vld [vmem:[#allocation8 + $0x18d0] sm:$0xff]
    %v2087 = vld [vmem:[#allocation8 + $0x18d8] sm:$0xff]
    %v2088 = vld [vmem:[#allocation8 + $0x18e0] sm:$0xff]
    %v2089 = vld [vmem:[#allocation8 + $0x18e8] sm:$0xff]
    %v2090 = vld [vmem:[#allocation8 + $0x18f0] sm:$0xff]
    %v2091 = vld [vmem:[#allocation8 + $0x18f8] sm:$0xff]
    %v2092 = vld [vmem:[#allocation8 + $0x1900] sm:$0xff]
    %v2093 = vld [vmem:[#allocation8 + $0x1908] sm:$0xff]
    %v2094 = vld [vmem:[#allocation8 + $0x1910] sm:$0xff]
    %v2095 = vld [vmem:[#allocation8 + $0x1918] sm:$0xff]
    %v2096 = vld [vmem:[#allocation8 + $0x1920] sm:$0xff]
    %v2097 = vld [vmem:[#allocation8 + $0x1928] sm:$0xff]
    %v2098 = vld [vmem:[#allocation8 + $0x1930] sm:$0xff]
    %v2099 = vld [vmem:[#allocation8 + $0x1938] sm:$0xff]
    %v2100 = vld [vmem:[#allocation8 + $0x1940] sm:$0xff]
    %v2101 = vld [vmem:[#allocation8 + $0x1948] sm:$0xff]
    %v2102 = vld [vmem:[#allocation8 + $0x1950] sm:$0xff]
    %v2103 = vld [vmem:[#allocation8 + $0x1958] sm:$0xff]
    %v2104 = vld [vmem:[#allocation8 + $0x1960] sm:$0xff]
    %v2105 = vld [vmem:[#allocation8 + $0x1968] sm:$0xff]
    %v2106 = vld [vmem:[#allocation8 + $0x1970] sm:$0xff]
    %v2107 = vld [vmem:[#allocation8 + $0x1978] sm:$0xff]
    %v2108 = vld [vmem:[#allocation8 + $0x1980] sm:$0xff]
    %v2109 = vld [vmem:[#allocation8 + $0x1988] sm:$0xff]
    %v2110 = vld [vmem:[#allocation8 + $0x1990] sm:$0xff]
    %v2111 = vld [vmem:[#allocation8 + $0x1998] sm:$0xff]
    %v2112 = vld [vmem:[#allocation8 + $0x19a0] sm:$0xff]
    %v2113 = vld [vmem:[#allocation8 + $0x19a8] sm:$0xff]
    %v2114 = vld [vmem:[#allocation8 + $0x19b0] sm:$0xff]
    %v2115 = vld [vmem:[#allocation8 + $0x19b8] sm:$0xff]
    %v2116 = vld [vmem:[#allocation8 + $0x19c0] sm:$0xff]
    %v2117 = vld [vmem:[#allocation8 + $0x19c8] sm:$0xff]
    %v2118 = vld [vmem:[#allocation8 + $0x19d0] sm:$0xff]
    %v2119 = vld [vmem:[#allocation8 + $0x19d8] sm:$0xff]
    %v2120 = vld [vmem:[#allocation8 + $0x19e0] sm:$0xff]
    %v2121 = vld [vmem:[#allocation8 + $0x19e8] sm:$0xff]
    %v2122 = vld [vmem:[#allocation8 + $0x19f0] sm:$0xff]
    %v2123 = vld [vmem:[#allocation8 + $0x19f8] sm:$0xff]
    %v2124 = vld [vmem:[#allocation8 + $0x1a00] sm:$0xff]
    %v2125 = vld [vmem:[#allocation8 + $0x1a08] sm:$0xff]
    %v2126 = vld [vmem:[#allocation8 + $0x1a10] sm:$0xff]
    %v2127 = vld [vmem:[#allocation8 + $0x1a18] sm:$0xff]
    %v2128 = vld [vmem:[#allocation8 + $0x1a20] sm:$0xff]
    %v2129 = vld [vmem:[#allocation8 + $0x1a28] sm:$0xff]
    %v2130 = vld [vmem:[#allocation8 + $0x1a30] sm:$0xff]
    %v2131 = vld [vmem:[#allocation8 + $0x1a38] sm:$0xff]
    %v2132 = vld [vmem:[#allocation8 + $0x1a40] sm:$0xff]
    %v2133 = vld [vmem:[#allocation8 + $0x1a48] sm:$0xff]
    %v2134 = vld [vmem:[#allocation8 + $0x1a50] sm:$0xff]
    %v2135 = vld [vmem:[#allocation8 + $0x1a58] sm:$0xff]
    %v2136 = vld [vmem:[#allocation8 + $0x1a60] sm:$0xff]
    %v2137 = vld [vmem:[#allocation8 + $0x1a68] sm:$0xff]
    %v2138 = vld [vmem:[#allocation8 + $0x1a70] sm:$0xff]
    %v2139 = vld [vmem:[#allocation8 + $0x1a78] sm:$0xff]
    %v2140 = vld [vmem:[#allocation8 + $0x1a80] sm:$0xff]
    %v2141 = vld [vmem:[#allocation8 + $0x1a88] sm:$0xff]
    %v2142 = vld [vmem:[#allocation8 + $0x1a90] sm:$0xff]
    %v2143 = vld [vmem:[#allocation8 + $0x1a98] sm:$0xff]
    %v2144 = vld [vmem:[#allocation8 + $0x1aa0] sm:$0xff]
    %v2145 = vld [vmem:[#allocation8 + $0x1aa8] sm:$0xff]
    %v2146 = vld [vmem:[#allocation8 + $0x1ab0] sm:$0xff]
    %v2147 = vld [vmem:[#allocation8 + $0x1ab8] sm:$0xff]
    %v2148 = vld [vmem:[#allocation8 + $0x1ac0] sm:$0xff]
    %v2149 = vld [vmem:[#allocation8 + $0x1ac8] sm:$0xff]
    %v2150 = vld [vmem:[#allocation8 + $0x1ad0] sm:$0xff]
    %v2151 = vld [vmem:[#allocation8 + $0x1ad8] sm:$0xff]
    %v2152 = vld [vmem:[#allocation8 + $0x1ae0] sm:$0xff]
    %v2153 = vld [vmem:[#allocation8 + $0x1ae8] sm:$0xff]
    %v2154 = vld [vmem:[#allocation8 + $0x1af0] sm:$0xff]
    %v2155 = vld [vmem:[#allocation8 + $0x1af8] sm:$0xff]
    %v2156 = vld [vmem:[#allocation8 + $0x1b00] sm:$0xff]
    %v2157 = vld [vmem:[#allocation8 + $0x1b08] sm:$0xff]
    %v2158 = vld [vmem:[#allocation8 + $0x1b10] sm:$0xff]
    %v2159 = vld [vmem:[#allocation8 + $0x1b18] sm:$0xff]
    %v2160 = vld [vmem:[#allocation8 + $0x1b20] sm:$0xff]
    %v2161 = vld [vmem:[#allocation8 + $0x1b28] sm:$0xff]
    %v2162 = vld [vmem:[#allocation8 + $0x1b30] sm:$0xff]
    %v2163 = vld [vmem:[#allocation8 + $0x1b38] sm:$0xff]
    %v2164 = vld [vmem:[#allocation8 + $0x1b40] sm:$0xff]
    %v2165 = vld [vmem:[#allocation8 + $0x1b48] sm:$0xff]
    %v2166 = vld [vmem:[#allocation8 + $0x1b50] sm:$0xff]
    %v2167 = vld [vmem:[#allocation8 + $0x1b58] sm:$0xff]
    %v2168 = vld [vmem:[#allocation8 + $0x1b60] sm:$0xff]
    %v2169 = vld [vmem:[#allocation8 + $0x1b68] sm:$0xff]
    %v2170 = vld [vmem:[#allocation8 + $0x1b70] sm:$0xff]
    %v2171 = vld [vmem:[#allocation8 + $0x1b78] sm:$0xff]
    %v2172 = vld [vmem:[#allocation8 + $0x1b80] sm:$0xff]
    %v2173 = vld [vmem:[#allocation8 + $0x1b88] sm:$0xff]
    %v2174 = vld [vmem:[#allocation8 + $0x1b90] sm:$0xff]
    %v2175 = vld [vmem:[#allocation8 + $0x1b98] sm:$0xff]
    %v2176 = vld [vmem:[#allocation8 + $0x1ba0] sm:$0xff]
    %v2177 = vld [vmem:[#allocation8 + $0x1ba8] sm:$0xff]
    %v2178 = vld [vmem:[#allocation8 + $0x1bb0] sm:$0xff]
    %v2179 = vld [vmem:[#allocation8 + $0x1bb8] sm:$0xff]
    %v2180 = vld [vmem:[#allocation8 + $0x1bc0] sm:$0xff]
    %v2181 = vld [vmem:[#allocation8 + $0x1bc8] sm:$0xff]
    %v2182 = vld [vmem:[#allocation8 + $0x1bd0] sm:$0xff]
    %v2183 = vld [vmem:[#allocation8 + $0x1bd8] sm:$0xff]
    %v2184 = vld [vmem:[#allocation8 + $0x1be0] sm:$0xff]
    %v2185 = vld [vmem:[#allocation8 + $0x1be8] sm:$0xff]
    %v2186 = vld [vmem:[#allocation8 + $0x1bf0] sm:$0xff]
    %v2187 = vld [vmem:[#allocation8 + $0x1bf8] sm:$0xff]
    %v2188 = vld [vmem:[#allocation8 + $0x1c00] sm:$0xff]
    %v2189 = vld [vmem:[#allocation8 + $0x1c08] sm:$0xff]
    %v2190 = vld [vmem:[#allocation8 + $0x1c10] sm:$0xff]
    %v2191 = vld [vmem:[#allocation8 + $0x1c18] sm:$0xff]
    %v2192 = vld [vmem:[#allocation8 + $0x1c20] sm:$0xff]
    %v2193 = vld [vmem:[#allocation8 + $0x1c28] sm:$0xff]
    %v2194 = vld [vmem:[#allocation8 + $0x1c30] sm:$0xff]
    %v2195 = vld [vmem:[#allocation8 + $0x1c38] sm:$0xff]
    %v2196 = vld [vmem:[#allocation8 + $0x1c40] sm:$0xff]
    %v2197 = vld [vmem:[#allocation8 + $0x1c48] sm:$0xff]
    %v2198 = vld [vmem:[#allocation8 + $0x1c50] sm:$0xff]
    %v2199 = vld [vmem:[#allocation8 + $0x1c58] sm:$0xff]
    %v2200 = vld [vmem:[#allocation8 + $0x1c60] sm:$0xff]
    %v2201 = vld [vmem:[#allocation8 + $0x1c68] sm:$0xff]
    %v2202 = vld [vmem:[#allocation8 + $0x1c70] sm:$0xff]
    %v2203 = vld [vmem:[#allocation8 + $0x1c78] sm:$0xff]
    %v2204 = vld [vmem:[#allocation8 + $0x1c80] sm:$0xff]
    %v2205 = vld [vmem:[#allocation8 + $0x1c88] sm:$0xff]
    %v2206 = vld [vmem:[#allocation8 + $0x1c90] sm:$0xff]
    %v2207 = vld [vmem:[#allocation8 + $0x1c98] sm:$0xff]
    %v2208 = vld [vmem:[#allocation8 + $0x1ca0] sm:$0xff]
    %v2209 = vld [vmem:[#allocation8 + $0x1ca8] sm:$0xff]
    %v2210 = vld [vmem:[#allocation8 + $0x1cb0] sm:$0xff]
    %v2211 = vld [vmem:[#allocation8 + $0x1cb8] sm:$0xff]
    %v2212 = vld [vmem:[#allocation8 + $0x1cc0] sm:$0xff]
    %v2213 = vld [vmem:[#allocation8 + $0x1cc8] sm:$0xff]
    %v2214 = vld [vmem:[#allocation8 + $0x1cd0] sm:$0xff]
    %v2215 = vld [vmem:[#allocation8 + $0x1cd8] sm:$0xff]
    %v2216 = vld [vmem:[#allocation8 + $0x1ce0] sm:$0xff]
    %v2217 = vld [vmem:[#allocation8 + $0x1ce8] sm:$0xff]
    %v2218 = vld [vmem:[#allocation8 + $0x1cf0] sm:$0xff]
    %v2219 = vld [vmem:[#allocation8 + $0x1cf8] sm:$0xff]
    %v2220 = vld [vmem:[#allocation8 + $0x1d00] sm:$0xff]
    %v2221 = vld [vmem:[#allocation8 + $0x1d08] sm:$0xff]
    %v2222 = vld [vmem:[#allocation8 + $0x1d10] sm:$0xff]
    %v2223 = vld [vmem:[#allocation8 + $0x1d18] sm:$0xff]
    %v2224 = vld [vmem:[#allocation8 + $0x1d20] sm:$0xff]
    %v2225 = vld [vmem:[#allocation8 + $0x1d28] sm:$0xff]
    %v2226 = vld [vmem:[#allocation8 + $0x1d30] sm:$0xff]
    %v2227 = vld [vmem:[#allocation8 + $0x1d38] sm:$0xff]
    %v2228 = vld [vmem:[#allocation8 + $0x1d40] sm:$0xff]
    %v2229 = vld [vmem:[#allocation8 + $0x1d48] sm:$0xff]
    %v2230 = vld [vmem:[#allocation8 + $0x1d50] sm:$0xff]
    %v2231 = vld [vmem:[#allocation8 + $0x1d58] sm:$0xff]
    %v2232 = vld [vmem:[#allocation8 + $0x1d60] sm:$0xff]
    %v2233 = vld [vmem:[#allocation8 + $0x1d68] sm:$0xff]
    %v2234 = vld [vmem:[#allocation8 + $0x1d70] sm:$0xff]
    %v2235 = vld [vmem:[#allocation8 + $0x1d78] sm:$0xff]
    %v2236 = vld [vmem:[#allocation8 + $0x1d80] sm:$0xff]
    %v2237 = vld [vmem:[#allocation8 + $0x1d88] sm:$0xff]
    %v2238 = vld [vmem:[#allocation8 + $0x1d90] sm:$0xff]
    %v2239 = vld [vmem:[#allocation8 + $0x1d98] sm:$0xff]
    %v2240 = vld [vmem:[#allocation8 + $0x1da0] sm:$0xff]
    %v2241 = vld [vmem:[#allocation8 + $0x1da8] sm:$0xff]
    %v2242 = vld [vmem:[#allocation8 + $0x1db0] sm:$0xff]
    %v2243 = vld [vmem:[#allocation8 + $0x1db8] sm:$0xff]
    %v2244 = vld [vmem:[#allocation8 + $0x1dc0] sm:$0xff]
    %v2245 = vld [vmem:[#allocation8 + $0x1dc8] sm:$0xff]
    %v2246 = vld [vmem:[#allocation8 + $0x1dd0] sm:$0xff]
    %v2247 = vld [vmem:[#allocation8 + $0x1dd8] sm:$0xff]
    %v2248 = vld [vmem:[#allocation8 + $0x1de0] sm:$0xff]
    %v2249 = vld [vmem:[#allocation8 + $0x1de8] sm:$0xff]
    %v2250 = vld [vmem:[#allocation8 + $0x1df0] sm:$0xff]
    %v2251 = vld [vmem:[#allocation8 + $0x1df8] sm:$0xff]
    %v2252 = vld [vmem:[#allocation8 + $0x1e00] sm:$0xff]
    %v2253 = vld [vmem:[#allocation8 + $0x1e08] sm:$0xff]
    %v2254 = vld [vmem:[#allocation8 + $0x1e10] sm:$0xff]
    %v2255 = vld [vmem:[#allocation8 + $0x1e18] sm:$0xff]
    %v2256 = vld [vmem:[#allocation8 + $0x1e20] sm:$0xff]
    %v2257 = vld [vmem:[#allocation8 + $0x1e28] sm:$0xff]
    %v2258 = vld [vmem:[#allocation8 + $0x1e30] sm:$0xff]
    %v2259 = vld [vmem:[#allocation8 + $0x1e38] sm:$0xff]
    %v2260 = vld [vmem:[#allocation8 + $0x1e40] sm:$0xff]
    %v2261 = vld [vmem:[#allocation8 + $0x1e48] sm:$0xff]
    %v2262 = vld [vmem:[#allocation8 + $0x1e50] sm:$0xff]
    %v2263 = vld [vmem:[#allocation8 + $0x1e58] sm:$0xff]
    %v2264 = vld [vmem:[#allocation8 + $0x1e60] sm:$0xff]
    %v2265 = vld [vmem:[#allocation8 + $0x1e68] sm:$0xff]
    %v2266 = vld [vmem:[#allocation8 + $0x1e70] sm:$0xff]
    %v2267 = vld [vmem:[#allocation8 + $0x1e78] sm:$0xff]
    %v2268 = vld [vmem:[#allocation8 + $0x1e80] sm:$0xff]
    %v2269 = vld [vmem:[#allocation8 + $0x1e88] sm:$0xff]
    %v2270 = vld [vmem:[#allocation8 + $0x1e90] sm:$0xff]
    %v2271 = vld [vmem:[#allocation8 + $0x1e98] sm:$0xff]
    %v2272 = vld [vmem:[#allocation8 + $0x1ea0] sm:$0xff]
    %v2273 = vld [vmem:[#allocation8 + $0x1ea8] sm:$0xff]
    %v2274 = vld [vmem:[#allocation8 + $0x1eb0] sm:$0xff]
    %v2275 = vld [vmem:[#allocation8 + $0x1eb8] sm:$0xff]
    %v2276 = vld [vmem:[#allocation8 + $0x1ec0] sm:$0xff]
    %v2277 = vld [vmem:[#allocation8 + $0x1ec8] sm:$0xff]
    %v2278 = vld [vmem:[#allocation8 + $0x1ed0] sm:$0xff]
    %v2279 = vld [vmem:[#allocation8 + $0x1ed8] sm:$0xff]
    %v2280 = vld [vmem:[#allocation8 + $0x1ee0] sm:$0xff]
    %v2281 = vld [vmem:[#allocation8 + $0x1ee8] sm:$0xff]
    %v2282 = vld [vmem:[#allocation8 + $0x1ef0] sm:$0xff]
    %v2283 = vld [vmem:[#allocation8 + $0x1ef8] sm:$0xff]
    %v2284 = vld [vmem:[#allocation8 + $0x1f00] sm:$0xff]
    %v2285 = vld [vmem:[#allocation8 + $0x1f08] sm:$0xff]
    %v2286 = vld [vmem:[#allocation8 + $0x1f10] sm:$0xff]
    %v2287 = vld [vmem:[#allocation8 + $0x1f18] sm:$0xff]
    %v2288 = vld [vmem:[#allocation8 + $0x1f20] sm:$0xff]
    %v2289 = vld [vmem:[#allocation8 + $0x1f28] sm:$0xff]
    %v2290 = vld [vmem:[#allocation8 + $0x1f30] sm:$0xff]
    %v2291 = vld [vmem:[#allocation8 + $0x1f38] sm:$0xff]
    %v2292 = vld [vmem:[#allocation8 + $0x1f40] sm:$0xff]
    %v2293 = vld [vmem:[#allocation8 + $0x1f48] sm:$0xff]
    %v2294 = vld [vmem:[#allocation8 + $0x1f50] sm:$0xff]
    %v2295 = vld [vmem:[#allocation8 + $0x1f58] sm:$0xff]
    %v2296 = vld [vmem:[#allocation8 + $0x1f60] sm:$0xff]
    %v2297 = vld [vmem:[#allocation8 + $0x1f68] sm:$0xff]
    %v2298 = vld [vmem:[#allocation8 + $0x1f70] sm:$0xff]
    %v2299 = vld [vmem:[#allocation8 + $0x1f78] sm:$0xff]
    %v2300 = vld [vmem:[#allocation8 + $0x1f80] sm:$0xff]
    %v2301 = vld [vmem:[#allocation8 + $0x1f88] sm:$0xff]
    %v2302 = vld [vmem:[#allocation8 + $0x1f90] sm:$0xff]
    %v2303 = vld [vmem:[#allocation8 + $0x1f98] sm:$0xff]
    %v2304 = vld [vmem:[#allocation8 + $0x1fa0] sm:$0xff]
    %v2305 = vld [vmem:[#allocation8 + $0x1fa8] sm:$0xff]
    %v2306 = vld [vmem:[#allocation8 + $0x1fb0] sm:$0xff]
    %v2307 = vld [vmem:[#allocation8 + $0x1fb8] sm:$0xff]
    %v2308 = vld [vmem:[#allocation8 + $0x1fc0] sm:$0xff]
    %v2309 = vld [vmem:[#allocation8 + $0x1fc8] sm:$0xff]
    %v2310 = vld [vmem:[#allocation8 + $0x1fd0] sm:$0xff]
    %v2311 = vld [vmem:[#allocation8 + $0x1fd8] sm:$0xff]
    %v2312 = vld [vmem:[#allocation8 + $0x1fe0] sm:$0xff]
    %v2313 = vld [vmem:[#allocation8 + $0x1fe8] sm:$0xff]
    %v2314 = vld [vmem:[#allocation8 + $0x1ff0] sm:$0xff]
    %v2315 = vld [vmem:[#allocation8 + $0x1ff8] sm:$0xff]
    %2316 = vmatprep.subr.mxu0 %v1293
    %2317 = vmatpush1.msra.mxu0 %v1292
    %2318 = vmatprep.subr.mxu0 %v1297
    %2319 = vmatpush1.msra.mxu0 %v1296
    %2320 = vmatprep.subr.mxu0 %v1301
    %2321 = vmatpush1.msra.mxu0 %v1300
    %2322 = vmatprep.subr.mxu0 %v1305
    %2323 = vmatpush1.msra.mxu0 %v1304
    %2324 = vmatprep.subr.mxu0 %v1309
    %2325 = vmatpush1.msra.mxu0 %v1308
    %2326 = vmatprep.subr.mxu0 %v1313
    %2327 = vmatpush1.msra.mxu0 %v1312
    %2328 = vmatprep.subr.mxu0 %v1317
    %2329 = vmatpush1.msra.mxu0 %v1316
    %2330 = vmatprep.subr.mxu0 %v1321
    %2331 = vmatpush1.msra.mxu0 %v1320
    %2332 = vmatprep.subr.mxu0 %v1325
    %2333 = vmatpush1.msra.mxu0 %v1324
    %2334 = vmatprep.subr.mxu0 %v1329
    %2335 = vmatpush1.msra.mxu0 %v1328
    %2336 = vmatprep.subr.mxu0 %v1333
    %2337 = vmatpush1.msra.mxu0 %v1332
    %2338 = vmatprep.subr.mxu0 %v1337
    %2339 = vmatpush1.msra.mxu0 %v1336
    %2340 = vmatprep.subr.mxu0 %v1341
    %2341 = vmatpush1.msra.mxu0 %v1340
    %2342 = vmatprep.subr.mxu0 %v1345
    %2343 = vmatpush1.msra.mxu0 %v1344
    %2344 = vmatprep.subr.mxu0 %v1349
    %2345 = vmatpush1.msra.mxu0 %v1348
    %2346 = vmatprep.subr.mxu0 %v1353
    %2347 = vmatpush1.msra.mxu0 %v1352
    %2348 = vmatprep.subr.mxu0 %v1357
    %2349 = vmatpush1.msra.mxu0 %v1356
    %2350 = vmatprep.subr.mxu0 %v1361
    %2351 = vmatpush1.msra.mxu0 %v1360
    %2352 = vmatprep.subr.mxu0 %v1365
    %2353 = vmatpush1.msra.mxu0 %v1364
    %2354 = vmatprep.subr.mxu0 %v1369
    %2355 = vmatpush1.msra.mxu0 %v1368
    %2356 = vmatprep.subr.mxu0 %v1373
    %2357 = vmatpush1.msra.mxu0 %v1372
    %2358 = vmatprep.subr.mxu0 %v1377
    %2359 = vmatpush1.msra.mxu0 %v1376
    %2360 = vmatprep.subr.mxu0 %v1381
    %2361 = vmatpush1.msra.mxu0 %v1380
    %2362 = vmatprep.subr.mxu0 %v1385
    %2363 = vmatpush1.msra.mxu0 %v1384
    %2364 = vmatprep.subr.mxu0 %v1389
    %2365 = vmatpush1.msra.mxu0 %v1388
    %2366 = vmatprep.subr.mxu0 %v1393
    %2367 = vmatpush1.msra.mxu0 %v1392
    %2368 = vmatprep.subr.mxu0 %v1397
    %2369 = vmatpush1.msra.mxu0 %v1396
    %2370 = vmatprep.subr.mxu0 %v1401
    %2371 = vmatpush1.msra.mxu0 %v1400
    %2372 = vmatprep.subr.mxu0 %v1405
    %2373 = vmatpush1.msra.mxu0 %v1404
    %2374 = vmatprep.subr.mxu0 %v1409
    %2375 = vmatpush1.msra.mxu0 %v1408
    %2376 = vmatprep.subr.mxu0 %v1413
    %2377 = vmatpush1.msra.mxu0 %v1412
    %2378 = vmatprep.subr.mxu0 %v1417
    %2379 = vmatpush1.msra.mxu0 %v1416
    %2380 = vmatprep.mubr.f32.mxu0 %v1261
    %2381 = vmatmul.mubr.f32.gmra.mrb[0].mxu0 %v1260
    %v2382 = vpop.f32.mrb[0].mxu0
    %v2383 = vadd.f32 0.0, %v2382
    %v2384 = vpop.f32.mrb[0].mxu0
    %v2385 = vadd.f32 0.0, %v2384
    %2386 = vmatprep.mubr.f32.mxu0 %v1277
    %2387 = vmatmul.mubr.f32.gmra.mrb[0].mxu0 %v1276
    %v2388 = vpop.f32.mrb[0].mxu0
    %v2389 = vadd.f32 0.0, %v2388
    %v2390 = vpop.f32.mrb[0].mxu0
    %v2391 = vadd.f32 0.0, %v2390
    %2392 = vdwg.mxu0
    %2393 = vmatprep.subr.mxu0 %v1421
    %2394 = vmatpush1.msra.mxu0 %v1420
    %2395 = vmatprep.subr.mxu0 %v1425
    %2396 = vmatpush1.msra.mxu0 %v1424
    %2397 = vmatprep.subr.mxu0 %v1429
    %2398 = vmatpush1.msra.mxu0 %v1428
    %2399 = vmatprep.subr.mxu0 %v1433
    %2400 = vmatpush1.msra.mxu0 %v1432
    %2401 = vmatprep.subr.mxu0 %v1437
    %2402 = vmatpush1.msra.mxu0 %v1436
    %2403 = vmatprep.subr.mxu0 %v1441
    %2404 = vmatpush1.msra.mxu0 %v1440
    %2405 = vmatprep.subr.mxu0 %v1445
    %2406 = vmatpush1.msra.mxu0 %v1444
    %2407 = vmatprep.subr.mxu0 %v1449
    %2408 = vmatpush1.msra.mxu0 %v1448
    %2409 = vmatprep.subr.mxu0 %v1453
    %2410 = vmatpush1.msra.mxu0 %v1452
    %2411 = vmatprep.subr.mxu0 %v1457
    %2412 = vmatpush1.msra.mxu0 %v1456
    %2413 = vmatprep.subr.mxu0 %v1461
    %2414 = vmatpush1.msra.mxu0 %v1460
    %2415 = vmatprep.subr.mxu0 %v1465
    %2416 = vmatpush1.msra.mxu0 %v1464
    %2417 = vmatprep.subr.mxu0 %v1469
    %2418 = vmatpush1.msra.mxu0 %v1468
    %2419 = vmatprep.subr.mxu0 %v1473
    %2420 = vmatpush1.msra.mxu0 %v1472
    %2421 = vmatprep.subr.mxu0 %v1477
    %2422 = vmatpush1.msra.mxu0 %v1476
    %2423 = vmatprep.subr.mxu0 %v1481
    %2424 = vmatpush1.msra.mxu0 %v1480
    %2425 = vmatprep.subr.mxu0 %v1485
    %2426 = vmatpush1.msra.mxu0 %v1484
    %2427 = vmatprep.subr.mxu0 %v1489
    %2428 = vmatpush1.msra.mxu0 %v1488
    %2429 = vmatprep.subr.mxu0 %v1493
    %2430 = vmatpush1.msra.mxu0 %v1492
    %2431 = vmatprep.subr.mxu0 %v1497
    %2432 = vmatpush1.msra.mxu0 %v1496
    %2433 = vmatprep.subr.mxu0 %v1501
    %2434 = vmatpush1.msra.mxu0 %v1500
    %2435 = vmatprep.subr.mxu0 %v1505
    %2436 = vmatpush1.msra.mxu0 %v1504
    %2437 = vmatprep.subr.mxu0 %v1509
    %2438 = vmatpush1.msra.mxu0 %v1508
    %2439 = vmatprep.subr.mxu0 %v1513
    %2440 = vmatpush1.msra.mxu0 %v1512
    %2441 = vmatprep.subr.mxu0 %v1517
    %2442 = vmatpush1.msra.mxu0 %v1516
    %2443 = vmatprep.subr.mxu0 %v1521
    %2444 = vmatpush1.msra.mxu0 %v1520
    %2445 = vmatprep.subr.mxu0 %v1525
    %2446 = vmatpush1.msra.mxu0 %v1524
    %2447 = vmatprep.subr.mxu0 %v1529
    %2448 = vmatpush1.msra.mxu0 %v1528
    %2449 = vmatprep.subr.mxu0 %v1533
    %2450 = vmatpush1.msra.mxu0 %v1532
    %2451 = vmatprep.subr.mxu0 %v1537
    %2452 = vmatpush1.msra.mxu0 %v1536
    %2453 = vmatprep.subr.mxu0 %v1541
    %2454 = vmatpush1.msra.mxu0 %v1540
    %2455 = vmatprep.subr.mxu0 %v1545
    %2456 = vmatpush1.msra.mxu0 %v1544
    %2457 = vmatprep.mubr.f32.mxu0 %v1263
    %2458 = vmatmul.mubr.f32.gmra.mrb[0].mxu0 %v1262
    %v2459 = vpop.f32.mrb[0].mxu0
    %v2460 = vadd.f32 %v2383, %v2459
    %v2461 = vpop.f32.mrb[0].mxu0
    %v2462 = vadd.f32 %v2385, %v2461
    %2463 = vmatprep.mubr.f32.mxu0 %v1279
    %2464 = vmatmul.mubr.f32.gmra.mrb[0].mxu0 %v1278
    %v2465 = vpop.f32.mrb[0].mxu0
    %v2466 = vadd.f32 %v2389, %v2465
    %v2467 = vpop.f32.mrb[0].mxu0
    %v2468 = vadd.f32 %v2391, %v2467
    %2469 = vdwg.mxu0
    %2470 = vmatprep.subr.mxu0 %v1549
    %2471 = vmatpush1.msra.mxu0 %v1548
    %2472 = vmatprep.subr.mxu0 %v1553
    %2473 = vmatpush1.msra.mxu0 %v1552
    %2474 = vmatprep.subr.mxu0 %v1557
    %2475 = vmatpush1.msra.mxu0 %v1556
    %2476 = vmatprep.subr.mxu0 %v1561
    %2477 = vmatpush1.msra.mxu0 %v1560
    %2478 = vmatprep.subr.mxu0 %v1565
    %2479 = vmatpush1.msra.mxu0 %v1564
    %2480 = vmatprep.subr.mxu0 %v1569
    %2481 = vmatpush1.msra.mxu0 %v1568
    %2482 = vmatprep.subr.mxu0 %v1573
    %2483 = vmatpush1.msra.mxu0 %v1572
    %2484 = vmatprep.subr.mxu0 %v1577
    %2485 = vmatpush1.msra.mxu0 %v1576
    %2486 = vmatprep.subr.mxu0 %v1581
    %2487 = vmatpush1.msra.mxu0 %v1580
    %2488 = vmatprep.subr.mxu0 %v1585
    %2489 = vmatpush1.msra.mxu0 %v1584
    %2490 = vmatprep.subr.mxu0 %v1589
    %2491 = vmatpush1.msra.mxu0 %v1588
    %2492 = vmatprep.subr.mxu0 %v1593
    %2493 = vmatpush1.msra.mxu0 %v1592
    %2494 = vmatprep.subr.mxu0 %v1597
    %2495 = vmatpush1.msra.mxu0 %v1596
    %2496 = vmatprep.subr.mxu0 %v1601
    %2497 = vmatpush1.msra.mxu0 %v1600
    %2498 = vmatprep.subr.mxu0 %v1605
    %2499 = vmatpush1.msra.mxu0 %v1604
    %2500 = vmatprep.subr.mxu0 %v1609
    %2501 = vmatpush1.msra.mxu0 %v1608
    %2502 = vmatprep.subr.mxu0 %v1613
    %2503 = vmatpush1.msra.mxu0 %v1612
    %2504 = vmatprep.subr.mxu0 %v1617
    %2505 = vmatpush1.msra.mxu0 %v1616
    %2506 = vmatprep.subr.mxu0 %v1621
    %2507 = vmatpush1.msra.mxu0 %v1620
    %2508 = vmatprep.subr.mxu0 %v1625
    %2509 = vmatpush1.msra.mxu0 %v1624
    %2510 = vmatprep.subr.mxu0 %v1629
    %2511 = vmatpush1.msra.mxu0 %v1628
    %2512 = vmatprep.subr.mxu0 %v1633
    %2513 = vmatpush1.msra.mxu0 %v1632
    %2514 = vmatprep.subr.mxu0 %v1637
    %2515 = vmatpush1.msra.mxu0 %v1636
    %2516 = vmatprep.subr.mxu0 %v1641
    %2517 = vmatpush1.msra.mxu0 %v1640
    %2518 = vmatprep.subr.mxu0 %v1645
    %2519 = vmatpush1.msra.mxu0 %v1644
    %2520 = vmatprep.subr.mxu0 %v1649
    %2521 = vmatpush1.msra.mxu0 %v1648
    %2522 = vmatprep.subr.mxu0 %v1653
    %2523 = vmatpush1.msra.mxu0 %v1652
    %2524 = vmatprep.subr.mxu0 %v1657
    %2525 = vmatpush1.msra.mxu0 %v1656
    %2526 = vmatprep.subr.mxu0 %v1661
    %2527 = vmatpush1.msra.mxu0 %v1660
    %2528 = vmatprep.subr.mxu0 %v1665
    %2529 = vmatpush1.msra.mxu0 %v1664
    %2530 = vmatprep.subr.mxu0 %v1669
    %2531 = vmatpush1.msra.mxu0 %v1668
    %2532 = vmatprep.subr.mxu0 %v1673
    %2533 = vmatpush1.msra.mxu0 %v1672
    %2534 = vmatprep.mubr.f32.mxu0 %v1265
    %2535 = vmatmul.mubr.f32.gmra.mrb[0].mxu0 %v1264
    %v2536 = vpop.f32.mrb[0].mxu0
    %v2537 = vadd.f32 %v2460, %v2536
    %v2538 = vpop.f32.mrb[0].mxu0
    %v2539 = vadd.f32 %v2462, %v2538
    %2540 = vmatprep.mubr.f32.mxu0 %v1281
    %2541 = vmatmul.mubr.f32.gmra.mrb[0].mxu0 %v1280
    %v2542 = vpop.f32.mrb[0].mxu0
    %v2543 = vadd.f32 %v2466, %v2542
    %v2544 = vpop.f32.mrb[0].mxu0
    %v2545 = vadd.f32 %v2468, %v2544
    %2546 = vdwg.mxu0
    %2547 = vmatprep.subr.mxu0 %v1677
    %2548 = vmatpush1.msra.mxu0 %v1676
    %2549 = vmatprep.subr.mxu0 %v1681
    %2550 = vmatpush1.msra.mxu0 %v1680
    %2551 = vmatprep.subr.mxu0 %v1685
    %2552 = vmatpush1.msra.mxu0 %v1684
    %2553 = vmatprep.subr.mxu0 %v1689
    %2554 = vmatpush1.msra.mxu0 %v1688
    %2555 = vmatprep.subr.mxu0 %v1693
    %2556 = vmatpush1.msra.mxu0 %v1692
    %2557 = vmatprep.subr.mxu0 %v1697
    %2558 = vmatpush1.msra.mxu0 %v1696
    %2559 = vmatprep.subr.mxu0 %v1701
    %2560 = vmatpush1.msra.mxu0 %v1700
    %2561 = vmatprep.subr.mxu0 %v1705
    %2562 = vmatpush1.msra.mxu0 %v1704
    %2563 = vmatprep.subr.mxu0 %v1709
    %2564 = vmatpush1.msra.mxu0 %v1708
    %2565 = vmatprep.subr.mxu0 %v1713
    %2566 = vmatpush1.msra.mxu0 %v1712
    %2567 = vmatprep.subr.mxu0 %v1717
    %2568 = vmatpush1.msra.mxu0 %v1716
    %2569 = vmatprep.subr.mxu0 %v1721
    %2570 = vmatpush1.msra.mxu0 %v1720
    %2571 = vmatprep.subr.mxu0 %v1725
    %2572 = vmatpush1.msra.mxu0 %v1724
    %2573 = vmatprep.subr.mxu0 %v1729
    %2574 = vmatpush1.msra.mxu0 %v1728
    %2575 = vmatprep.subr.mxu0 %v1733
    %2576 = vmatpush1.msra.mxu0 %v1732
    %2577 = vmatprep.subr.mxu0 %v1737
    %2578 = vmatpush1.msra.mxu0 %v1736
    %2579 = vmatprep.subr.mxu0 %v1741
    %2580 = vmatpush1.msra.mxu0 %v1740
    %2581 = vmatprep.subr.mxu0 %v1745
    %2582 = vmatpush1.msra.mxu0 %v1744
    %2583 = vmatprep.subr.mxu0 %v1749
    %2584 = vmatpush1.msra.mxu0 %v1748
    %2585 = vmatprep.subr.mxu0 %v1753
    %2586 = vmatpush1.msra.mxu0 %v1752
    %2587 = vmatprep.subr.mxu0 %v1757
    %2588 = vmatpush1.msra.mxu0 %v1756
    %2589 = vmatprep.subr.mxu0 %v1761
    %2590 = vmatpush1.msra.mxu0 %v1760
    %2591 = vmatprep.subr.mxu0 %v1765
    %2592 = vmatpush1.msra.mxu0 %v1764
    %2593 = vmatprep.subr.mxu0 %v1769
    %2594 = vmatpush1.msra.mxu0 %v1768
    %2595 = vmatprep.subr.mxu0 %v1773
    %2596 = vmatpush1.msra.mxu0 %v1772
    %2597 = vmatprep.subr.mxu0 %v1777
    %2598 = vmatpush1.msra.mxu0 %v1776
    %2599 = vmatprep.subr.mxu0 %v1781
    %2600 = vmatpush1.msra.mxu0 %v1780
    %2601 = vmatprep.subr.mxu0 %v1785
    %2602 = vmatpush1.msra.mxu0 %v1784
    %2603 = vmatprep.subr.mxu0 %v1789
    %2604 = vmatpush1.msra.mxu0 %v1788
    %2605 = vmatprep.subr.mxu0 %v1793
    %2606 = vmatpush1.msra.mxu0 %v1792
    %2607 = vmatprep.subr.mxu0 %v1797
    %2608 = vmatpush1.msra.mxu0 %v1796
    %2609 = vmatprep.subr.mxu0 %v1801
    %2610 = vmatpush1.msra.mxu0 %v1800
    %2611 = vmatprep.mubr.f32.mxu0 %v1267
    %2612 = vmatmul.mubr.f32.gmra.mrb[0].mxu0 %v1266
    %v2613 = vpop.f32.mrb[0].mxu0
    %v2614 = vadd.f32 %v2537, %v2613
    %v2615 = vpop.f32.mrb[0].mxu0
    %v2616 = vadd.f32 %v2539, %v2615
    %2617 = vmatprep.mubr.f32.mxu0 %v1283
    %2618 = vmatmul.mubr.f32.gmra.mrb[0].mxu0 %v1282
    %v2619 = vpop.f32.mrb[0].mxu0
    %v2620 = vadd.f32 %v2543, %v2619
    %v2621 = vpop.f32.mrb[0].mxu0
    %v2622 = vadd.f32 %v2545, %v2621
    %2623 = vdwg.mxu0
    %2624 = vmatprep.subr.mxu0 %v1805
    %2625 = vmatpush1.msra.mxu0 %v1804
    %2626 = vmatprep.subr.mxu0 %v1809
    %2627 = vmatpush1.msra.mxu0 %v1808
    %2628 = vmatprep.subr.mxu0 %v1813
    %2629 = vmatpush1.msra.mxu0 %v1812
    %2630 = vmatprep.subr.mxu0 %v1817
    %2631 = vmatpush1.msra.mxu0 %v1816
    %2632 = vmatprep.subr.mxu0 %v1821
    %2633 = vmatpush1.msra.mxu0 %v1820
    %2634 = vmatprep.subr.mxu0 %v1825
    %2635 = vmatpush1.msra.mxu0 %v1824
    %2636 = vmatprep.subr.mxu0 %v1829
    %2637 = vmatpush1.msra.mxu0 %v1828
    %2638 = vmatprep.subr.mxu0 %v1833
    %2639 = vmatpush1.msra.mxu0 %v1832
    %2640 = vmatprep.subr.mxu0 %v1837
    %2641 = vmatpush1.msra.mxu0 %v1836
    %2642 = vmatprep.subr.mxu0 %v1841
    %2643 = vmatpush1.msra.mxu0 %v1840
    %2644 = vmatprep.subr.mxu0 %v1845
    %2645 = vmatpush1.msra.mxu0 %v1844
    %2646 = vmatprep.subr.mxu0 %v1849
    %2647 = vmatpush1.msra.mxu0 %v1848
    %2648 = vmatprep.subr.mxu0 %v1853
    %2649 = vmatpush1.msra.mxu0 %v1852
    %2650 = vmatprep.subr.mxu0 %v1857
    %2651 = vmatpush1.msra.mxu0 %v1856
    %2652 = vmatprep.subr.mxu0 %v1861
    %2653 = vmatpush1.msra.mxu0 %v1860
    %2654 = vmatprep.subr.mxu0 %v1865
    %2655 = vmatpush1.msra.mxu0 %v1864
    %2656 = vmatprep.subr.mxu0 %v1869
    %2657 = vmatpush1.msra.mxu0 %v1868
    %2658 = vmatprep.subr.mxu0 %v1873
    %2659 = vmatpush1.msra.mxu0 %v1872
    %2660 = vmatprep.subr.mxu0 %v1877
    %2661 = vmatpush1.msra.mxu0 %v1876
    %2662 = vmatprep.subr.mxu0 %v1881
    %2663 = vmatpush1.msra.mxu0 %v1880
    %2664 = vmatprep.subr.mxu0 %v1885
    %2665 = vmatpush1.msra.mxu0 %v1884
    %2666 = vmatprep.subr.mxu0 %v1889
    %2667 = vmatpush1.msra.mxu0 %v1888
    %2668 = vmatprep.subr.mxu0 %v1893
    %2669 = vmatpush1.msra.mxu0 %v1892
    %2670 = vmatprep.subr.mxu0 %v1897
    %2671 = vmatpush1.msra.mxu0 %v1896
    %2672 = vmatprep.subr.mxu0 %v1901
    %2673 = vmatpush1.msra.mxu0 %v1900
    %2674 = vmatprep.subr.mxu0 %v1905
    %2675 = vmatpush1.msra.mxu0 %v1904
    %2676 = vmatprep.subr.mxu0 %v1909
    %2677 = vmatpush1.msra.mxu0 %v1908
    %2678 = vmatprep.subr.mxu0 %v1913
    %2679 = vmatpush1.msra.mxu0 %v1912
    %2680 = vmatprep.subr.mxu0 %v1917
    %2681 = vmatpush1.msra.mxu0 %v1916
    %2682 = vmatprep.subr.mxu0 %v1921
    %2683 = vmatpush1.msra.mxu0 %v1920
    %2684 = vmatprep.subr.mxu0 %v1925
    %2685 = vmatpush1.msra.mxu0 %v1924
    %2686 = vmatprep.subr.mxu0 %v1929
    %2687 = vmatpush1.msra.mxu0 %v1928
    %2688 = vmatprep.mubr.f32.mxu0 %v1269
    %2689 = vmatmul.mubr.f32.gmra.mrb[0].mxu0 %v1268
    %v2690 = vpop.f32.mrb[0].mxu0
    %v2691 = vadd.f32 %v2614, %v2690
    %v2692 = vpop.f32.mrb[0].mxu0
    %v2693 = vadd.f32 %v2616, %v2692
    %2694 = vmatprep.mubr.f32.mxu0 %v1285
    %2695 = vmatmul.mubr.f32.gmra.mrb[0].mxu0 %v1284
    %v2696 = vpop.f32.mrb[0].mxu0
    %v2697 = vadd.f32 %v2620, %v2696
    %v2698 = vpop.f32.mrb[0].mxu0
    %v2699 = vadd.f32 %v2622, %v2698
    %2700 = vdwg.mxu0
    %2701 = vmatprep.subr.mxu0 %v1933
    %2702 = vmatpush1.msra.mxu0 %v1932
    %2703 = vmatprep.subr.mxu0 %v1937
    %2704 = vmatpush1.msra.mxu0 %v1936
    %2705 = vmatprep.subr.mxu0 %v1941
    %2706 = vmatpush1.msra.mxu0 %v1940
    %2707 = vmatprep.subr.mxu0 %v1945
    %2708 = vmatpush1.msra.mxu0 %v1944
    %2709 = vmatprep.subr.mxu0 %v1949
    %2710 = vmatpush1.msra.mxu0 %v1948
    %2711 = vmatprep.subr.mxu0 %v1953
    %2712 = vmatpush1.msra.mxu0 %v1952
    %2713 = vmatprep.subr.mxu0 %v1957
    %2714 = vmatpush1.msra.mxu0 %v1956
    %2715 = vmatprep.subr.mxu0 %v1961
    %2716 = vmatpush1.msra.mxu0 %v1960
    %2717 = vmatprep.subr.mxu0 %v1965
    %2718 = vmatpush1.msra.mxu0 %v1964
    %2719 = vmatprep.subr.mxu0 %v1969
    %2720 = vmatpush1.msra.mxu0 %v1968
    %2721 = vmatprep.subr.mxu0 %v1973
    %2722 = vmatpush1.msra.mxu0 %v1972
    %2723 = vmatprep.subr.mxu0 %v1977
    %2724 = vmatpush1.msra.mxu0 %v1976
    %2725 = vmatprep.subr.mxu0 %v1981
    %2726 = vmatpush1.msra.mxu0 %v1980
    %2727 = vmatprep.subr.mxu0 %v1985
    %2728 = vmatpush1.msra.mxu0 %v1984
    %2729 = vmatprep.subr.mxu0 %v1989
    %2730 = vmatpush1.msra.mxu0 %v1988
    %2731 = vmatprep.subr.mxu0 %v1993
    %2732 = vmatpush1.msra.mxu0 %v1992
    %2733 = vmatprep.subr.mxu0 %v1997
    %2734 = vmatpush1.msra.mxu0 %v1996
    %2735 = vmatprep.subr.mxu0 %v2001
    %2736 = vmatpush1.msra.mxu0 %v2000
    %2737 = vmatprep.subr.mxu0 %v2005
    %2738 = vmatpush1.msra.mxu0 %v2004
    %2739 = vmatprep.subr.mxu0 %v2009
    %2740 = vmatpush1.msra.mxu0 %v2008
    %2741 = vmatprep.subr.mxu0 %v2013
    %2742 = vmatpush1.msra.mxu0 %v2012
    %2743 = vmatprep.subr.mxu0 %v2017
    %2744 = vmatpush1.msra.mxu0 %v2016
    %2745 = vmatprep.subr.mxu0 %v2021
    %2746 = vmatpush1.msra.mxu0 %v2020
    %2747 = vmatprep.subr.mxu0 %v2025
    %2748 = vmatpush1.msra.mxu0 %v2024
    %2749 = vmatprep.subr.mxu0 %v2029
    %2750 = vmatpush1.msra.mxu0 %v2028
    %2751 = vmatprep.subr.mxu0 %v2033
    %2752 = vmatpush1.msra.mxu0 %v2032
    %2753 = vmatprep.subr.mxu0 %v2037
    %2754 = vmatpush1.msra.mxu0 %v2036
    %2755 = vmatprep.subr.mxu0 %v2041
    %2756 = vmatpush1.msra.mxu0 %v2040
    %2757 = vmatprep.subr.mxu0 %v2045
    %2758 = vmatpush1.msra.mxu0 %v2044
    %2759 = vmatprep.subr.mxu0 %v2049
    %2760 = vmatpush1.msra.mxu0 %v2048
    %2761 = vmatprep.subr.mxu0 %v2053
    %2762 = vmatpush1.msra.mxu0 %v2052
    %2763 = vmatprep.subr.mxu0 %v2057
    %2764 = vmatpush1.msra.mxu0 %v2056
    %2765 = vmatprep.mubr.f32.mxu0 %v1271
    %2766 = vmatmul.mubr.f32.gmra.mrb[0].mxu0 %v1270
    %v2767 = vpop.f32.mrb[0].mxu0
    %v2768 = vadd.f32 %v2691, %v2767
    %v2769 = vpop.f32.mrb[0].mxu0
    %v2770 = vadd.f32 %v2693, %v2769
    %2771 = vmatprep.mubr.f32.mxu0 %v1287
    %2772 = vmatmul.mubr.f32.gmra.mrb[0].mxu0 %v1286
    %v2773 = vpop.f32.mrb[0].mxu0
    %v2774 = vadd.f32 %v2697, %v2773
    %v2775 = vpop.f32.mrb[0].mxu0
    %v2776 = vadd.f32 %v2699, %v2775
    %2777 = vdwg.mxu0
    %2778 = vmatprep.subr.mxu0 %v2061
    %2779 = vmatpush1.msra.mxu0 %v2060
    %2780 = vmatprep.subr.mxu0 %v2065
    %2781 = vmatpush1.msra.mxu0 %v2064
    %2782 = vmatprep.subr.mxu0 %v2069
    %2783 = vmatpush1.msra.mxu0 %v2068
    %2784 = vmatprep.subr.mxu0 %v2073
    %2785 = vmatpush1.msra.mxu0 %v2072
    %2786 = vmatprep.subr.mxu0 %v2077
    %2787 = vmatpush1.msra.mxu0 %v2076
    %2788 = vmatprep.subr.mxu0 %v2081
    %2789 = vmatpush1.msra.mxu0 %v2080
    %2790 = vmatprep.subr.mxu0 %v2085
    %2791 = vmatpush1.msra.mxu0 %v2084
    %2792 = vmatprep.subr.mxu0 %v2089
    %2793 = vmatpush1.msra.mxu0 %v2088
    %2794 = vmatprep.subr.mxu0 %v2093
    %2795 = vmatpush1.msra.mxu0 %v2092
    %2796 = vmatprep.subr.mxu0 %v2097
    %2797 = vmatpush1.msra.mxu0 %v2096
    %2798 = vmatprep.subr.mxu0 %v2101
    %2799 = vmatpush1.msra.mxu0 %v2100
    %2800 = vmatprep.subr.mxu0 %v2105
    %2801 = vmatpush1.msra.mxu0 %v2104
    %2802 = vmatprep.subr.mxu0 %v2109
    %2803 = vmatpush1.msra.mxu0 %v2108
    %2804 = vmatprep.subr.mxu0 %v2113
    %2805 = vmatpush1.msra.mxu0 %v2112
    %2806 = vmatprep.subr.mxu0 %v2117
    %2807 = vmatpush1.msra.mxu0 %v2116
    %2808 = vmatprep.subr.mxu0 %v2121
    %2809 = vmatpush1.msra.mxu0 %v2120
    %2810 = vmatprep.subr.mxu0 %v2125
    %2811 = vmatpush1.msra.mxu0 %v2124
    %2812 = vmatprep.subr.mxu0 %v2129
    %2813 = vmatpush1.msra.mxu0 %v2128
    %2814 = vmatprep.subr.mxu0 %v2133
    %2815 = vmatpush1.msra.mxu0 %v2132
    %2816 = vmatprep.subr.mxu0 %v2137
    %2817 = vmatpush1.msra.mxu0 %v2136
    %2818 = vmatprep.subr.mxu0 %v2141
    %2819 = vmatpush1.msra.mxu0 %v2140
    %2820 = vmatprep.subr.mxu0 %v2145
    %2821 = vmatpush1.msra.mxu0 %v2144
    %2822 = vmatprep.subr.mxu0 %v2149
    %2823 = vmatpush1.msra.mxu0 %v2148
    %2824 = vmatprep.subr.mxu0 %v2153
    %2825 = vmatpush1.msra.mxu0 %v2152
    %2826 = vmatprep.subr.mxu0 %v2157
    %2827 = vmatpush1.msra.mxu0 %v2156
    %2828 = vmatprep.subr.mxu0 %v2161
    %2829 = vmatpush1.msra.mxu0 %v2160
    %2830 = vmatprep.subr.mxu0 %v2165
    %2831 = vmatpush1.msra.mxu0 %v2164
    %2832 = vmatprep.subr.mxu0 %v2169
    %2833 = vmatpush1.msra.mxu0 %v2168
    %2834 = vmatprep.subr.mxu0 %v2173
    %2835 = vmatpush1.msra.mxu0 %v2172
    %2836 = vmatprep.subr.mxu0 %v2177
    %2837 = vmatpush1.msra.mxu0 %v2176
    %2838 = vmatprep.subr.mxu0 %v2181
    %2839 = vmatpush1.msra.mxu0 %v2180
    %2840 = vmatprep.subr.mxu0 %v2185
    %2841 = vmatpush1.msra.mxu0 %v2184
    %2842 = vmatprep.mubr.f32.mxu0 %v1273
    %2843 = vmatmul.mubr.f32.gmra.mrb[0].mxu0 %v1272
    %v2844 = vpop.f32.mrb[0].mxu0
    %v2845 = vadd.f32 %v2768, %v2844
    %v2846 = vpop.f32.mrb[0].mxu0
    %v2847 = vadd.f32 %v2770, %v2846
    %2848 = vmatprep.mubr.f32.mxu0 %v1289
    %2849 = vmatmul.mubr.f32.gmra.mrb[0].mxu0 %v1288
    %v2850 = vpop.f32.mrb[0].mxu0
    %v2851 = vadd.f32 %v2774, %v2850
    %v2852 = vpop.f32.mrb[0].mxu0
    %v2853 = vadd.f32 %v2776, %v2852
    %2854 = vdwg.mxu0
    %2855 = vmatprep.subr.mxu0 %v2189
    %2856 = vmatpush1.msra.mxu0 %v2188
    %2857 = vmatprep.subr.mxu0 %v2193
    %2858 = vmatpush1.msra.mxu0 %v2192
    %2859 = vmatprep.subr.mxu0 %v2197
    %2860 = vmatpush1.msra.mxu0 %v2196
    %2861 = vmatprep.subr.mxu0 %v2201
    %2862 = vmatpush1.msra.mxu0 %v2200
    %2863 = vmatprep.subr.mxu0 %v2205
    %2864 = vmatpush1.msra.mxu0 %v2204
    %2865 = vmatprep.subr.mxu0 %v2209
    %2866 = vmatpush1.msra.mxu0 %v2208
    %2867 = vmatprep.subr.mxu0 %v2213
    %2868 = vmatpush1.msra.mxu0 %v2212
    %2869 = vmatprep.subr.mxu0 %v2217
    %2870 = vmatpush1.msra.mxu0 %v2216
    %2871 = vmatprep.subr.mxu0 %v2221
    %2872 = vmatpush1.msra.mxu0 %v2220
    %2873 = vmatprep.subr.mxu0 %v2225
    %2874 = vmatpush1.msra.mxu0 %v2224
    %2875 = vmatprep.subr.mxu0 %v2229
    %2876 = vmatpush1.msra.mxu0 %v2228
    %2877 = vmatprep.subr.mxu0 %v2233
    %2878 = vmatpush1.msra.mxu0 %v2232
    %2879 = vmatprep.subr.mxu0 %v2237
    %2880 = vmatpush1.msra.mxu0 %v2236
    %2881 = vmatprep.subr.mxu0 %v2241
    %2882 = vmatpush1.msra.mxu0 %v2240
    %2883 = vmatprep.subr.mxu0 %v2245
    %2884 = vmatpush1.msra.mxu0 %v2244
    %2885 = vmatprep.subr.mxu0 %v2249
    %2886 = vmatpush1.msra.mxu0 %v2248
    %2887 = vmatprep.subr.mxu0 %v2253
    %2888 = vmatpush1.msra.mxu0 %v2252
    %2889 = vmatprep.subr.mxu0 %v2257
    %2890 = vmatpush1.msra.mxu0 %v2256
    %2891 = vmatprep.subr.mxu0 %v2261
    %2892 = vmatpush1.msra.mxu0 %v2260
    %2893 = vmatprep.subr.mxu0 %v2265
    %2894 = vmatpush1.msra.mxu0 %v2264
    %2895 = vmatprep.subr.mxu0 %v2269
    %2896 = vmatpush1.msra.mxu0 %v2268
    %2897 = vmatprep.subr.mxu0 %v2273
    %2898 = vmatpush1.msra.mxu0 %v2272
    %2899 = vmatprep.subr.mxu0 %v2277
    %2900 = vmatpush1.msra.mxu0 %v2276
    %2901 = vmatprep.subr.mxu0 %v2281
    %2902 = vmatpush1.msra.mxu0 %v2280
    %2903 = vmatprep.subr.mxu0 %v2285
    %2904 = vmatpush1.msra.mxu0 %v2284
    %2905 = vmatprep.subr.mxu0 %v2289
    %2906 = vmatpush1.msra.mxu0 %v2288
    %2907 = vmatprep.subr.mxu0 %v2293
    %2908 = vmatpush1.msra.mxu0 %v2292
    %2909 = vmatprep.subr.mxu0 %v2297
    %2910 = vmatpush1.msra.mxu0 %v2296
    %2911 = vmatprep.subr.mxu0 %v2301
    %2912 = vmatpush1.msra.mxu0 %v2300
    %2913 = vmatprep.subr.mxu0 %v2305
    %2914 = vmatpush1.msra.mxu0 %v2304
    %2915 = vmatprep.subr.mxu0 %v2309
    %2916 = vmatpush1.msra.mxu0 %v2308
    %2917 = vmatprep.subr.mxu0 %v2313
    %2918 = vmatpush1.msra.mxu0 %v2312
    %2919 = vmatprep.mubr.f32.mxu0 %v1275
    %2920 = vmatmul.mubr.f32.gmra.mrb[0].mxu0 %v1274
    %v2921 = vpop.f32.mrb[0].mxu0
    %v2922 = vadd.f32 %v2845, %v2921
    %v2923 = vpop.f32.mrb[0].mxu0
    %v2924 = vadd.f32 %v2847, %v2923
    %2925 = vmatprep.mubr.f32.mxu0 %v1291
    %2926 = vmatmul.mubr.f32.gmra.mrb[0].mxu0 %v1290
    %v2927 = vpop.f32.mrb[0].mxu0
    %v2928 = vadd.f32 %v2851, %v2927
    %v2929 = vpop.f32.mrb[0].mxu0
    %v2930 = vadd.f32 %v2853, %v2929
    %2931 = vdwg.mxu0
    %2932 = vmatprep.subr.mxu0 %v1295
    %2933 = vmatpush1.msra.mxu0 %v1294
    %2934 = vmatprep.subr.mxu0 %v1299
    %2935 = vmatpush1.msra.mxu0 %v1298
    %2936 = vmatprep.subr.mxu0 %v1303
    %2937 = vmatpush1.msra.mxu0 %v1302
    %2938 = vmatprep.subr.mxu0 %v1307
    %2939 = vmatpush1.msra.mxu0 %v1306
    %2940 = vmatprep.subr.mxu0 %v1311
    %2941 = vmatpush1.msra.mxu0 %v1310
    %2942 = vmatprep.subr.mxu0 %v1315
    %2943 = vmatpush1.msra.mxu0 %v1314
    %2944 = vmatprep.subr.mxu0 %v1319
    %2945 = vmatpush1.msra.mxu0 %v1318
    %2946 = vmatprep.subr.mxu0 %v1323
    %2947 = vmatpush1.msra.mxu0 %v1322
    %2948 = vmatprep.subr.mxu0 %v1327
    %2949 = vmatpush1.msra.mxu0 %v1326
    %2950 = vmatprep.subr.mxu0 %v1331
    %2951 = vmatpush1.msra.mxu0 %v1330
    %2952 = vmatprep.subr.mxu0 %v1335
    %2953 = vmatpush1.msra.mxu0 %v1334
    %2954 = vmatprep.subr.mxu0 %v1339
    %2955 = vmatpush1.msra.mxu0 %v1338
    %2956 = vmatprep.subr.mxu0 %v1343
    %2957 = vmatpush1.msra.mxu0 %v1342
    %2958 = vmatprep.subr.mxu0 %v1347
    %2959 = vmatpush1.msra.mxu0 %v1346
    %2960 = vmatprep.subr.mxu0 %v1351
    %2961 = vmatpush1.msra.mxu0 %v1350
    %2962 = vmatprep.subr.mxu0 %v1355
    %2963 = vmatpush1.msra.mxu0 %v1354
    %2964 = vmatprep.subr.mxu0 %v1359
    %2965 = vmatpush1.msra.mxu0 %v1358
    %2966 = vmatprep.subr.mxu0 %v1363
    %2967 = vmatpush1.msra.mxu0 %v1362
    %2968 = vmatprep.subr.mxu0 %v1367
    %2969 = vmatpush1.msra.mxu0 %v1366
    %2970 = vmatprep.subr.mxu0 %v1371
    %2971 = vmatpush1.msra.mxu0 %v1370
    %2972 = vmatprep.subr.mxu0 %v1375
    %2973 = vmatpush1.msra.mxu0 %v1374
    %2974 = vmatprep.subr.mxu0 %v1379
    %2975 = vmatpush1.msra.mxu0 %v1378
    %2976 = vmatprep.subr.mxu0 %v1383
    %2977 = vmatpush1.msra.mxu0 %v1382
    %2978 = vmatprep.subr.mxu0 %v1387
    %2979 = vmatpush1.msra.mxu0 %v1386
    %2980 = vmatprep.subr.mxu0 %v1391
    %2981 = vmatpush1.msra.mxu0 %v1390
    %2982 = vmatprep.subr.mxu0 %v1395
    %2983 = vmatpush1.msra.mxu0 %v1394
    %2984 = vmatprep.subr.mxu0 %v1399
    %2985 = vmatpush1.msra.mxu0 %v1398
    %2986 = vmatprep.subr.mxu0 %v1403
    %2987 = vmatpush1.msra.mxu0 %v1402
    %2988 = vmatprep.subr.mxu0 %v1407
    %2989 = vmatpush1.msra.mxu0 %v1406
    %2990 = vmatprep.subr.mxu0 %v1411
    %2991 = vmatpush1.msra.mxu0 %v1410
    %2992 = vmatprep.subr.mxu0 %v1415
    %2993 = vmatpush1.msra.mxu0 %v1414
    %2994 = vmatprep.subr.mxu0 %v1419
    %2995 = vmatpush1.msra.mxu0 %v1418
    %2996 = vmatprep.mubr.f32.mxu0 %v1261
    %2997 = vmatmul.mubr.f32.gmra.mrb[0].mxu0 %v1260
    %v2998 = vpop.f32.mrb[0].mxu0
    %v2999 = vadd.f32 0.0, %v2998
    %v3000 = vpop.f32.mrb[0].mxu0
    %v3001 = vadd.f32 0.0, %v3000
    %3002 = vmatprep.mubr.f32.mxu0 %v1277
    %3003 = vmatmul.mubr.f32.gmra.mrb[0].mxu0 %v1276
    %v3004 = vpop.f32.mrb[0].mxu0
    %v3005 = vadd.f32 0.0, %v3004
    %v3006 = vpop.f32.mrb[0].mxu0
    %v3007 = vadd.f32 0.0, %v3006
    %3008 = vdwg.mxu0
    %3009 = vmatprep.subr.mxu0 %v1423
    %3010 = vmatpush1.msra.mxu0 %v1422
    %3011 = vmatprep.subr.mxu0 %v1427
    %3012 = vmatpush1.msra.mxu0 %v1426
    %3013 = vmatprep.subr.mxu0 %v1431
    %3014 = vmatpush1.msra.mxu0 %v1430
    %3015 = vmatprep.subr.mxu0 %v1435
    %3016 = vmatpush1.msra.mxu0 %v1434
    %3017 = vmatprep.subr.mxu0 %v1439
    %3018 = vmatpush1.msra.mxu0 %v1438
    %3019 = vmatprep.subr.mxu0 %v1443
    %3020 = vmatpush1.msra.mxu0 %v1442
    %3021 = vmatprep.subr.mxu0 %v1447
    %3022 = vmatpush1.msra.mxu0 %v1446
    %3023 = vmatprep.subr.mxu0 %v1451
    %3024 = vmatpush1.msra.mxu0 %v1450
    %3025 = vmatprep.subr.mxu0 %v1455
    %3026 = vmatpush1.msra.mxu0 %v1454
    %3027 = vmatprep.subr.mxu0 %v1459
    %3028 = vmatpush1.msra.mxu0 %v1458
    %3029 = vmatprep.subr.mxu0 %v1463
    %3030 = vmatpush1.msra.mxu0 %v1462
    %3031 = vmatprep.subr.mxu0 %v1467
    %3032 = vmatpush1.msra.mxu0 %v1466
    %3033 = vmatprep.subr.mxu0 %v1471
    %3034 = vmatpush1.msra.mxu0 %v1470
    %3035 = vmatprep.subr.mxu0 %v1475
    %3036 = vmatpush1.msra.mxu0 %v1474
    %3037 = vmatprep.subr.mxu0 %v1479
    %3038 = vmatpush1.msra.mxu0 %v1478
    %3039 = vmatprep.subr.mxu0 %v1483
    %3040 = vmatpush1.msra.mxu0 %v1482
    %3041 = vmatprep.subr.mxu0 %v1487
    %3042 = vmatpush1.msra.mxu0 %v1486
    %3043 = vmatprep.subr.mxu0 %v1491
    %3044 = vmatpush1.msra.mxu0 %v1490
    %3045 = vmatprep.subr.mxu0 %v1495
    %3046 = vmatpush1.msra.mxu0 %v1494
    %3047 = vmatprep.subr.mxu0 %v1499
    %3048 = vmatpush1.msra.mxu0 %v1498
    %3049 = vmatprep.subr.mxu0 %v1503
    %3050 = vmatpush1.msra.mxu0 %v1502
    %3051 = vmatprep.subr.mxu0 %v1507
    %3052 = vmatpush1.msra.mxu0 %v1506
    %3053 = vmatprep.subr.mxu0 %v1511
    %3054 = vmatpush1.msra.mxu0 %v1510
    %3055 = vmatprep.subr.mxu0 %v1515
    %3056 = vmatpush1.msra.mxu0 %v1514
    %3057 = vmatprep.subr.mxu0 %v1519
    %3058 = vmatpush1.msra.mxu0 %v1518
    %3059 = vmatprep.subr.mxu0 %v1523
    %3060 = vmatpush1.msra.mxu0 %v1522
    %3061 = vmatprep.subr.mxu0 %v1527
    %3062 = vmatpush1.msra.mxu0 %v1526
    %3063 = vmatprep.subr.mxu0 %v1531
    %3064 = vmatpush1.msra.mxu0 %v1530
    %3065 = vmatprep.subr.mxu0 %v1535
    %3066 = vmatpush1.msra.mxu0 %v1534
    %3067 = vmatprep.subr.mxu0 %v1539
    %3068 = vmatpush1.msra.mxu0 %v1538
    %3069 = vmatprep.subr.mxu0 %v1543
    %3070 = vmatpush1.msra.mxu0 %v1542
    %3071 = vmatprep.subr.mxu0 %v1547
    %3072 = vmatpush1.msra.mxu0 %v1546
    %3073 = vmatprep.mubr.f32.mxu0 %v1263
    %3074 = vmatmul.mubr.f32.gmra.mrb[0].mxu0 %v1262
    %v3075 = vpop.f32.mrb[0].mxu0
    %v3076 = vadd.f32 %v2999, %v3075
    %v3077 = vpop.f32.mrb[0].mxu0
    %v3078 = vadd.f32 %v3001, %v3077
    %3079 = vmatprep.mubr.f32.mxu0 %v1279
    %3080 = vmatmul.mubr.f32.gmra.mrb[0].mxu0 %v1278
    %v3081 = vpop.f32.mrb[0].mxu0
    %v3082 = vadd.f32 %v3005, %v3081
    %v3083 = vpop.f32.mrb[0].mxu0
    %v3084 = vadd.f32 %v3007, %v3083
    %3085 = vdwg.mxu0
    %3086 = vmatprep.subr.mxu0 %v1551
    %3087 = vmatpush1.msra.mxu0 %v1550
    %3088 = vmatprep.subr.mxu0 %v1555
    %3089 = vmatpush1.msra.mxu0 %v1554
    %3090 = vmatprep.subr.mxu0 %v1559
    %3091 = vmatpush1.msra.mxu0 %v1558
    %3092 = vmatprep.subr.mxu0 %v1563
    %3093 = vmatpush1.msra.mxu0 %v1562
    %3094 = vmatprep.subr.mxu0 %v1567
    %3095 = vmatpush1.msra.mxu0 %v1566
    %3096 = vmatprep.subr.mxu0 %v1571
    %3097 = vmatpush1.msra.mxu0 %v1570
    %3098 = vmatprep.subr.mxu0 %v1575
    %3099 = vmatpush1.msra.mxu0 %v1574
    %3100 = vmatprep.subr.mxu0 %v1579
    %3101 = vmatpush1.msra.mxu0 %v1578
    %3102 = vmatprep.subr.mxu0 %v1583
    %3103 = vmatpush1.msra.mxu0 %v1582
    %3104 = vmatprep.subr.mxu0 %v1587
    %3105 = vmatpush1.msra.mxu0 %v1586
    %3106 = vmatprep.subr.mxu0 %v1591
    %3107 = vmatpush1.msra.mxu0 %v1590
    %3108 = vmatprep.subr.mxu0 %v1595
    %3109 = vmatpush1.msra.mxu0 %v1594
    %3110 = vmatprep.subr.mxu0 %v1599
    %3111 = vmatpush1.msra.mxu0 %v1598
    %3112 = vmatprep.subr.mxu0 %v1603
    %3113 = vmatpush1.msra.mxu0 %v1602
    %3114 = vmatprep.subr.mxu0 %v1607
    %3115 = vmatpush1.msra.mxu0 %v1606
    %3116 = vmatprep.subr.mxu0 %v1611
    %3117 = vmatpush1.msra.mxu0 %v1610
    %3118 = vmatprep.subr.mxu0 %v1615
    %3119 = vmatpush1.msra.mxu0 %v1614
    %3120 = vmatprep.subr.mxu0 %v1619
    %3121 = vmatpush1.msra.mxu0 %v1618
    %3122 = vmatprep.subr.mxu0 %v1623
    %3123 = vmatpush1.msra.mxu0 %v1622
    %3124 = vmatprep.subr.mxu0 %v1627
    %3125 = vmatpush1.msra.mxu0 %v1626
    %3126 = vmatprep.subr.mxu0 %v1631
    %3127 = vmatpush1.msra.mxu0 %v1630
    %3128 = vmatprep.subr.mxu0 %v1635
    %3129 = vmatpush1.msra.mxu0 %v1634
    %3130 = vmatprep.subr.mxu0 %v1639
    %3131 = vmatpush1.msra.mxu0 %v1638
    %3132 = vmatprep.subr.mxu0 %v1643
    %3133 = vmatpush1.msra.mxu0 %v1642
    %3134 = vmatprep.subr.mxu0 %v1647
    %3135 = vmatpush1.msra.mxu0 %v1646
    %3136 = vmatprep.subr.mxu0 %v1651
    %3137 = vmatpush1.msra.mxu0 %v1650
    %3138 = vmatprep.subr.mxu0 %v1655
    %3139 = vmatpush1.msra.mxu0 %v1654
    %3140 = vmatprep.subr.mxu0 %v1659
    %3141 = vmatpush1.msra.mxu0 %v1658
    %3142 = vmatprep.subr.mxu0 %v1663
    %3143 = vmatpush1.msra.mxu0 %v1662
    %3144 = vmatprep.subr.mxu0 %v1667
    %3145 = vmatpush1.msra.mxu0 %v1666
    %3146 = vmatprep.subr.mxu0 %v1671
    %3147 = vmatpush1.msra.mxu0 %v1670
    %3148 = vmatprep.subr.mxu0 %v1675
    %3149 = vmatpush1.msra.mxu0 %v1674
    %3150 = vmatprep.mubr.f32.mxu0 %v1265
    %3151 = vmatmul.mubr.f32.gmra.mrb[0].mxu0 %v1264
    %v3152 = vpop.f32.mrb[0].mxu0
    %v3153 = vadd.f32 %v3076, %v3152
    %v3154 = vpop.f32.mrb[0].mxu0
    %v3155 = vadd.f32 %v3078, %v3154
    %3156 = vmatprep.mubr.f32.mxu0 %v1281
    %3157 = vmatmul.mubr.f32.gmra.mrb[0].mxu0 %v1280
    %v3158 = vpop.f32.mrb[0].mxu0
    %v3159 = vadd.f32 %v3082, %v3158
    %v3160 = vpop.f32.mrb[0].mxu0
    %v3161 = vadd.f32 %v3084, %v3160
    %3162 = vdwg.mxu0
    %3163 = vmatprep.subr.mxu0 %v1679
    %3164 = vmatpush1.msra.mxu0 %v1678
    %3165 = vmatprep.subr.mxu0 %v1683
    %3166 = vmatpush1.msra.mxu0 %v1682
    %3167 = vmatprep.subr.mxu0 %v1687
    %3168 = vmatpush1.msra.mxu0 %v1686
    %3169 = vmatprep.subr.mxu0 %v1691
    %3170 = vmatpush1.msra.mxu0 %v1690
    %3171 = vmatprep.subr.mxu0 %v1695
    %3172 = vmatpush1.msra.mxu0 %v1694
    %3173 = vmatprep.subr.mxu0 %v1699
    %3174 = vmatpush1.msra.mxu0 %v1698
    %3175 = vmatprep.subr.mxu0 %v1703
    %3176 = vmatpush1.msra.mxu0 %v1702
    %3177 = vmatprep.subr.mxu0 %v1707
    %3178 = vmatpush1.msra.mxu0 %v1706
    %3179 = vmatprep.subr.mxu0 %v1711
    %3180 = vmatpush1.msra.mxu0 %v1710
    %3181 = vmatprep.subr.mxu0 %v1715
    %3182 = vmatpush1.msra.mxu0 %v1714
    %3183 = vmatprep.subr.mxu0 %v1719
    %3184 = vmatpush1.msra.mxu0 %v1718
    %3185 = vmatprep.subr.mxu0 %v1723
    %3186 = vmatpush1.msra.mxu0 %v1722
    %3187 = vmatprep.subr.mxu0 %v1727
    %3188 = vmatpush1.msra.mxu0 %v1726
    %3189 = vmatprep.subr.mxu0 %v1731
    %3190 = vmatpush1.msra.mxu0 %v1730
    %3191 = vmatprep.subr.mxu0 %v1735
    %3192 = vmatpush1.msra.mxu0 %v1734
    %3193 = vmatprep.subr.mxu0 %v1739
    %3194 = vmatpush1.msra.mxu0 %v1738
    %3195 = vmatprep.subr.mxu0 %v1743
    %3196 = vmatpush1.msra.mxu0 %v1742
    %3197 = vmatprep.subr.mxu0 %v1747
    %3198 = vmatpush1.msra.mxu0 %v1746
    %3199 = vmatprep.subr.mxu0 %v1751
    %3200 = vmatpush1.msra.mxu0 %v1750
    %3201 = vmatprep.subr.mxu0 %v1755
    %3202 = vmatpush1.msra.mxu0 %v1754
    %3203 = vmatprep.subr.mxu0 %v1759
    %3204 = vmatpush1.msra.mxu0 %v1758
    %3205 = vmatprep.subr.mxu0 %v1763
    %3206 = vmatpush1.msra.mxu0 %v1762
    %3207 = vmatprep.subr.mxu0 %v1767
    %3208 = vmatpush1.msra.mxu0 %v1766
    %3209 = vmatprep.subr.mxu0 %v1771
    %3210 = vmatpush1.msra.mxu0 %v1770
    %3211 = vmatprep.subr.mxu0 %v1775
    %3212 = vmatpush1.msra.mxu0 %v1774
    %3213 = vmatprep.subr.mxu0 %v1779
    %3214 = vmatpush1.msra.mxu0 %v1778
    %3215 = vmatprep.subr.mxu0 %v1783
    %3216 = vmatpush1.msra.mxu0 %v1782
    %3217 = vmatprep.subr.mxu0 %v1787
    %3218 = vmatpush1.msra.mxu0 %v1786
    %3219 = vmatprep.subr.mxu0 %v1791
    %3220 = vmatpush1.msra.mxu0 %v1790
    %3221 = vmatprep.subr.mxu0 %v1795
    %3222 = vmatpush1.msra.mxu0 %v1794
    %3223 = vmatprep.subr.mxu0 %v1799
    %3224 = vmatpush1.msra.mxu0 %v1798
    %3225 = vmatprep.subr.mxu0 %v1803
    %3226 = vmatpush1.msra.mxu0 %v1802
    %3227 = vmatprep.mubr.f32.mxu0 %v1267
    %3228 = vmatmul.mubr.f32.gmra.mrb[0].mxu0 %v1266
    %v3229 = vpop.f32.mrb[0].mxu0
    %v3230 = vadd.f32 %v3153, %v3229
    %v3231 = vpop.f32.mrb[0].mxu0
    %v3232 = vadd.f32 %v3155, %v3231
    %3233 = vmatprep.mubr.f32.mxu0 %v1283
    %3234 = vmatmul.mubr.f32.gmra.mrb[0].mxu0 %v1282
    %v3235 = vpop.f32.mrb[0].mxu0
    %v3236 = vadd.f32 %v3159, %v3235
    %v3237 = vpop.f32.mrb[0].mxu0
    %v3238 = vadd.f32 %v3161, %v3237
    %3239 = vdwg.mxu0
    %3240 = vmatprep.subr.mxu0 %v1807
    %3241 = vmatpush1.msra.mxu0 %v1806
    %3242 = vmatprep.subr.mxu0 %v1811
    %3243 = vmatpush1.msra.mxu0 %v1810
    %3244 = vmatprep.subr.mxu0 %v1815
    %3245 = vmatpush1.msra.mxu0 %v1814
    %3246 = vmatprep.subr.mxu0 %v1819
    %3247 = vmatpush1.msra.mxu0 %v1818
    %3248 = vmatprep.subr.mxu0 %v1823
    %3249 = vmatpush1.msra.mxu0 %v1822
    %3250 = vmatprep.subr.mxu0 %v1827
    %3251 = vmatpush1.msra.mxu0 %v1826
    %3252 = vmatprep.subr.mxu0 %v1831
    %3253 = vmatpush1.msra.mxu0 %v1830
    %3254 = vmatprep.subr.mxu0 %v1835
    %3255 = vmatpush1.msra.mxu0 %v1834
    %3256 = vmatprep.subr.mxu0 %v1839
    %3257 = vmatpush1.msra.mxu0 %v1838
    %3258 = vmatprep.subr.mxu0 %v1843
    %3259 = vmatpush1.msra.mxu0 %v1842
    %3260 = vmatprep.subr.mxu0 %v1847
    %3261 = vmatpush1.msra.mxu0 %v1846
    %3262 = vmatprep.subr.mxu0 %v1851
    %3263 = vmatpush1.msra.mxu0 %v1850
    %3264 = vmatprep.subr.mxu0 %v1855
    %3265 = vmatpush1.msra.mxu0 %v1854
    %3266 = vmatprep.subr.mxu0 %v1859
    %3267 = vmatpush1.msra.mxu0 %v1858
    %3268 = vmatprep.subr.mxu0 %v1863
    %3269 = vmatpush1.msra.mxu0 %v1862
    %3270 = vmatprep.subr.mxu0 %v1867
    %3271 = vmatpush1.msra.mxu0 %v1866
    %3272 = vmatprep.subr.mxu0 %v1871
    %3273 = vmatpush1.msra.mxu0 %v1870
    %3274 = vmatprep.subr.mxu0 %v1875
    %3275 = vmatpush1.msra.mxu0 %v1874
    %3276 = vmatprep.subr.mxu0 %v1879
    %3277 = vmatpush1.msra.mxu0 %v1878
    %3278 = vmatprep.subr.mxu0 %v1883
    %3279 = vmatpush1.msra.mxu0 %v1882
    %3280 = vmatprep.subr.mxu0 %v1887
    %3281 = vmatpush1.msra.mxu0 %v1886
    %3282 = vmatprep.subr.mxu0 %v1891
    %3283 = vmatpush1.msra.mxu0 %v1890
    %3284 = vmatprep.subr.mxu0 %v1895
    %3285 = vmatpush1.msra.mxu0 %v1894
    %3286 = vmatprep.subr.mxu0 %v1899
    %3287 = vmatpush1.msra.mxu0 %v1898
    %3288 = vmatprep.subr.mxu0 %v1903
    %3289 = vmatpush1.msra.mxu0 %v1902
    %3290 = vmatprep.subr.mxu0 %v1907
    %3291 = vmatpush1.msra.mxu0 %v1906
    %3292 = vmatprep.subr.mxu0 %v1911
    %3293 = vmatpush1.msra.mxu0 %v1910
    %3294 = vmatprep.subr.mxu0 %v1915
    %3295 = vmatpush1.msra.mxu0 %v1914
    %3296 = vmatprep.subr.mxu0 %v1919
    %3297 = vmatpush1.msra.mxu0 %v1918
    %3298 = vmatprep.subr.mxu0 %v1923
    %3299 = vmatpush1.msra.mxu0 %v1922
    %3300 = vmatprep.subr.mxu0 %v1927
    %3301 = vmatpush1.msra.mxu0 %v1926
    %3302 = vmatprep.subr.mxu0 %v1931
    %3303 = vmatpush1.msra.mxu0 %v1930
    %3304 = vmatprep.mubr.f32.mxu0 %v1269
    %3305 = vmatmul.mubr.f32.gmra.mrb[0].mxu0 %v1268
    %v3306 = vpop.f32.mrb[0].mxu0
    %v3307 = vadd.f32 %v3230, %v3306
    %v3308 = vpop.f32.mrb[0].mxu0
    %v3309 = vadd.f32 %v3232, %v3308
    %3310 = vmatprep.mubr.f32.mxu0 %v1285
    %3311 = vmatmul.mubr.f32.gmra.mrb[0].mxu0 %v1284
    %v3312 = vpop.f32.mrb[0].mxu0
    %v3313 = vadd.f32 %v3236, %v3312
    %v3314 = vpop.f32.mrb[0].mxu0
    %v3315 = vadd.f32 %v3238, %v3314
    %3316 = vdwg.mxu0
    %3317 = vmatprep.subr.mxu0 %v1935
    %3318 = vmatpush1.msra.mxu0 %v1934
    %3319 = vmatprep.subr.mxu0 %v1939
    %3320 = vmatpush1.msra.mxu0 %v1938
    %3321 = vmatprep.subr.mxu0 %v1943
    %3322 = vmatpush1.msra.mxu0 %v1942
    %3323 = vmatprep.subr.mxu0 %v1947
    %3324 = vmatpush1.msra.mxu0 %v1946
    %3325 = vmatprep.subr.mxu0 %v1951
    %3326 = vmatpush1.msra.mxu0 %v1950
    %3327 = vmatprep.subr.mxu0 %v1955
    %3328 = vmatpush1.msra.mxu0 %v1954
    %3329 = vmatprep.subr.mxu0 %v1959
    %3330 = vmatpush1.msra.mxu0 %v1958
    %3331 = vmatprep.subr.mxu0 %v1963
    %3332 = vmatpush1.msra.mxu0 %v1962
    %3333 = vmatprep.subr.mxu0 %v1967
    %3334 = vmatpush1.msra.mxu0 %v1966
    %3335 = vmatprep.subr.mxu0 %v1971
    %3336 = vmatpush1.msra.mxu0 %v1970
    %3337 = vmatprep.subr.mxu0 %v1975
    %3338 = vmatpush1.msra.mxu0 %v1974
    %3339 = vmatprep.subr.mxu0 %v1979
    %3340 = vmatpush1.msra.mxu0 %v1978
    %3341 = vmatprep.subr.mxu0 %v1983
    %3342 = vmatpush1.msra.mxu0 %v1982
    %3343 = vmatprep.subr.mxu0 %v1987
    %3344 = vmatpush1.msra.mxu0 %v1986
    %3345 = vmatprep.subr.mxu0 %v1991
    %3346 = vmatpush1.msra.mxu0 %v1990
    %3347 = vmatprep.subr.mxu0 %v1995
    %3348 = vmatpush1.msra.mxu0 %v1994
    %3349 = vmatprep.subr.mxu0 %v1999
    %3350 = vmatpush1.msra.mxu0 %v1998
    %3351 = vmatprep.subr.mxu0 %v2003
    %3352 = vmatpush1.msra.mxu0 %v2002
    %3353 = vmatprep.subr.mxu0 %v2007
    %3354 = vmatpush1.msra.mxu0 %v2006
    %3355 = vmatprep.subr.mxu0 %v2011
    %3356 = vmatpush1.msra.mxu0 %v2010
    %3357 = vmatprep.subr.mxu0 %v2015
    %3358 = vmatpush1.msra.mxu0 %v2014
    %3359 = vmatprep.subr.mxu0 %v2019
    %3360 = vmatpush1.msra.mxu0 %v2018
    %3361 = vmatprep.subr.mxu0 %v2023
    %3362 = vmatpush1.msra.mxu0 %v2022
    %3363 = vmatprep.subr.mxu0 %v2027
    %3364 = vmatpush1.msra.mxu0 %v2026
    %3365 = vmatprep.subr.mxu0 %v2031
    %3366 = vmatpush1.msra.mxu0 %v2030
    %3367 = vmatprep.subr.mxu0 %v2035
    %3368 = vmatpush1.msra.mxu0 %v2034
    %3369 = vmatprep.subr.mxu0 %v2039
    %3370 = vmatpush1.msra.mxu0 %v2038
    %3371 = vmatprep.subr.mxu0 %v2043
    %3372 = vmatpush1.msra.mxu0 %v2042
    %3373 = vmatprep.subr.mxu0 %v2047
    %3374 = vmatpush1.msra.mxu0 %v2046
    %3375 = vmatprep.subr.mxu0 %v2051
    %3376 = vmatpush1.msra.mxu0 %v2050
    %3377 = vmatprep.subr.mxu0 %v2055
    %3378 = vmatpush1.msra.mxu0 %v2054
    %3379 = vmatprep.subr.mxu0 %v2059
    %3380 = vmatpush1.msra.mxu0 %v2058
    %3381 = vmatprep.mubr.f32.mxu0 %v1271
    %3382 = vmatmul.mubr.f32.gmra.mrb[0].mxu0 %v1270
    %v3383 = vpop.f32.mrb[0].mxu0
    %v3384 = vadd.f32 %v3307, %v3383
    %v3385 = vpop.f32.mrb[0].mxu0
    %v3386 = vadd.f32 %v3309, %v3385
    %3387 = vmatprep.mubr.f32.mxu0 %v1287
    %3388 = vmatmul.mubr.f32.gmra.mrb[0].mxu0 %v1286
    %v3389 = vpop.f32.mrb[0].mxu0
    %v3390 = vadd.f32 %v3313, %v3389
    %v3391 = vpop.f32.mrb[0].mxu0
    %v3392 = vadd.f32 %v3315, %v3391
    %3393 = vdwg.mxu0
    %3394 = vmatprep.subr.mxu0 %v2063
    %3395 = vmatpush1.msra.mxu0 %v2062
    %3396 = vmatprep.subr.mxu0 %v2067
    %3397 = vmatpush1.msra.mxu0 %v2066
    %3398 = vmatprep.subr.mxu0 %v2071
    %3399 = vmatpush1.msra.mxu0 %v2070
    %3400 = vmatprep.subr.mxu0 %v2075
    %3401 = vmatpush1.msra.mxu0 %v2074
    %3402 = vmatprep.subr.mxu0 %v2079
    %3403 = vmatpush1.msra.mxu0 %v2078
    %3404 = vmatprep.subr.mxu0 %v2083
    %3405 = vmatpush1.msra.mxu0 %v2082
    %3406 = vmatprep.subr.mxu0 %v2087
    %3407 = vmatpush1.msra.mxu0 %v2086
    %3408 = vmatprep.subr.mxu0 %v2091
    %3409 = vmatpush1.msra.mxu0 %v2090
    %3410 = vmatprep.subr.mxu0 %v2095
    %3411 = vmatpush1.msra.mxu0 %v2094
    %3412 = vmatprep.subr.mxu0 %v2099
    %3413 = vmatpush1.msra.mxu0 %v2098
    %3414 = vmatprep.subr.mxu0 %v2103
    %3415 = vmatpush1.msra.mxu0 %v2102
    %3416 = vmatprep.subr.mxu0 %v2107
    %3417 = vmatpush1.msra.mxu0 %v2106
    %3418 = vmatprep.subr.mxu0 %v2111
    %3419 = vmatpush1.msra.mxu0 %v2110
    %3420 = vmatprep.subr.mxu0 %v2115
    %3421 = vmatpush1.msra.mxu0 %v2114
    %3422 = vmatprep.subr.mxu0 %v2119
    %3423 = vmatpush1.msra.mxu0 %v2118
    %3424 = vmatprep.subr.mxu0 %v2123
    %3425 = vmatpush1.msra.mxu0 %v2122
    %3426 = vmatprep.subr.mxu0 %v2127
    %3427 = vmatpush1.msra.mxu0 %v2126
    %3428 = vmatprep.subr.mxu0 %v2131
    %3429 = vmatpush1.msra.mxu0 %v2130
    %3430 = vmatprep.subr.mxu0 %v2135
    %3431 = vmatpush1.msra.mxu0 %v2134
    %3432 = vmatprep.subr.mxu0 %v2139
    %3433 = vmatpush1.msra.mxu0 %v2138
    %3434 = vmatprep.subr.mxu0 %v2143
    %3435 = vmatpush1.msra.mxu0 %v2142
    %3436 = vmatprep.subr.mxu0 %v2147
    %3437 = vmatpush1.msra.mxu0 %v2146
    %3438 = vmatprep.subr.mxu0 %v2151
    %3439 = vmatpush1.msra.mxu0 %v2150
    %3440 = vmatprep.subr.mxu0 %v2155
    %3441 = vmatpush1.msra.mxu0 %v2154
    %3442 = vmatprep.subr.mxu0 %v2159
    %3443 = vmatpush1.msra.mxu0 %v2158
    %3444 = vmatprep.subr.mxu0 %v2163
    %3445 = vmatpush1.msra.mxu0 %v2162
    %3446 = vmatprep.subr.mxu0 %v2167
    %3447 = vmatpush1.msra.mxu0 %v2166
    %3448 = vmatprep.subr.mxu0 %v2171
    %3449 = vmatpush1.msra.mxu0 %v2170
    %3450 = vmatprep.subr.mxu0 %v2175
    %3451 = vmatpush1.msra.mxu0 %v2174
    %3452 = vmatprep.subr.mxu0 %v2179
    %3453 = vmatpush1.msra.mxu0 %v2178
    %3454 = vmatprep.subr.mxu0 %v2183
    %3455 = vmatpush1.msra.mxu0 %v2182
    %3456 = vmatprep.subr.mxu0 %v2187
    %3457 = vmatpush1.msra.mxu0 %v2186
    %3458 = vmatprep.mubr.f32.mxu0 %v1273
    %3459 = vmatmul.mubr.f32.gmra.mrb[0].mxu0 %v1272
    %v3460 = vpop.f32.mrb[0].mxu0
    %v3461 = vadd.f32 %v3384, %v3460
    %v3462 = vpop.f32.mrb[0].mxu0
    %v3463 = vadd.f32 %v3386, %v3462
    %3464 = vmatprep.mubr.f32.mxu0 %v1289
    %3465 = vmatmul.mubr.f32.gmra.mrb[0].mxu0 %v1288
    %v3466 = vpop.f32.mrb[0].mxu0
    %v3467 = vadd.f32 %v3390, %v3466
    %v3468 = vpop.f32.mrb[0].mxu0
    %v3469 = vadd.f32 %v3392, %v3468
    %3470 = vdwg.mxu0
    %3471 = vmatprep.subr.mxu0 %v2191
    %3472 = vmatpush1.msra.mxu0 %v2190
    %3473 = vmatprep.subr.mxu0 %v2195
    %3474 = vmatpush1.msra.mxu0 %v2194
    %3475 = vmatprep.subr.mxu0 %v2199
    %3476 = vmatpush1.msra.mxu0 %v2198
    %3477 = vmatprep.subr.mxu0 %v2203
    %3478 = vmatpush1.msra.mxu0 %v2202
    %3479 = vmatprep.subr.mxu0 %v2207
    %3480 = vmatpush1.msra.mxu0 %v2206
    %3481 = vmatprep.subr.mxu0 %v2211
    %3482 = vmatpush1.msra.mxu0 %v2210
    %3483 = vmatprep.subr.mxu0 %v2215
    %3484 = vmatpush1.msra.mxu0 %v2214
    %3485 = vmatprep.subr.mxu0 %v2219
    %3486 = vmatpush1.msra.mxu0 %v2218
    %3487 = vmatprep.subr.mxu0 %v2223
    %3488 = vmatpush1.msra.mxu0 %v2222
    %3489 = vmatprep.subr.mxu0 %v2227
    %3490 = vmatpush1.msra.mxu0 %v2226
    %3491 = vmatprep.subr.mxu0 %v2231
    %3492 = vmatpush1.msra.mxu0 %v2230
    %3493 = vmatprep.subr.mxu0 %v2235
    %3494 = vmatpush1.msra.mxu0 %v2234
    %3495 = vmatprep.subr.mxu0 %v2239
    %3496 = vmatpush1.msra.mxu0 %v2238
    %3497 = vmatprep.subr.mxu0 %v2243
    %3498 = vmatpush1.msra.mxu0 %v2242
    %3499 = vmatprep.subr.mxu0 %v2247
    %3500 = vmatpush1.msra.mxu0 %v2246
    %3501 = vmatprep.subr.mxu0 %v2251
    %3502 = vmatpush1.msra.mxu0 %v2250
    %3503 = vmatprep.subr.mxu0 %v2255
    %3504 = vmatpush1.msra.mxu0 %v2254
    %3505 = vmatprep.subr.mxu0 %v2259
    %3506 = vmatpush1.msra.mxu0 %v2258
    %3507 = vmatprep.subr.mxu0 %v2263
    %3508 = vmatpush1.msra.mxu0 %v2262
    %3509 = vmatprep.subr.mxu0 %v2267
    %3510 = vmatpush1.msra.mxu0 %v2266
    %3511 = vmatprep.subr.mxu0 %v2271
    %3512 = vmatpush1.msra.mxu0 %v2270
    %3513 = vmatprep.subr.mxu0 %v2275
    %3514 = vmatpush1.msra.mxu0 %v2274
    %3515 = vmatprep.subr.mxu0 %v2279
    %3516 = vmatpush1.msra.mxu0 %v2278
    %3517 = vmatprep.subr.mxu0 %v2283
    %3518 = vmatpush1.msra.mxu0 %v2282
    %3519 = vmatprep.subr.mxu0 %v2287
    %3520 = vmatpush1.msra.mxu0 %v2286
    %3521 = vmatprep.subr.mxu0 %v2291
    %3522 = vmatpush1.msra.mxu0 %v2290
    %3523 = vmatprep.subr.mxu0 %v2295
    %3524 = vmatpush1.msra.mxu0 %v2294
    %3525 = vmatprep.subr.mxu0 %v2299
    %3526 = vmatpush1.msra.mxu0 %v2298
    %3527 = vmatprep.subr.mxu0 %v2303
    %3528 = vmatpush1.msra.mxu0 %v2302
    %3529 = vmatprep.subr.mxu0 %v2307
    %3530 = vmatpush1.msra.mxu0 %v2306
    %3531 = vmatprep.subr.mxu0 %v2311
    %3532 = vmatpush1.msra.mxu0 %v2310
    %3533 = vmatprep.subr.mxu0 %v2315
    %3534 = vmatpush1.msra.mxu0 %v2314
    %3535 = vmatprep.mubr.f32.mxu0 %v1275
    %3536 = vmatmul.mubr.f32.gmra.mrb[0].mxu0 %v1274
    %v3537 = vpop.f32.mrb[0].mxu0
    %v3538 = vadd.f32 %v3461, %v3537
    %v3539 = vpop.f32.mrb[0].mxu0
    %v3540 = vadd.f32 %v3463, %v3539
    %3541 = vmatprep.mubr.f32.mxu0 %v1291
    %3542 = vmatmul.mubr.f32.gmra.mrb[0].mxu0 %v1290
    %v3543 = vpop.f32.mrb[0].mxu0
    %v3544 = vadd.f32 %v3467, %v3543
    %v3545 = vpop.f32.mrb[0].mxu0
    %v3546 = vadd.f32 %v3469, %v3545
    %3547 = vdwg.mxu0
    %v3548 = vld [vmem:[%s4] sm:$0xff]
    %v3549 = vld [vmem:[%s4 + $0x8] sm:$0xff]
    %v3550 = vld [vmem:[%s4 + $0x10] sm:$0xff]
    %v3551 = vld [vmem:[%s4 + $0x18] sm:$0xff]
    %v3552 = vld [vmem:[%s4 + $0x20] sm:$0xff]
    %v3553 = vld [vmem:[%s4 + $0x28] sm:$0xff]
    %v3554 = vld [vmem:[%s4 + $0x30] sm:$0xff]
    %v3555 = vld [vmem:[%s4 + $0x38] sm:$0xff]
    %v3556 = vld [vmem:[%s5] sm:$0xff]
    %v3557 = vld [vmem:[%s5 + $0x8] sm:$0xff]
    %v3558 = vld [vmem:[%s5 + $0x10] sm:$0xff]
    %v3559 = vld [vmem:[%s5 + $0x18] sm:$0xff]
    %v3560 = vld [vmem:[%s5 + $0x20] sm:$0xff]
    %v3561 = vld [vmem:[%s5 + $0x28] sm:$0xff]
    %v3562 = vld [vmem:[%s5 + $0x30] sm:$0xff]
    %v3563 = vld [vmem:[%s5 + $0x38] sm:$0xff]
    %3565 = vset.pattern.permute.xlu0 0
    %3566 = vperm.xlu0 %3565, %v3556
    %v3567 = vpop.permute.xlu0 %3566
    %3570 = vset.pattern.permute.xlu0 0
    %3571 = vperm.xlu0 %3570, %v3557
    %v3572 = vpop.permute.xlu0 %3571
    %3575 = vset.pattern.permute.xlu0 0
    %3576 = vperm.xlu0 %3575, %v3558
    %v3577 = vpop.permute.xlu0 %3576
    %3580 = vset.pattern.permute.xlu0 0
    %3581 = vperm.xlu0 %3580, %v3559
    %v3582 = vpop.permute.xlu0 %3581
    %3585 = vset.pattern.permute.xlu0 0
    %3586 = vperm.xlu0 %3585, %v3560
    %v3587 = vpop.permute.xlu0 %3586
    %3590 = vset.pattern.permute.xlu0 0
    %3591 = vperm.xlu0 %3590, %v3561
    %v3592 = vpop.permute.xlu0 %3591
    %3595 = vset.pattern.permute.xlu0 0
    %3596 = vperm.xlu0 %3595, %v3562
    %v3597 = vpop.permute.xlu0 %3596
    %3600 = vset.pattern.permute.xlu0 0
    %3601 = vperm.xlu0 %3600, %v3563
    %v3602 = vpop.permute.xlu0 %3601
    %vm3604 = vcmask 130048
    %v3606 = vsel %vm3604, %v3548, 0
    %v3609 = vsel %vm3604, %v3549, 0
    %v3612 = vsel %vm3604, %v3550, 0
    %v3615 = vsel %vm3604, %v3551, 0
    %v3618 = vsel %vm3604, %v3552, 0
    %v3621 = vsel %vm3604, %v3553, 0
    %v3624 = vsel %vm3604, %v3554, 0
    %v3627 = vsel %vm3604, %v3555, 0
    %3629 = vmatprep.subr.mxu0 %v2924
    %3630 = vmatpush1.msra.mxu0 %v2922
    %3631 = vmatprep.subr.mxu0 %v2930
    %3632 = vmatpush1.msra.mxu0 %v2928
    %3633 = vmatprep.subr.mxu0 0.0
    %3634 = vmatpush1.msra.mxu0 0.0
    %3635 = vmatprep.subr.mxu0 0.0
    %3636 = vmatpush1.msra.mxu0 0.0
    %3637 = vmatprep.subr.mxu0 0.0
    %3638 = vmatpush1.msra.mxu0 0.0
    %3639 = vmatprep.subr.mxu0 0.0
    %3640 = vmatpush1.msra.mxu0 0.0
    %3641 = vmatprep.subr.mxu0 0.0
    %3642 = vmatpush1.msra.mxu0 0.0
    %3643 = vmatprep.subr.mxu0 0.0
    %3644 = vmatpush1.msra.mxu0 0.0
    %3645 = vmatprep.subr.mxu0 0.0
    %3646 = vmatpush1.msra.mxu0 0.0
    %3647 = vmatprep.subr.mxu0 0.0
    %3648 = vmatpush1.msra.mxu0 0.0
    %3649 = vmatprep.subr.mxu0 0.0
    %3650 = vmatpush1.msra.mxu0 0.0
    %3651 = vmatprep.subr.mxu0 0.0
    %3652 = vmatpush1.msra.mxu0 0.0
    %3653 = vmatprep.subr.mxu0 0.0
    %3654 = vmatpush1.msra.mxu0 0.0
    %3655 = vmatprep.subr.mxu0 0.0
    %3656 = vmatpush1.msra.mxu0 0.0
    %3657 = vmatprep.subr.mxu0 0.0
    %3658 = vmatpush1.msra.mxu0 0.0
    %3659 = vmatprep.subr.mxu0 0.0
    %3660 = vmatpush1.msra.mxu0 0.0
    %3661 = vmatprep.subr.mxu0 0.0
    %3662 = vmatpush1.msra.mxu0 0.0
    %3663 = vmatprep.subr.mxu0 0.0
    %3664 = vmatpush1.msra.mxu0 0.0
    %3665 = vmatprep.subr.mxu0 0.0
    %3666 = vmatpush1.msra.mxu0 0.0
    %3667 = vmatprep.subr.mxu0 0.0
    %3668 = vmatpush1.msra.mxu0 0.0
    %3669 = vmatprep.subr.mxu0 0.0
    %3670 = vmatpush1.msra.mxu0 0.0
    %3671 = vmatprep.subr.mxu0 0.0
    %3672 = vmatpush1.msra.mxu0 0.0
    %3673 = vmatprep.subr.mxu0 0.0
    %3674 = vmatpush1.msra.mxu0 0.0
    %3675 = vmatprep.subr.mxu0 0.0
    %3676 = vmatpush1.msra.mxu0 0.0
    %3677 = vmatprep.subr.mxu0 0.0
    %3678 = vmatpush1.msra.mxu0 0.0
    %3679 = vmatprep.subr.mxu0 0.0
    %3680 = vmatpush1.msra.mxu0 0.0
    %3681 = vmatprep.subr.mxu0 0.0
    %3682 = vmatpush1.msra.mxu0 0.0
    %3683 = vmatprep.subr.mxu0 0.0
    %3684 = vmatpush1.msra.mxu0 0.0
    %3685 = vmatprep.subr.mxu0 0.0
    %3686 = vmatpush1.msra.mxu0 0.0
    %3687 = vmatprep.subr.mxu0 0.0
    %3688 = vmatpush1.msra.mxu0 0.0
    %3689 = vmatprep.subr.mxu0 0.0
    %3690 = vmatpush1.msra.mxu0 0.0
    %3691 = vmatprep.subr.mxu0 0.0
    %3692 = vmatpush1.msra.mxu0 0.0
    %3693 = vmatprep.mubr.f32.mxu0 0.0
    %3694 = vmatmul.mubr.f32.gmra.mrb[0].mxu0 %v3606
    %v3695 = vpop.f32.mrb[0].mxu0
    %v3696 = vadd.f32 %v3567, %v3695
    %v3697 = vpop.f32.mrb[0].mxu0
    %v3698 = vadd.f32 %v3567, %v3697
    %3699 = vmatprep.mubr.f32.mxu0 0.0
    %3700 = vmatmul.mubr.f32.gmra.mrb[0].mxu0 %v3609
    %v3701 = vpop.f32.mrb[0].mxu0
    %v3702 = vadd.f32 %v3572, %v3701
    %v3703 = vpop.f32.mrb[0].mxu0
    %v3704 = vadd.f32 %v3572, %v3703
    %3705 = vmatprep.mubr.f32.mxu0 0.0
    %3706 = vmatmul.mubr.f32.gmra.mrb[0].mxu0 %v3612
    %v3707 = vpop.f32.mrb[0].mxu0
    %v3708 = vadd.f32 %v3577, %v3707
    %v3709 = vpop.f32.mrb[0].mxu0
    %v3710 = vadd.f32 %v3577, %v3709
    %3711 = vmatprep.mubr.f32.mxu0 0.0
    %3712 = vmatmul.mubr.f32.gmra.mrb[0].mxu0 %v3615
    %v3713 = vpop.f32.mrb[0].mxu0
    %v3714 = vadd.f32 %v3582, %v3713
    %v3715 = vpop.f32.mrb[0].mxu0
    %v3716 = vadd.f32 %v3582, %v3715
    %3717 = vmatprep.mubr.f32.mxu0 0.0
    %3718 = vmatmul.mubr.f32.gmra.mrb[0].mxu0 %v3618
    %v3719 = vpop.f32.mrb[0].mxu0
    %v3720 = vadd.f32 %v3587, %v3719
    %v3721 = vpop.f32.mrb[0].mxu0
    %v3722 = vadd.f32 %v3587, %v3721
    %3723 = vmatprep.mubr.f32.mxu0 0.0
    %3724 = vmatmul.mubr.f32.gmra.mrb[0].mxu0 %v3621
    %v3725 = vpop.f32.mrb[0].mxu0
    %v3726 = vadd.f32 %v3592, %v3725
    %v3727 = vpop.f32.mrb[0].mxu0
    %v3728 = vadd.f32 %v3592, %v3727
    %3729 = vmatprep.mubr.f32.mxu0 0.0
    %3730 = vmatmul.mubr.f32.gmra.mrb[0].mxu0 %v3624
    %v3731 = vpop.f32.mrb[0].mxu0
    %v3732 = vadd.f32 %v3597, %v3731
    %v3733 = vpop.f32.mrb[0].mxu0
    %v3734 = vadd.f32 %v3597, %v3733
    %3735 = vmatprep.mubr.f32.mxu0 0.0
    %3736 = vmatmul.mubr.f32.gmra.mrb[0].mxu0 %v3627
    %v3737 = vpop.f32.mrb[0].mxu0
    %v3738 = vadd.f32 %v3602, %v3737
    %v3739 = vpop.f32.mrb[0].mxu0
    %v3740 = vadd.f32 %v3602, %v3739
    %3741 = vdwg.mxu0
    %3742 = vmatprep.subr.mxu0 %v3540
    %3743 = vmatpush1.msra.mxu0 %v3538
    %3744 = vmatprep.subr.mxu0 %v3546
    %3745 = vmatpush1.msra.mxu0 %v3544
    %3746 = vmatprep.subr.mxu0 0.0
    %3747 = vmatpush1.msra.mxu0 0.0
    %3748 = vmatprep.subr.mxu0 0.0
    %3749 = vmatpush1.msra.mxu0 0.0
    %3750 = vmatprep.subr.mxu0 0.0
    %3751 = vmatpush1.msra.mxu0 0.0
    %3752 = vmatprep.subr.mxu0 0.0
    %3753 = vmatpush1.msra.mxu0 0.0
    %3754 = vmatprep.subr.mxu0 0.0
    %3755 = vmatpush1.msra.mxu0 0.0
    %3756 = vmatprep.subr.mxu0 0.0
    %3757 = vmatpush1.msra.mxu0 0.0
    %3758 = vmatprep.subr.mxu0 0.0
    %3759 = vmatpush1.msra.mxu0 0.0
    %3760 = vmatprep.subr.mxu0 0.0
    %3761 = vmatpush1.msra.mxu0 0.0
    %3762 = vmatprep.subr.mxu0 0.0
    %3763 = vmatpush1.msra.mxu0 0.0
    %3764 = vmatprep.subr.mxu0 0.0
    %3765 = vmatpush1.msra.mxu0 0.0
    %3766 = vmatprep.subr.mxu0 0.0
    %3767 = vmatpush1.msra.mxu0 0.0
    %3768 = vmatprep.subr.mxu0 0.0
    %3769 = vmatpush1.msra.mxu0 0.0
    %3770 = vmatprep.subr.mxu0 0.0
    %3771 = vmatpush1.msra.mxu0 0.0
    %3772 = vmatprep.subr.mxu0 0.0
    %3773 = vmatpush1.msra.mxu0 0.0
    %3774 = vmatprep.subr.mxu0 0.0
    %3775 = vmatpush1.msra.mxu0 0.0
    %3776 = vmatprep.subr.mxu0 0.0
    %3777 = vmatpush1.msra.mxu0 0.0
    %3778 = vmatprep.subr.mxu0 0.0
    %3779 = vmatpush1.msra.mxu0 0.0
    %3780 = vmatprep.subr.mxu0 0.0
    %3781 = vmatpush1.msra.mxu0 0.0
    %3782 = vmatprep.subr.mxu0 0.0
    %3783 = vmatpush1.msra.mxu0 0.0
    %3784 = vmatprep.subr.mxu0 0.0
    %3785 = vmatpush1.msra.mxu0 0.0
    %3786 = vmatprep.subr.mxu0 0.0
    %3787 = vmatpush1.msra.mxu0 0.0
    %3788 = vmatprep.subr.mxu0 0.0
    %3789 = vmatpush1.msra.mxu0 0.0
    %3790 = vmatprep.subr.mxu0 0.0
    %3791 = vmatpush1.msra.mxu0 0.0
    %3792 = vmatprep.subr.mxu0 0.0
    %3793 = vmatpush1.msra.mxu0 0.0
    %3794 = vmatprep.subr.mxu0 0.0
    %3795 = vmatpush1.msra.mxu0 0.0
    %3796 = vmatprep.subr.mxu0 0.0
    %3797 = vmatpush1.msra.mxu0 0.0
    %3798 = vmatprep.subr.mxu0 0.0
    %3799 = vmatpush1.msra.mxu0 0.0
    %3800 = vmatprep.subr.mxu0 0.0
    %3801 = vmatpush1.msra.mxu0 0.0
    %3802 = vmatprep.subr.mxu0 0.0
    %3803 = vmatpush1.msra.mxu0 0.0
    %3804 = vmatprep.subr.mxu0 0.0
    %3805 = vmatpush1.msra.mxu0 0.0
    %3806 = vmatprep.mubr.f32.mxu0 0.0
    %3807 = vmatmul.mubr.f32.gmra.mrb[0].mxu0 %v3606
    %v3808 = vpop.f32.mrb[0].mxu0
    %v3809 = vadd.f32 %v3567, %v3808
    %v3810 = vpop.f32.mrb[0].mxu0
    %v3811 = vadd.f32 %v3567, %v3810
    %3812 = vmatprep.mubr.f32.mxu0 0.0
    %3813 = vmatmul.mubr.f32.gmra.mrb[0].mxu0 %v3609
    %v3814 = vpop.f32.mrb[0].mxu0
    %v3815 = vadd.f32 %v3572, %v3814
    %v3816 = vpop.f32.mrb[0].mxu0
    %v3817 = vadd.f32 %v3572, %v3816
    %3818 = vmatprep.mubr.f32.mxu0 0.0
    %3819 = vmatmul.mubr.f32.gmra.mrb[0].mxu0 %v3612
    %v3820 = vpop.f32.mrb[0].mxu0
    %v3821 = vadd.f32 %v3577, %v3820
    %v3822 = vpop.f32.mrb[0].mxu0
    %v3823 = vadd.f32 %v3577, %v3822
    %3824 = vmatprep.mubr.f32.mxu0 0.0
    %3825 = vmatmul.mubr.f32.gmra.mrb[0].mxu0 %v3615
    %v3826 = vpop.f32.mrb[0].mxu0
    %v3827 = vadd.f32 %v3582, %v3826
    %v3828 = vpop.f32.mrb[0].mxu0
    %v3829 = vadd.f32 %v3582, %v3828
    %3830 = vmatprep.mubr.f32.mxu0 0.0
    %3831 = vmatmul.mubr.f32.gmra.mrb[0].mxu0 %v3618
    %v3832 = vpop.f32.mrb[0].mxu0
    %v3833 = vadd.f32 %v3587, %v3832
    %v3834 = vpop.f32.mrb[0].mxu0
    %v3835 = vadd.f32 %v3587, %v3834
    %3836 = vmatprep.mubr.f32.mxu0 0.0
    %3837 = vmatmul.mubr.f32.gmra.mrb[0].mxu0 %v3621
    %v3838 = vpop.f32.mrb[0].mxu0
    %v3839 = vadd.f32 %v3592, %v3838
    %v3840 = vpop.f32.mrb[0].mxu0
    %v3841 = vadd.f32 %v3592, %v3840
    %3842 = vmatprep.mubr.f32.mxu0 0.0
    %3843 = vmatmul.mubr.f32.gmra.mrb[0].mxu0 %v3624
    %v3844 = vpop.f32.mrb[0].mxu0
    %v3845 = vadd.f32 %v3597, %v3844
    %v3846 = vpop.f32.mrb[0].mxu0
    %v3847 = vadd.f32 %v3597, %v3846
    %3848 = vmatprep.mubr.f32.mxu0 0.0
    %3849 = vmatmul.mubr.f32.gmra.mrb[0].mxu0 %v3627
    %v3850 = vpop.f32.mrb[0].mxu0
    %v3851 = vadd.f32 %v3602, %v3850
    %v3852 = vpop.f32.mrb[0].mxu0
    %v3853 = vadd.f32 %v3602, %v3852
    %3854 = vdwg.mxu0
    %vm3855 = vcmp.gt.f32.partialorder %v3696, 0.0
    %vm3856 = vcmp.gt.f32.partialorder %v3698, 0.0
    %vm3857 = vcmp.gt.f32.partialorder %v3809, 0.0
    %vm3858 = vcmp.gt.f32.partialorder %v3811, 0.0
    %vm3859 = vcmp.gt.f32.partialorder %v3702, 0.0
    %vm3860 = vcmp.gt.f32.partialorder %v3704, 0.0
    %vm3861 = vcmp.gt.f32.partialorder %v3815, 0.0
    %vm3862 = vcmp.gt.f32.partialorder %v3817, 0.0
    %vm3863 = vcmp.gt.f32.partialorder %v3708, 0.0
    %vm3864 = vcmp.gt.f32.partialorder %v3710, 0.0
    %vm3865 = vcmp.gt.f32.partialorder %v3821, 0.0
    %vm3866 = vcmp.gt.f32.partialorder %v3823, 0.0
    %vm3867 = vcmp.gt.f32.partialorder %v3714, 0.0
    %vm3868 = vcmp.gt.f32.partialorder %v3716, 0.0
    %vm3869 = vcmp.gt.f32.partialorder %v3827, 0.0
    %vm3870 = vcmp.gt.f32.partialorder %v3829, 0.0
    %vm3871 = vcmp.gt.f32.partialorder %v3720, 0.0
    %vm3872 = vcmp.gt.f32.partialorder %v3722, 0.0
    %vm3873 = vcmp.gt.f32.partialorder %v3833, 0.0
    %vm3874 = vcmp.gt.f32.partialorder %v3835, 0.0
    %vm3875 = vcmp.gt.f32.partialorder %v3726, 0.0
    %vm3876 = vcmp.gt.f32.partialorder %v3728, 0.0
    %vm3877 = vcmp.gt.f32.partialorder %v3839, 0.0
    %vm3878 = vcmp.gt.f32.partialorder %v3841, 0.0
    %vm3879 = vcmp.gt.f32.partialorder %v3732, 0.0
    %vm3880 = vcmp.gt.f32.partialorder %v3734, 0.0
    %vm3881 = vcmp.gt.f32.partialorder %v3845, 0.0
    %vm3882 = vcmp.gt.f32.partialorder %v3847, 0.0
    %vm3883 = vcmp.gt.f32.partialorder %v3738, 0.0
    %vm3884 = vcmp.gt.f32.partialorder %v3740, 0.0
    %vm3885 = vcmp.gt.f32.partialorder %v3851, 0.0
    %vm3886 = vcmp.gt.f32.partialorder %v3853, 0.0
    %v3887 = vmin.f32 %v3696, 0.0
    %v3888 = vmin.f32 %v3698, 0.0
    %v3889 = vmin.f32 %v3809, 0.0
    %v3890 = vmin.f32 %v3811, 0.0
    %v3891 = vmin.f32 %v3702, 0.0
    %v3892 = vmin.f32 %v3704, 0.0
    %v3893 = vmin.f32 %v3815, 0.0
    %v3894 = vmin.f32 %v3817, 0.0
    %v3895 = vmin.f32 %v3708, 0.0
    %v3896 = vmin.f32 %v3710, 0.0
    %v3897 = vmin.f32 %v3821, 0.0
    %v3898 = vmin.f32 %v3823, 0.0
    %v3899 = vmin.f32 %v3714, 0.0
    %v3900 = vmin.f32 %v3716, 0.0
    %v3901 = vmin.f32 %v3827, 0.0
    %v3902 = vmin.f32 %v3829, 0.0
    %v3903 = vmin.f32 %v3720, 0.0
    %v3904 = vmin.f32 %v3722, 0.0
    %v3905 = vmin.f32 %v3833, 0.0
    %v3906 = vmin.f32 %v3835, 0.0
    %v3907 = vmin.f32 %v3726, 0.0
    %v3908 = vmin.f32 %v3728, 0.0
    %v3909 = vmin.f32 %v3839, 0.0
    %v3910 = vmin.f32 %v3841, 0.0
    %v3911 = vmin.f32 %v3732, 0.0
    %v3912 = vmin.f32 %v3734, 0.0
    %v3913 = vmin.f32 %v3845, 0.0
    %v3914 = vmin.f32 %v3847, 0.0
    %v3915 = vmin.f32 %v3738, 0.0
    %v3916 = vmin.f32 %v3740, 0.0
    %v3917 = vmin.f32 %v3851, 0.0
    %v3918 = vmin.f32 %v3853, 0.0
    %v3919 = vmul.f32 %v3887, 1.442695
    %v3920 = vpow.pop %v3919
    %v3921 = vmul.f32 %v3888, 1.442695
    %v3922 = vpow.pop %v3921
    %v3923 = vmul.f32 %v3889, 1.442695
    %v3924 = vpow.pop %v3923
    %v3925 = vmul.f32 %v3890, 1.442695
    %v3926 = vpow.pop %v3925
    %v3927 = vmul.f32 %v3891, 1.442695
    %v3928 = vpow.pop %v3927
    %v3929 = vmul.f32 %v3892, 1.442695
    %v3930 = vpow.pop %v3929
    %v3931 = vmul.f32 %v3893, 1.442695
    %v3932 = vpow.pop %v3931
    %v3933 = vmul.f32 %v3894, 1.442695
    %v3934 = vpow.pop %v3933
    %v3935 = vmul.f32 %v3895, 1.442695
    %v3936 = vpow.pop %v3935
    %v3937 = vmul.f32 %v3896, 1.442695
    %v3938 = vpow.pop %v3937
    %v3939 = vmul.f32 %v3897, 1.442695
    %v3940 = vpow.pop %v3939
    %v3941 = vmul.f32 %v3898, 1.442695
    %v3942 = vpow.pop %v3941
    %v3943 = vmul.f32 %v3899, 1.442695
    %v3944 = vpow.pop %v3943
    %v3945 = vmul.f32 %v3900, 1.442695
    %v3946 = vpow.pop %v3945
    %v3947 = vmul.f32 %v3901, 1.442695
    %v3948 = vpow.pop %v3947
    %v3949 = vmul.f32 %v3902, 1.442695
    %v3950 = vpow.pop %v3949
    %v3951 = vmul.f32 %v3903, 1.442695
    %v3952 = vpow.pop %v3951
    %v3953 = vmul.f32 %v3904, 1.442695
    %v3954 = vpow.pop %v3953
    %v3955 = vmul.f32 %v3905, 1.442695
    %v3956 = vpow.pop %v3955
    %v3957 = vmul.f32 %v3906, 1.442695
    %v3958 = vpow.pop %v3957
    %v3959 = vmul.f32 %v3907, 1.442695
    %v3960 = vpow.pop %v3959
    %v3961 = vmul.f32 %v3908, 1.442695
    %v3962 = vpow.pop %v3961
    %v3963 = vmul.f32 %v3909, 1.442695
    %v3964 = vpow.pop %v3963
    %v3965 = vmul.f32 %v3910, 1.442695
    %v3966 = vpow.pop %v3965
    %v3967 = vmul.f32 %v3911, 1.442695
    %v3968 = vpow.pop %v3967
    %v3969 = vmul.f32 %v3912, 1.442695
    %v3970 = vpow.pop %v3969
    %v3971 = vmul.f32 %v3913, 1.442695
    %v3972 = vpow.pop %v3971
    %v3973 = vmul.f32 %v3914, 1.442695
    %v3974 = vpow.pop %v3973
    %v3975 = vmul.f32 %v3915, 1.442695
    %v3976 = vpow.pop %v3975
    %v3977 = vmul.f32 %v3916, 1.442695
    %v3978 = vpow.pop %v3977
    %v3979 = vmul.f32 %v3917, 1.442695
    %v3980 = vpow.pop %v3979
    %v3981 = vmul.f32 %v3918, 1.442695
    %v3982 = vpow.pop %v3981
    %v3983 = vsub.f32 %v3920, 1.0
    %v3984 = vsub.f32 %v3922, 1.0
    %v3985 = vsub.f32 %v3924, 1.0
    %v3986 = vsub.f32 %v3926, 1.0
    %v3987 = vsub.f32 %v3928, 1.0
    %v3988 = vsub.f32 %v3930, 1.0
    %v3989 = vsub.f32 %v3932, 1.0
    %v3990 = vsub.f32 %v3934, 1.0
    %v3991 = vsub.f32 %v3936, 1.0
    %v3992 = vsub.f32 %v3938, 1.0
    %v3993 = vsub.f32 %v3940, 1.0
    %v3994 = vsub.f32 %v3942, 1.0
    %v3995 = vsub.f32 %v3944, 1.0
    %v3996 = vsub.f32 %v3946, 1.0
    %v3997 = vsub.f32 %v3948, 1.0
    %v3998 = vsub.f32 %v3950, 1.0
    %v3999 = vsub.f32 %v3952, 1.0
    %v4000 = vsub.f32 %v3954, 1.0
    %v4001 = vsub.f32 %v3956, 1.0
    %v4002 = vsub.f32 %v3958, 1.0
    %v4003 = vsub.f32 %v3960, 1.0
    %v4004 = vsub.f32 %v3962, 1.0
    %v4005 = vsub.f32 %v3964, 1.0
    %v4006 = vsub.f32 %v3966, 1.0
    %v4007 = vsub.f32 %v3968, 1.0
    %v4008 = vsub.f32 %v3970, 1.0
    %v4009 = vsub.f32 %v3972, 1.0
    %v4010 = vsub.f32 %v3974, 1.0
    %v4011 = vsub.f32 %v3976, 1.0
    %v4012 = vsub.f32 %v3978, 1.0
    %v4013 = vsub.f32 %v3980, 1.0
    %v4014 = vsub.f32 %v3982, 1.0
    %v4015 = vsel %vm3855, %v3696, %v3983
    %v4016 = vsel %vm3856, %v3698, %v3984
    %v4017 = vsel %vm3857, %v3809, %v3985
    %v4018 = vsel %vm3858, %v3811, %v3986
    %v4019 = vsel %vm3859, %v3702, %v3987
    %v4020 = vsel %vm3860, %v3704, %v3988
    %v4021 = vsel %vm3861, %v3815, %v3989
    %v4022 = vsel %vm3862, %v3817, %v3990
    %v4023 = vsel %vm3863, %v3708, %v3991
    %v4024 = vsel %vm3864, %v3710, %v3992
    %v4025 = vsel %vm3865, %v3821, %v3993
    %v4026 = vsel %vm3866, %v3823, %v3994
    %v4027 = vsel %vm3867, %v3714, %v3995
    %v4028 = vsel %vm3868, %v3716, %v3996
    %v4029 = vsel %vm3869, %v3827, %v3997
    %v4030 = vsel %vm3870, %v3829, %v3998
    %v4031 = vsel %vm3871, %v3720, %v3999
    %v4032 = vsel %vm3872, %v3722, %v4000
    %v4033 = vsel %vm3873, %v3833, %v4001
    %v4034 = vsel %vm3874, %v3835, %v4002
    %v4035 = vsel %vm3875, %v3726, %v4003
    %v4036 = vsel %vm3876, %v3728, %v4004
    %v4037 = vsel %vm3877, %v3839, %v4005
    %v4038 = vsel %vm3878, %v3841, %v4006
    %v4039 = vsel %vm3879, %v3732, %v4007
    %v4040 = vsel %vm3880, %v3734, %v4008
    %v4041 = vsel %vm3881, %v3845, %v4009
    %v4042 = vsel %vm3882, %v3847, %v4010
    %v4043 = vsel %vm3883, %v3738, %v4011
    %v4044 = vsel %vm3884, %v3740, %v4012
    %v4045 = vsel %vm3885, %v3851, %v4013
    %v4046 = vsel %vm3886, %v3853, %v4014
    %v4047 = vld [vmem:[#allocation10] sm:$0xff]
    %v4048 = vld [vmem:[#allocation10 + $0x8] sm:$0xff]
    %v4049 = vld [vmem:[#allocation10 + $0x10] sm:$0xff]
    %v4050 = vld [vmem:[#allocation10 + $0x18] sm:$0xff]
    %v4051 = vld [vmem:[#allocation10 + $0x20] sm:$0xff]
    %v4052 = vld [vmem:[#allocation10 + $0x28] sm:$0xff]
    %v4053 = vld [vmem:[#allocation10 + $0x30] sm:$0xff]
    %v4054 = vld [vmem:[#allocation10 + $0x38] sm:$0xff]
    %v4055 = vld [vmem:[#allocation10 + $0x40] sm:$0xff]
    %v4056 = vld [vmem:[#allocation10 + $0x48] sm:$0xff]
    %v4057 = vld [vmem:[#allocation10 + $0x50] sm:$0xff]
    %v4058 = vld [vmem:[#allocation10 + $0x58] sm:$0xff]
    %v4059 = vld [vmem:[#allocation10 + $0x60] sm:$0xff]
    %v4060 = vld [vmem:[#allocation10 + $0x68] sm:$0xff]
    %v4061 = vld [vmem:[#allocation10 + $0x70] sm:$0xff]
    %v4062 = vld [vmem:[#allocation10 + $0x78] sm:$0xff]
    %v4063 = vld [vmem:[#allocation10 + $0x80] sm:$0xff]
    %v4064 = vld [vmem:[#allocation10 + $0x88] sm:$0xff]
    %v4065 = vld [vmem:[#allocation10 + $0x90] sm:$0xff]
    %v4066 = vld [vmem:[#allocation10 + $0x98] sm:$0xff]
    %v4067 = vld [vmem:[#allocation10 + $0xa0] sm:$0xff]
    %v4068 = vld [vmem:[#allocation10 + $0xa8] sm:$0xff]
    %v4069 = vld [vmem:[#allocation10 + $0xb0] sm:$0xff]
    %v4070 = vld [vmem:[#allocation10 + $0xb8] sm:$0xff]
    %v4071 = vld [vmem:[#allocation10 + $0xc0] sm:$0xff]
    %v4072 = vld [vmem:[#allocation10 + $0xc8] sm:$0xff]
    %v4073 = vld [vmem:[#allocation10 + $0xd0] sm:$0xff]
    %v4074 = vld [vmem:[#allocation10 + $0xd8] sm:$0xff]
    %v4075 = vld [vmem:[#allocation10 + $0xe0] sm:$0xff]
    %v4076 = vld [vmem:[#allocation10 + $0xe8] sm:$0xff]
    %v4077 = vld [vmem:[#allocation10 + $0xf0] sm:$0xff]
    %v4078 = vld [vmem:[#allocation10 + $0xf8] sm:$0xff]
    %v4079 = vld [vmem:[#allocation10 + $0x100] sm:$0xff]
    %v4080 = vld [vmem:[#allocation10 + $0x108] sm:$0xff]
    %v4081 = vld [vmem:[#allocation10 + $0x110] sm:$0xff]
    %v4082 = vld [vmem:[#allocation10 + $0x118] sm:$0xff]
    %v4083 = vld [vmem:[#allocation10 + $0x120] sm:$0xff]
    %v4084 = vld [vmem:[#allocation10 + $0x128] sm:$0xff]
    %v4085 = vld [vmem:[#allocation10 + $0x130] sm:$0xff]
    %v4086 = vld [vmem:[#allocation10 + $0x138] sm:$0xff]
    %v4087 = vld [vmem:[#allocation10 + $0x140] sm:$0xff]
    %v4088 = vld [vmem:[#allocation10 + $0x148] sm:$0xff]
    %v4089 = vld [vmem:[#allocation10 + $0x150] sm:$0xff]
    %v4090 = vld [vmem:[#allocation10 + $0x158] sm:$0xff]
    %v4091 = vld [vmem:[#allocation10 + $0x160] sm:$0xff]
    %v4092 = vld [vmem:[#allocation10 + $0x168] sm:$0xff]
    %v4093 = vld [vmem:[#allocation10 + $0x170] sm:$0xff]
    %v4094 = vld [vmem:[#allocation10 + $0x178] sm:$0xff]
    %v4095 = vld [vmem:[#allocation10 + $0x180] sm:$0xff]
    %v4096 = vld [vmem:[#allocation10 + $0x188] sm:$0xff]
    %v4097 = vld [vmem:[#allocation10 + $0x190] sm:$0xff]
    %v4098 = vld [vmem:[#allocation10 + $0x198] sm:$0xff]
    %v4099 = vld [vmem:[#allocation10 + $0x1a0] sm:$0xff]
    %v4100 = vld [vmem:[#allocation10 + $0x1a8] sm:$0xff]
    %v4101 = vld [vmem:[#allocation10 + $0x1b0] sm:$0xff]
    %v4102 = vld [vmem:[#allocation10 + $0x1b8] sm:$0xff]
    %v4103 = vld [vmem:[#allocation10 + $0x1c0] sm:$0xff]
    %v4104 = vld [vmem:[#allocation10 + $0x1c8] sm:$0xff]
    %v4105 = vld [vmem:[#allocation10 + $0x1d0] sm:$0xff]
    %v4106 = vld [vmem:[#allocation10 + $0x1d8] sm:$0xff]
    %v4107 = vld [vmem:[#allocation10 + $0x1e0] sm:$0xff]
    %v4108 = vld [vmem:[#allocation10 + $0x1e8] sm:$0xff]
    %v4109 = vld [vmem:[#allocation10 + $0x1f0] sm:$0xff]
    %v4110 = vld [vmem:[#allocation10 + $0x1f8] sm:$0xff]
    %4111 = vmatprep.subr.mxu0 0.0
    %4112 = vmatpush1.msra.mxu0 %v4047
    %4113 = vmatprep.subr.mxu0 0.0
    %4114 = vmatpush1.msra.mxu0 %v4048
    %4115 = vmatprep.subr.mxu0 0.0
    %4116 = vmatpush1.msra.mxu0 %v4049
    %4117 = vmatprep.subr.mxu0 0.0
    %4118 = vmatpush1.msra.mxu0 %v4050
    %4119 = vmatprep.subr.mxu0 0.0
    %4120 = vmatpush1.msra.mxu0 %v4051
    %4121 = vmatprep.subr.mxu0 0.0
    %4122 = vmatpush1.msra.mxu0 %v4052
    %4123 = vmatprep.subr.mxu0 0.0
    %4124 = vmatpush1.msra.mxu0 %v4053
    %4125 = vmatprep.subr.mxu0 0.0
    %4126 = vmatpush1.msra.mxu0 %v4054
    %4127 = vmatprep.subr.mxu0 0.0
    %4128 = vmatpush1.msra.mxu0 %v4055
    %4129 = vmatprep.subr.mxu0 0.0
    %4130 = vmatpush1.msra.mxu0 %v4056
    %4131 = vmatprep.subr.mxu0 0.0
    %4132 = vmatpush1.msra.mxu0 %v4057
    %4133 = vmatprep.subr.mxu0 0.0
    %4134 = vmatpush1.msra.mxu0 %v4058
    %4135 = vmatprep.subr.mxu0 0.0
    %4136 = vmatpush1.msra.mxu0 %v4059
    %4137 = vmatprep.subr.mxu0 0.0
    %4138 = vmatpush1.msra.mxu0 %v4060
    %4139 = vmatprep.subr.mxu0 0.0
    %4140 = vmatpush1.msra.mxu0 %v4061
    %4141 = vmatprep.subr.mxu0 0.0
    %4142 = vmatpush1.msra.mxu0 %v4062
    %4143 = vmatprep.subr.mxu0 0.0
    %4144 = vmatpush1.msra.mxu0 %v4063
    %4145 = vmatprep.subr.mxu0 0.0
    %4146 = vmatpush1.msra.mxu0 %v4064
    %4147 = vmatprep.subr.mxu0 0.0
    %4148 = vmatpush1.msra.mxu0 %v4065
    %4149 = vmatprep.subr.mxu0 0.0
    %4150 = vmatpush1.msra.mxu0 %v4066
    %4151 = vmatprep.subr.mxu0 0.0
    %4152 = vmatpush1.msra.mxu0 %v4067
    %4153 = vmatprep.subr.mxu0 0.0
    %4154 = vmatpush1.msra.mxu0 %v4068
    %4155 = vmatprep.subr.mxu0 0.0
    %4156 = vmatpush1.msra.mxu0 %v4069
    %4157 = vmatprep.subr.mxu0 0.0
    %4158 = vmatpush1.msra.mxu0 %v4070
    %4159 = vmatprep.subr.mxu0 0.0
    %4160 = vmatpush1.msra.mxu0 %v4071
    %4161 = vmatprep.subr.mxu0 0.0
    %4162 = vmatpush1.msra.mxu0 %v4072
    %4163 = vmatprep.subr.mxu0 0.0
    %4164 = vmatpush1.msra.mxu0 %v4073
    %4165 = vmatprep.subr.mxu0 0.0
    %4166 = vmatpush1.msra.mxu0 %v4074
    %4167 = vmatprep.subr.mxu0 0.0
    %4168 = vmatpush1.msra.mxu0 %v4075
    %4169 = vmatprep.subr.mxu0 0.0
    %4170 = vmatpush1.msra.mxu0 %v4076
    %4171 = vmatprep.subr.mxu0 0.0
    %4172 = vmatpush1.msra.mxu0 %v4077
    %4173 = vmatprep.subr.mxu0 0.0
    %4174 = vmatpush1.msra.mxu0 %v4078
    %4175 = vmatprep.mubr.f32.mxu0 %v4016
    %4176 = vmatmul.mubr.f32.gmra.mrb[0].mxu0 %v4015
    %v4177 = vpop.f32.mrb[0].mxu0
    %v4178 = vadd.f32 0.0, %v4177
    %v4179 = vpop.f32.mrb[0].mxu0
    %4180 = vmatprep.mubr.f32.mxu0 %v4020
    %4181 = vmatmul.mubr.f32.gmra.mrb[0].mxu0 %v4019
    %v4182 = vpop.f32.mrb[0].mxu0
    %v4183 = vadd.f32 0.0, %v4182
    %v4184 = vpop.f32.mrb[0].mxu0
    %4185 = vmatprep.mubr.f32.mxu0 %v4024
    %4186 = vmatmul.mubr.f32.gmra.mrb[0].mxu0 %v4023
    %v4187 = vpop.f32.mrb[0].mxu0
    %v4188 = vadd.f32 0.0, %v4187
    %v4189 = vpop.f32.mrb[0].mxu0
    %4190 = vmatprep.mubr.f32.mxu0 %v4028
    %4191 = vmatmul.mubr.f32.gmra.mrb[0].mxu0 %v4027
    %v4192 = vpop.f32.mrb[0].mxu0
    %v4193 = vadd.f32 0.0, %v4192
    %v4194 = vpop.f32.mrb[0].mxu0
    %4195 = vmatprep.mubr.f32.mxu0 %v4032
    %4196 = vmatmul.mubr.f32.gmra.mrb[0].mxu0 %v4031
    %v4197 = vpop.f32.mrb[0].mxu0
    %v4198 = vadd.f32 0.0, %v4197
    %v4199 = vpop.f32.mrb[0].mxu0
    %4200 = vmatprep.mubr.f32.mxu0 %v4036
    %4201 = vmatmul.mubr.f32.gmra.mrb[0].mxu0 %v4035
    %v4202 = vpop.f32.mrb[0].mxu0
    %v4203 = vadd.f32 0.0, %v4202
    %v4204 = vpop.f32.mrb[0].mxu0
    %4205 = vmatprep.mubr.f32.mxu0 %v4040
    %4206 = vmatmul.mubr.f32.gmra.mrb[0].mxu0 %v4039
    %v4207 = vpop.f32.mrb[0].mxu0
    %v4208 = vadd.f32 0.0, %v4207
    %v4209 = vpop.f32.mrb[0].mxu0
    %4210 = vmatprep.mubr.f32.mxu0 %v4044
    %4211 = vmatmul.mubr.f32.gmra.mrb[0].mxu0 %v4043
    %v4212 = vpop.f32.mrb[0].mxu0
    %v4213 = vadd.f32 0.0, %v4212
    %v4214 = vpop.f32.mrb[0].mxu0
    %4215 = vdwg.mxu0
    %4216 = vmatprep.subr.mxu0 0.0
    %4217 = vmatpush1.msra.mxu0 %v4079
    %4218 = vmatprep.subr.mxu0 0.0
    %4219 = vmatpush1.msra.mxu0 %v4080
    %4220 = vmatprep.subr.mxu0 0.0
    %4221 = vmatpush1.msra.mxu0 %v4081
    %4222 = vmatprep.subr.mxu0 0.0
    %4223 = vmatpush1.msra.mxu0 %v4082
    %4224 = vmatprep.subr.mxu0 0.0
    %4225 = vmatpush1.msra.mxu0 %v4083
    %4226 = vmatprep.subr.mxu0 0.0
    %4227 = vmatpush1.msra.mxu0 %v4084
    %4228 = vmatprep.subr.mxu0 0.0
    %4229 = vmatpush1.msra.mxu0 %v4085
    %4230 = vmatprep.subr.mxu0 0.0
    %4231 = vmatpush1.msra.mxu0 %v4086
    %4232 = vmatprep.subr.mxu0 0.0
    %4233 = vmatpush1.msra.mxu0 %v4087
    %4234 = vmatprep.subr.mxu0 0.0
    %4235 = vmatpush1.msra.mxu0 %v4088
    %4236 = vmatprep.subr.mxu0 0.0
    %4237 = vmatpush1.msra.mxu0 %v4089
    %4238 = vmatprep.subr.mxu0 0.0
    %4239 = vmatpush1.msra.mxu0 %v4090
    %4240 = vmatprep.subr.mxu0 0.0
    %4241 = vmatpush1.msra.mxu0 %v4091
    %4242 = vmatprep.subr.mxu0 0.0
    %4243 = vmatpush1.msra.mxu0 %v4092
    %4244 = vmatprep.subr.mxu0 0.0
    %4245 = vmatpush1.msra.mxu0 %v4093
    %4246 = vmatprep.subr.mxu0 0.0
    %4247 = vmatpush1.msra.mxu0 %v4094
    %4248 = vmatprep.subr.mxu0 0.0
    %4249 = vmatpush1.msra.mxu0 %v4095
    %4250 = vmatprep.subr.mxu0 0.0
    %4251 = vmatpush1.msra.mxu0 %v4096
    %4252 = vmatprep.subr.mxu0 0.0
    %4253 = vmatpush1.msra.mxu0 %v4097
    %4254 = vmatprep.subr.mxu0 0.0
    %4255 = vmatpush1.msra.mxu0 %v4098
    %4256 = vmatprep.subr.mxu0 0.0
    %4257 = vmatpush1.msra.mxu0 %v4099
    %4258 = vmatprep.subr.mxu0 0.0
    %4259 = vmatpush1.msra.mxu0 %v4100
    %4260 = vmatprep.subr.mxu0 0.0
    %4261 = vmatpush1.msra.mxu0 %v4101
    %4262 = vmatprep.subr.mxu0 0.0
    %4263 = vmatpush1.msra.mxu0 %v4102
    %4264 = vmatprep.subr.mxu0 0.0
    %4265 = vmatpush1.msra.mxu0 %v4103
    %4266 = vmatprep.subr.mxu0 0.0
    %4267 = vmatpush1.msra.mxu0 %v4104
    %4268 = vmatprep.subr.mxu0 0.0
    %4269 = vmatpush1.msra.mxu0 %v4105
    %4270 = vmatprep.subr.mxu0 0.0
    %4271 = vmatpush1.msra.mxu0 %v4106
    %4272 = vmatprep.subr.mxu0 0.0
    %4273 = vmatpush1.msra.mxu0 %v4107
    %4274 = vmatprep.subr.mxu0 0.0
    %4275 = vmatpush1.msra.mxu0 %v4108
    %4276 = vmatprep.subr.mxu0 0.0
    %4277 = vmatpush1.msra.mxu0 %v4109
    %4278 = vmatprep.subr.mxu0 0.0
    %4279 = vmatpush1.msra.mxu0 %v4110
    %4280 = vmatprep.mubr.f32.mxu0 %v4018
    %4281 = vmatmul.mubr.f32.gmra.mrb[0].mxu0 %v4017
    %v4282 = vpop.f32.mrb[0].mxu0
    %v4283 = vadd.f32 %v4178, %v4282
    %v4284 = vpop.f32.mrb[0].mxu0
    %4285 = vmatprep.mubr.f32.mxu0 %v4022
    %4286 = vmatmul.mubr.f32.gmra.mrb[0].mxu0 %v4021
    %v4287 = vpop.f32.mrb[0].mxu0
    %v4288 = vadd.f32 %v4183, %v4287
    %v4289 = vpop.f32.mrb[0].mxu0
    %4290 = vmatprep.mubr.f32.mxu0 %v4026
    %4291 = vmatmul.mubr.f32.gmra.mrb[0].mxu0 %v4025
    %v4292 = vpop.f32.mrb[0].mxu0
    %v4293 = vadd.f32 %v4188, %v4292
    %v4294 = vpop.f32.mrb[0].mxu0
    %4295 = vmatprep.mubr.f32.mxu0 %v4030
    %4296 = vmatmul.mubr.f32.gmra.mrb[0].mxu0 %v4029
    %v4297 = vpop.f32.mrb[0].mxu0
    %v4298 = vadd.f32 %v4193, %v4297
    %v4299 = vpop.f32.mrb[0].mxu0
    %4300 = vmatprep.mubr.f32.mxu0 %v4034
    %4301 = vmatmul.mubr.f32.gmra.mrb[0].mxu0 %v4033
    %v4302 = vpop.f32.mrb[0].mxu0
    %v4303 = vadd.f32 %v4198, %v4302
    %v4304 = vpop.f32.mrb[0].mxu0
    %4305 = vmatprep.mubr.f32.mxu0 %v4038
    %4306 = vmatmul.mubr.f32.gmra.mrb[0].mxu0 %v4037
    %v4307 = vpop.f32.mrb[0].mxu0
    %v4308 = vadd.f32 %v4203, %v4307
    %v4309 = vpop.f32.mrb[0].mxu0
    %4310 = vmatprep.mubr.f32.mxu0 %v4042
    %4311 = vmatmul.mubr.f32.gmra.mrb[0].mxu0 %v4041
    %v4312 = vpop.f32.mrb[0].mxu0
    %v4313 = vadd.f32 %v4208, %v4312
    %v4314 = vpop.f32.mrb[0].mxu0
    %4315 = vmatprep.mubr.f32.mxu0 %v4046
    %4316 = vmatmul.mubr.f32.gmra.mrb[0].mxu0 %v4045
    %v4317 = vpop.f32.mrb[0].mxu0
    %v4318 = vadd.f32 %v4213, %v4317
    %v4319 = vpop.f32.mrb[0].mxu0
    %4320 = vdwg.mxu0
    %v4321 = vld [vmem:[#allocation11] sm:$0xff]
    %v4322 = vld [vmem:[#allocation11 + $0x8] sm:$0xff]
    %v4323 = vld [vmem:[#allocation11 + $0x10] sm:$0xff]
    %v4324 = vld [vmem:[#allocation11 + $0x18] sm:$0xff]
    %v4325 = vld [vmem:[#allocation11 + $0x20] sm:$0xff]
    %v4326 = vld [vmem:[#allocation11 + $0x28] sm:$0xff]
    %v4327 = vld [vmem:[#allocation11 + $0x30] sm:$0xff]
    %v4328 = vld [vmem:[#allocation11 + $0x38] sm:$0xff]
    %v4329 = vmul.f32 %v4283, %v4321
    %v4330 = vmul.f32 %v4288, %v4322
    %v4331 = vmul.f32 %v4293, %v4323
    %v4332 = vmul.f32 %v4298, %v4324
    %v4333 = vmul.f32 %v4303, %v4325
    %v4334 = vmul.f32 %v4308, %v4326
    %v4335 = vmul.f32 %v4313, %v4327
    %v4336 = vmul.f32 %v4318, %v4328
    %v4337 = vld [vmem:[#allocation13] sm:$0x3]
    %vm4338 = vcmask 523264
    %v4340 = vsel %vm4338, %v4337, 0
    %4342 = vmatprep.subr.mxu0 0.0
    %4343 = vmatpush1.msra.mxu0 %v4329
    %4344 = vmatprep.subr.mxu0 0.0
    %4345 = vmatpush1.msra.mxu0 %v4330
    %4346 = vmatprep.subr.mxu0 0.0
    %4347 = vmatpush1.msra.mxu0 %v4331
    %4348 = vmatprep.subr.mxu0 0.0
    %4349 = vmatpush1.msra.mxu0 %v4332
    %4350 = vmatprep.subr.mxu0 0.0
    %4351 = vmatpush1.msra.mxu0 %v4333
    %4352 = vmatprep.subr.mxu0 0.0
    %4353 = vmatpush1.msra.mxu0 %v4334
    %4354 = vmatprep.subr.mxu0 0.0
    %4355 = vmatpush1.msra.mxu0 %v4335
    %4356 = vmatprep.subr.mxu0 0.0
    %4357 = vmatpush1.msra.mxu0 %v4336
    %4358 = vmatprep.subr.mxu0 0.0
    %4359 = vmatpush1.msra.mxu0 0.0
    %4360 = vmatprep.subr.mxu0 0.0
    %4361 = vmatpush1.msra.mxu0 0.0
    %4362 = vmatprep.subr.mxu0 0.0
    %4363 = vmatpush1.msra.mxu0 0.0
    %4364 = vmatprep.subr.mxu0 0.0
    %4365 = vmatpush1.msra.mxu0 0.0
    %4366 = vmatprep.subr.mxu0 0.0
    %4367 = vmatpush1.msra.mxu0 0.0
    %4368 = vmatprep.subr.mxu0 0.0
    %4369 = vmatpush1.msra.mxu0 0.0
    %4370 = vmatprep.subr.mxu0 0.0
    %4371 = vmatpush1.msra.mxu0 0.0
    %4372 = vmatprep.subr.mxu0 0.0
    %4373 = vmatpush1.msra.mxu0 0.0
    %4374 = vmatprep.subr.mxu0 0.0
    %4375 = vmatpush1.msra.mxu0 0.0
    %4376 = vmatprep.subr.mxu0 0.0
    %4377 = vmatpush1.msra.mxu0 0.0
    %4378 = vmatprep.subr.mxu0 0.0
    %4379 = vmatpush1.msra.mxu0 0.0
    %4380 = vmatprep.subr.mxu0 0.0
    %4381 = vmatpush1.msra.mxu0 0.0
    %4382 = vmatprep.subr.mxu0 0.0
    %4383 = vmatpush1.msra.mxu0 0.0
    %4384 = vmatprep.subr.mxu0 0.0
    %4385 = vmatpush1.msra.mxu0 0.0
    %4386 = vmatprep.subr.mxu0 0.0
    %4387 = vmatpush1.msra.mxu0 0.0
    %4388 = vmatprep.subr.mxu0 0.0
    %4389 = vmatpush1.msra.mxu0 0.0
    %4390 = vmatprep.subr.mxu0 0.0
    %4391 = vmatpush1.msra.mxu0 0.0
    %4392 = vmatprep.subr.mxu0 0.0
    %4393 = vmatpush1.msra.mxu0 0.0
    %4394 = vmatprep.subr.mxu0 0.0
    %4395 = vmatpush1.msra.mxu0 0.0
    %4396 = vmatprep.subr.mxu0 0.0
    %4397 = vmatpush1.msra.mxu0 0.0
    %4398 = vmatprep.subr.mxu0 0.0
    %4399 = vmatpush1.msra.mxu0 0.0
    %4400 = vmatprep.subr.mxu0 0.0
    %4401 = vmatpush1.msra.mxu0 0.0
    %4402 = vmatprep.subr.mxu0 0.0
    %4403 = vmatpush1.msra.mxu0 0.0
    %4404 = vmatprep.subr.mxu0 0.0
    %4405 = vmatpush1.msra.mxu0 0.0
    %4406 = vmatprep.mubr.f32.mxu0 0.0
    %4407 = vmatmul.mubr.f32.gmra.mrb[0].mxu0 %v4340
    %v4408 = vpop.f32.mrb[0].mxu0
    %v4409 = vadd.f32 0.0, %v4408
    %v4410 = vpop.f32.mrb[0].mxu0
    %4411 = vdwg.mxu0
    %v4412 = vld [vmem:[%s9] sm:$0xff]
    %v4413 = vld [vmem:[%s9 + $0x8] sm:$0xff]
    %v4414 = vld [vmem:[%s9 + $0x10] sm:$0xff]
    %v4415 = vld [vmem:[%s9 + $0x18] sm:$0xff]
    %v4416 = vld [vmem:[%s9 + $0x20] sm:$0xff]
    %v4417 = vld [vmem:[%s9 + $0x28] sm:$0xff]
    %v4418 = vld [vmem:[%s9 + $0x30] sm:$0xff]
    %v4419 = vld [vmem:[%s9 + $0x38] sm:$0xff]
    %v4420 = vld [vmem:[%s9 + $0x40] sm:$0xff]
    %v4421 = vld [vmem:[%s9 + $0x48] sm:$0xff]
    %v4422 = vld [vmem:[%s9 + $0x50] sm:$0xff]
    %v4423 = vld [vmem:[%s9 + $0x58] sm:$0xff]
    %v4424 = vld [vmem:[%s9 + $0x60] sm:$0xff]
    %v4425 = vld [vmem:[%s9 + $0x68] sm:$0xff]
    %v4426 = vld [vmem:[%s9 + $0x70] sm:$0xff]
    %v4427 = vld [vmem:[%s9 + $0x78] sm:$0xff]
    %v4428 = vld [vmem:[#allocation14] sm:$0x1]
    %v4430 = vlaneseq
    %v4431 = vshrl.u32 %v4430, 7
    %v4432 = vsub.s32 0, %v4431
    %v4433 = vrot.slane %v4428, %v4432
    %4435 = vmatprep.subr.mxu0 0.0
    %4436 = vmatpush1.msra.mxu0 %v4412
    %4437 = vmatprep.subr.mxu0 0.0
    %4438 = vmatpush1.msra.mxu0 %v4413
    %4439 = vmatprep.subr.mxu0 0.0
    %4440 = vmatpush1.msra.mxu0 %v4414
    %4441 = vmatprep.subr.mxu0 0.0
    %4442 = vmatpush1.msra.mxu0 %v4415
    %4443 = vmatprep.subr.mxu0 0.0
    %4444 = vmatpush1.msra.mxu0 %v4416
    %4445 = vmatprep.subr.mxu0 0.0
    %4446 = vmatpush1.msra.mxu0 %v4417
    %4447 = vmatprep.subr.mxu0 0.0
    %4448 = vmatpush1.msra.mxu0 %v4418
    %4449 = vmatprep.subr.mxu0 0.0
    %4450 = vmatpush1.msra.mxu0 %v4419
    %4451 = vmatprep.subr.mxu0 0.0
    %4452 = vmatpush1.msra.mxu0 %v4420
    %4453 = vmatprep.subr.mxu0 0.0
    %4454 = vmatpush1.msra.mxu0 %v4421
    %4455 = vmatprep.subr.mxu0 0.0
    %4456 = vmatpush1.msra.mxu0 %v4422
    %4457 = vmatprep.subr.mxu0 0.0
    %4458 = vmatpush1.msra.mxu0 %v4423
    %4459 = vmatprep.subr.mxu0 0.0
    %4460 = vmatpush1.msra.mxu0 %v4424
    %4461 = vmatprep.subr.mxu0 0.0
    %4462 = vmatpush1.msra.mxu0 %v4425
    %4463 = vmatprep.subr.mxu0 0.0
    %4464 = vmatpush1.msra.mxu0 %v4426
    %4465 = vmatprep.subr.mxu0 0.0
    %4466 = vmatpush1.msra.mxu0 %v4427
    %4467 = vmatprep.subr.mxu0 0.0
    %4468 = vmatpush1.msra.mxu0 0.0
    %4469 = vmatprep.subr.mxu0 0.0
    %4470 = vmatpush1.msra.mxu0 0.0
    %4471 = vmatprep.subr.mxu0 0.0
    %4472 = vmatpush1.msra.mxu0 0.0
    %4473 = vmatprep.subr.mxu0 0.0
    %4474 = vmatpush1.msra.mxu0 0.0
    %4475 = vmatprep.subr.mxu0 0.0
    %4476 = vmatpush1.msra.mxu0 0.0
    %4477 = vmatprep.subr.mxu0 0.0
    %4478 = vmatpush1.msra.mxu0 0.0
    %4479 = vmatprep.subr.mxu0 0.0
    %4480 = vmatpush1.msra.mxu0 0.0
    %4481 = vmatprep.subr.mxu0 0.0
    %4482 = vmatpush1.msra.mxu0 0.0
    %4483 = vmatprep.subr.mxu0 0.0
    %4484 = vmatpush1.msra.mxu0 0.0
    %4485 = vmatprep.subr.mxu0 0.0
    %4486 = vmatpush1.msra.mxu0 0.0
    %4487 = vmatprep.subr.mxu0 0.0
    %4488 = vmatpush1.msra.mxu0 0.0
    %4489 = vmatprep.subr.mxu0 0.0
    %4490 = vmatpush1.msra.mxu0 0.0
    %4491 = vmatprep.subr.mxu0 0.0
    %4492 = vmatpush1.msra.mxu0 0.0
    %4493 = vmatprep.subr.mxu0 0.0
    %4494 = vmatpush1.msra.mxu0 0.0
    %4495 = vmatprep.subr.mxu0 0.0
    %4496 = vmatpush1.msra.mxu0 0.0
    %4497 = vmatprep.subr.mxu0 0.0
    %4498 = vmatpush1.msra.mxu0 0.0
    %4499 = vmatprep.mubr.f32.mxu0 0.0
    %4500 = vmatmul.mubr.f32.gmra.mrb[0].mxu0 %v4409
    %v4501 = vpop.f32.mrb[0].mxu0
    %v4502 = vadd.f32 %v4433, %v4501
    %v4503 = vpop.f32.mrb[0].mxu0
    %4504 = vdwg.mxu0
    %vm4505 = vcmask 25600
    %4506 = vst.msk [vmem:[#allocation16] sm:$0x3] %vm4505, %v4502
    // Predicated region
    $region78: #{tpu_custom_call.1} parent=1 // pred_check
      _
    $region79: #{tpu_custom_call.1} parent=1 // pred_check_branch
      %4508 = sbr.rel (0) target = $region81
    $region80: #{tpu_custom_call.1} parent=1 // pred_region
      %s4510 = ssub.s32 32, 32
      %4511 = vsyncadd [#allocation4], %s4510
      %s4513 = sshll.u32 [#allocation16], 4
      %s4514 = int_to_ptr.vmem [resolvable:$true] %s4513
      %4516 = dma.vmem_to_hbm [thread:$0]  %s4514, 32, %s11, [#allocation4]
    $region81: #{tpu_custom_call.1} parent=1 // pred_fallthru
      _
    // Predicated region
    $region82: #{tpu_custom_call.1} parent=1 // pred_check
      _
    $region83: #{tpu_custom_call.1} parent=1 // pred_check_branch
      %4518 = sbr.rel (0) target = $region85
    $region84: #{tpu_custom_call.1} parent=1 // pred_region
      %4519 = dma.done [#allocation4], 32
    $region85: #{tpu_custom_call.1} parent=1 // pred_fallthru
      _
    %4520 = vsyncpa [#allocation3], 1
    %4521 = vsyncpa [#allocation6], 1
    %4522 = vsyncpa [#allocation9], 1
    %4523 = vsyncpa [#allocation12], 1
    %4524 = vsyncpa [#allocation15], 1
    %4525 = vsyncpa [#allocation4], 1

</llo_original>
